<compile_context>
chip_gen: v5e
topology: v5e:2x2
jax: 0.10.0
libtpu: 0.0.40
codegen_flags: <defaults>
</compile_context>

<pallas_src>
import jax
import jax.numpy as jnp
from jax import lax
from jax.experimental import pallas as pl
from jax.experimental.pallas import tpu as pltpu


# --------------------------- Fused Pallas kernel ----------------------------


def _disc_fused_kernel(p1_ref, mask_ref, w1_ref, b1_ref, w2_ref, b2_ref,
                       wfc_ref, bfc_ref, out_ref):
    """One batch element per grid step.

    p1_ref  : (1, 1024, 48) conv1 patches duplicated in conv2-patch order
              (row = t*64 + m ; t = conv2 tap ki*4+kj, m = oh*8+ow)
    mask_ref: (1024, 1)   1.0 where the row is inside conv2's input, 0.0 in
              the zero-padding halo
    w1_ref  : (48, 128)   conv1 weight, Cout zero-padded 64->128
    b1_ref  : (1, 128)
    w2_ref  : (16, 128, 128) conv2 weight per tap, Cin zero-padded 64->128
    b2_ref  : (1, 128)
    wfc_ref : (64, 128)   fc weight, permuted so it consumes y2[m, c] directly
    bfc_ref : (1, 1)
    out_ref : (1, 1, 128) sigmoid(logit) broadcast over lanes (lane-dense)
    """
    # conv1 for all 16 taps x 64 conv2-output positions: one big MXU matmul.
    h = jnp.dot(p1_ref[0], w1_ref[...],
                preferred_element_type=jnp.float32)            # (1024, 128)
    h = h + b1_ref[...]
    h = jnp.where(h > 0, h, 0.2 * h)                           # LeakyReLU(0.2)
    h = h * mask_ref[...]                                      # conv2 halo -> 0

    # conv2: accumulate 16 tap matmuls over static 64-row slabs of h.
    acc = jnp.zeros((64, 128), jnp.float32)
    for t in range(16):                                        # fully unrolled
        acc = acc + jnp.dot(h[t * 64:(t + 1) * 64, :], w2_ref[t],
                            preferred_element_type=jnp.float32)

    y2 = acc + b2_ref[...]
    y2 = jnp.where(y2 > 0, y2, 0.2 * y2)                       # (64, 128)

    # fc as VPU multiply + full reduction (NCHW flatten baked into wfc).
    logit = jnp.sum(y2 * wfc_ref[...], keepdims=True) + bfc_ref[...]   # (1, 1)
    sig = 0.5 * (jnp.tanh(0.5 * logit) + 1.0)                  # stable sigmoid
    out_ref[...] = jnp.broadcast_to(sig, (1, 1, 128))


# ------------------------------- Host glue ----------------------------------


def discriminator_forward(x_nchw, params):
    w1, b1, w2, b2, wfc, bfc = params
    B, C, H, W = x_nchw.shape
    assert (C, H, W) == (3, 32, 32), (C, H, W)

    # ---- weight layout prep (pure layout plumbing, done once per call) ----
    # conv1: (Cout,Cin,kh,kw) -> (kh,kw,Cin,Cout) -> (48, 64) -> pad Cout to 128
    w1m = jnp.transpose(w1, (2, 3, 1, 0)).reshape(4 * 4 * 3, 64)
    w1m = jnp.pad(w1m, ((0, 0), (0, 64)))                              # (48, 128)
    b1m = jnp.pad(b1, (0, 64)).reshape(1, 128)
    # conv2: (Cout,Cin,kh,kw) -> (kh,kw,Cin,Cout) -> (16, 64, 128) -> pad Cin
    w2blk = jnp.transpose(w2, (2, 3, 1, 0)).reshape(16, 64, 128)
    w2blk = jnp.pad(w2blk, ((0, 0), (0, 64), (0, 0)))                  # (16,128,128)
    b2m = b2.reshape(1, 128)
    # fc: torch flatten index j = c*64 + m  (m = oh*8 + ow)
    #     -> wfc_mat[m, c] = wfc[0, c*64 + m]   (NCHW flatten folded into weight)
    wfc_mat = wfc.reshape(128, 64).T                                    # (64, 128)
    bfc_m = bfc.reshape(1, 1)

    # ---- conv1 im2col, replicated into conv2-patch ("tap") order ----
    x = jnp.transpose(x_nchw, (0, 2, 3, 1))                             # NHWC
    xp = jnp.pad(x, ((0, 0), (1, 1), (1, 1), (0, 0)))                   # (B,34,34,3)
    cols = [xp[:, ki:ki + 32:2, kj:kj + 32:2, :]
            for ki in range(4) for kj in range(4)]
    p1 = jnp.concatenate(cols, axis=-1).reshape(B, 256, 48)             # (B,256,48)

    t = jnp.arange(16)
    m = jnp.arange(64)
    ki_v = (t // 4)[:, None]
    kj_v = (t % 4)[:, None]
    oh_v = (m // 8)[None, :]
    ow_v = (m % 8)[None, :]
    h1 = 2 * oh_v + ki_v - 1
    w1i = 2 * ow_v + kj_v - 1
    valid = (h1 >= 0) & (h1 < 16) & (w1i >= 0) & (w1i < 16)             # (16, 64)
    dup_idx = jnp.where(valid, h1 * 16 + w1i, 0).reshape(16 * 64)
    p1dup = jnp.take(p1, dup_idx, axis=1)                               # (B,1024,48)
    halo_mask = valid.astype(jnp.float32).reshape(1024, 1)              # (1024, 1)

    # ---- single fused pallas_call over the batch ----
    out3 = pl.pallas_call(
        _disc_fused_kernel,
        out_shape=jax.ShapeDtypeStruct((B, 1, 128), jnp.float32),
        grid_spec=pltpu.PrefetchScalarGridSpec(
            num_scalar_prefetch=0,
            grid=(B,),
            in_specs=[
                pl.BlockSpec((1, 1024, 48), lambda b: (b, 0, 0)),
                pl.BlockSpec((1024, 1), lambda b: (0, 0)),
                pl.BlockSpec((48, 128), lambda b: (0, 0)),
                pl.BlockSpec((1, 128), lambda b: (0, 0)),
                pl.BlockSpec((16, 128, 128), lambda b: (0, 0, 0)),
                pl.BlockSpec((1, 128), lambda b: (0, 0)),
                pl.BlockSpec((64, 128), lambda b: (0, 0)),
                pl.BlockSpec((1, 1), lambda b: (0, 0)),
            ],
            out_specs=pl.BlockSpec((1, 1, 128), lambda b: (b, 0, 0)),
        ),
        compiler_params=pltpu.CompilerParams(
            dimension_semantics=("parallel",),
            vmem_limit_bytes=32 * 1024 * 1024,
        ),
    )(p1dup, halo_mask, w1m, b1m, w2blk, b2m, wfc_mat, bfc_m)

    return out3[:, 0, :1]                                               # (B, 1)


# ---------------------------- Pure-JAX reference ----------------------------


def reference_forward(x_nchw, params):
    w1, b1, w2, b2, wfc, bfc = params

    def conv(x, w, b):
        y = lax.conv_general_dilated(
            x, w, window_strides=(2, 2), padding=[(1, 1), (1, 1)],
            dimension_numbers=("NCHW", "OIHW", "NCHW"),
        )
        return y + b.reshape(1, -1, 1, 1)

    lrelu = lambda v: jnp.where(v > 0, v, 0.2 * v)
    h = lrelu(conv(x_nchw, w1, b1))
    h = lrelu(conv(h, w2, b2))
    h = h.reshape(h.shape[0], -1)
    return 1.0 / (1.0 + jnp.exp(-(h @ wfc.T + bfc)))


# --------------------------------- Main --------------------------------------

if __name__ == "__main__":
    key = jax.random.PRNGKey(0)
    k_x, k1, k2, k3, k4, k5, k6 = jax.random.split(key, 7)

    B = 2
    x = jax.random.normal(k_x, (B, 3, 32, 32), dtype=jnp.float32)

    # Deterministic synthetic parameters (PyTorch layouts).
    w1 = jax.random.normal(k1, (64, 3, 4, 4), dtype=jnp.float32) * 0.05
    b1 = jax.random.normal(k2, (64,), dtype=jnp.float32) * 0.05
    w2 = jax.random.normal(k3, (128, 64, 4, 4), dtype=jnp.float32) * 0.05
    b2 = jax.random.normal(k4, (128,), dtype=jnp.float32) * 0.05
    wfc = jax.random.normal(k5, (1, 128 * 8 * 8), dtype=jnp.float32) * 0.01
    bfc = jax.random.normal(k6, (1,), dtype=jnp.float32) * 0.01

    params = (w1, b1, w2, b2, wfc, bfc)

    out = jax.block_until_ready(discriminator_forward(x, params))
    assert out.shape == (B, 1), out.shape

    ref = jax.block_until_ready(reference_forward(x, params))
    assert jnp.allclose(out, ref, atol=1e-4, rtol=1e-4), (out, ref)

    print("KERNEL_OK")
</pallas_src>

<mosaic_0001>
module attributes {stable_mosaic.version = 11 : i64} {
  func.func @_disc_fused_kernel(%arg0: i32, %arg1: memref<1x1024x48xf32, #tpu.memory_space<vmem>>, %arg2: memref<1024x1xf32, #tpu.memory_space<vmem>>, %arg3: memref<48x128xf32, #tpu.memory_space<vmem>>, %arg4: memref<1x128xf32, #tpu.memory_space<vmem>>, %arg5: memref<16x128x128xf32, #tpu.memory_space<vmem>>, %arg6: memref<1x128xf32, #tpu.memory_space<vmem>>, %arg7: memref<64x128xf32, #tpu.memory_space<vmem>>, %arg8: memref<1x1xf32, #tpu.memory_space<vmem>>, %arg9: memref<1x1x128xf32, #tpu.memory_space<vmem>>) attributes {dimension_semantics = [#tpu.dimension_semantics<parallel>], iteration_bounds = array<i64: 2>, scalar_prefetch = 0 : i64, scratch_operands = 0 : i64, tpu.core_type = #tpu.core_type<tc>, window_params = [{transform_indices = @transform_0, window_bounds = array<i64: 1, 1024, 48>}, {pipeline_mode = #tpu.pipeline_mode<synchronous>, transform_indices = @transform_1, window_bounds = array<i64: 1024, 1>}, {pipeline_mode = #tpu.pipeline_mode<synchronous>, transform_indices = @transform_2, window_bounds = array<i64: 48, 128>}, {pipeline_mode = #tpu.pipeline_mode<synchronous>, transform_indices = @transform_3, window_bounds = array<i64: 1, 128>}, {pipeline_mode = #tpu.pipeline_mode<synchronous>, transform_indices = @transform_4, window_bounds = array<i64: 16, 128, 128>}, {pipeline_mode = #tpu.pipeline_mode<synchronous>, transform_indices = @transform_5, window_bounds = array<i64: 1, 128>}, {pipeline_mode = #tpu.pipeline_mode<synchronous>, transform_indices = @transform_6, window_bounds = array<i64: 64, 128>}, {pipeline_mode = #tpu.pipeline_mode<synchronous>, transform_indices = @transform_7, window_bounds = array<i64: 1, 1>}, {transform_indices = @transform_8, window_bounds = array<i64: 1, 1, 128>}]} {
    %c0 = arith.constant 0 : index
    %c0_0 = arith.constant 0 : index
    %c0_1 = arith.constant 0 : index
    %0 = vector.load %arg1[%c0, %c0_0, %c0_1] : memref<1x1024x48xf32, #tpu.memory_space<vmem>>, vector<1x1024x48xf32>
    %1 = vector.shape_cast %0 : vector<1x1024x48xf32> to vector<1024x48xf32>
    %c0_2 = arith.constant 0 : index
    %c0_3 = arith.constant 0 : index
    %2 = vector.load %arg3[%c0_2, %c0_3] : memref<48x128xf32, #tpu.memory_space<vmem>>, vector<48x128xf32>
    %cst = arith.constant dense<0.000000e+00> : vector<1024x128xf32>
    %3 = tpu.matmul %1, %2, %cst {dimension_numbers = #tpu.dot_dimension_numbers<[1], [0], [0], [1], [0, 0, 1, 1], [], []>} : vector<1024x48xf32>, vector<48x128xf32>, vector<1024x128xf32> -> vector<1024x128xf32>
    %c0_4 = arith.constant 0 : index
    %c0_5 = arith.constant 0 : index
    %4 = vector.load %arg4[%c0_4, %c0_5] : memref<1x128xf32, #tpu.memory_space<vmem>>, vector<1x128xf32>
    %5 = vector.broadcast %4 : vector<1x128xf32> to vector<1024x128xf32>
    %6 = arith.addf %3, %5 : vector<1024x128xf32>
    %cst_6 = arith.constant 0.000000e+00 : f32
    %7 = vector.broadcast %cst_6 : f32 to vector<1024x128xf32>
    %8 = arith.cmpf ogt, %6, %7 : vector<1024x128xf32>
    %cst_7 = arith.constant 2.000000e-01 : f32
    %9 = vector.broadcast %cst_7 : f32 to vector<1024x128xf32>
    %10 = arith.mulf %9, %6 : vector<1024x128xf32>
    %11 = arith.select %8, %6, %10 : vector<1024x128xi1>, vector<1024x128xf32>
    %c0_8 = arith.constant 0 : index
    %c0_9 = arith.constant 0 : index
    %12 = vector.load %arg2[%c0_8, %c0_9] : memref<1024x1xf32, #tpu.memory_space<vmem>>, vector<1024x1xf32>
    %13 = vector.broadcast %12 : vector<1024x1xf32> to vector<1024x128xf32>
    %14 = arith.mulf %11, %13 : vector<1024x128xf32>
    %cst_10 = arith.constant 0.000000e+00 : f32
    %15 = vector.broadcast %cst_10 : f32 to vector<64x128xf32>
    %16 = vector.extract_strided_slice %14 {offsets = [0, 0], sizes = [64, 128], strides = [1, 1]} : vector<1024x128xf32> to vector<64x128xf32>
    %c0_11 = arith.constant 0 : index
    %c0_12 = arith.constant 0 : index
    %c0_13 = arith.constant 0 : index
    %17 = vector.load %arg5[%c0_11, %c0_12, %c0_13] : memref<16x128x128xf32, #tpu.memory_space<vmem>>, vector<1x128x128xf32>
    %18 = vector.shape_cast %17 : vector<1x128x128xf32> to vector<128x128xf32>
    %cst_14 = arith.constant dense<0.000000e+00> : vector<64x128xf32>
    %19 = tpu.matmul %16, %18, %cst_14 {dimension_numbers = #tpu.dot_dimension_numbers<[1], [0], [0], [1], [0, 0, 1, 1], [], []>} : vector<64x128xf32>, vector<128x128xf32>, vector<64x128xf32> -> vector<64x128xf32>
    %20 = arith.addf %15, %19 : vector<64x128xf32>
    %21 = vector.extract_strided_slice %14 {offsets = [64, 0], sizes = [64, 128], strides = [1, 1]} : vector<1024x128xf32> to vector<64x128xf32>
    %c1 = arith.constant 1 : index
    %c0_15 = arith.constant 0 : index
    %c0_16 = arith.constant 0 : index
    %22 = vector.load %arg5[%c1, %c0_15, %c0_16] : memref<16x128x128xf32, #tpu.memory_space<vmem>>, vector<1x128x128xf32>
    %23 = vector.shape_cast %22 : vector<1x128x128xf32> to vector<128x128xf32>
    %cst_17 = arith.constant dense<0.000000e+00> : vector<64x128xf32>
    %24 = tpu.matmul %21, %23, %cst_17 {dimension_numbers = #tpu.dot_dimension_numbers<[1], [0], [0], [1], [0, 0, 1, 1], [], []>} : vector<64x128xf32>, vector<128x128xf32>, vector<64x128xf32> -> vector<64x128xf32>
    %25 = arith.addf %20, %24 : vector<64x128xf32>
    %26 = vector.extract_strided_slice %14 {offsets = [128, 0], sizes = [64, 128], strides = [1, 1]} : vector<1024x128xf32> to vector<64x128xf32>
    %c2 = arith.constant 2 : index
    %c0_18 = arith.constant 0 : index
    %c0_19 = arith.constant 0 : index
    %27 = vector.load %arg5[%c2, %c0_18, %c0_19] : memref<16x128x128xf32, #tpu.memory_space<vmem>>, vector<1x128x128xf32>
    %28 = vector.shape_cast %27 : vector<1x128x128xf32> to vector<128x128xf32>
    %cst_20 = arith.constant dense<0.000000e+00> : vector<64x128xf32>
    %29 = tpu.matmul %26, %28, %cst_20 {dimension_numbers = #tpu.dot_dimension_numbers<[1], [0], [0], [1], [0, 0, 1, 1], [], []>} : vector<64x128xf32>, vector<128x128xf32>, vector<64x128xf32> -> vector<64x128xf32>
    %30 = arith.addf %25, %29 : vector<64x128xf32>
    %31 = vector.extract_strided_slice %14 {offsets = [192, 0], sizes = [64, 128], strides = [1, 1]} : vector<1024x128xf32> to vector<64x128xf32>
    %c3 = arith.constant 3 : index
    %c0_21 = arith.constant 0 : index
    %c0_22 = arith.constant 0 : index
    %32 = vector.load %arg5[%c3, %c0_21, %c0_22] : memref<16x128x128xf32, #tpu.memory_space<vmem>>, vector<1x128x128xf32>
    %33 = vector.shape_cast %32 : vector<1x128x128xf32> to vector<128x128xf32>
    %cst_23 = arith.constant dense<0.000000e+00> : vector<64x128xf32>
    %34 = tpu.matmul %31, %33, %cst_23 {dimension_numbers = #tpu.dot_dimension_numbers<[1], [0], [0], [1], [0, 0, 1, 1], [], []>} : vector<64x128xf32>, vector<128x128xf32>, vector<64x128xf32> -> vector<64x128xf32>
    %35 = arith.addf %30, %34 : vector<64x128xf32>
    %36 = vector.extract_strided_slice %14 {offsets = [256, 0], sizes = [64, 128], strides = [1, 1]} : vector<1024x128xf32> to vector<64x128xf32>
    %c4 = arith.constant 4 : index
    %c0_24 = arith.constant 0 : index
    %c0_25 = arith.constant 0 : index
    %37 = vector.load %arg5[%c4, %c0_24, %c0_25] : memref<16x128x128xf32, #tpu.memory_space<vmem>>, vector<1x128x128xf32>
    %38 = vector.shape_cast %37 : vector<1x128x128xf32> to vector<128x128xf32>
    %cst_26 = arith.constant dense<0.000000e+00> : vector<64x128xf32>
    %39 = tpu.matmul %36, %38, %cst_26 {dimension_numbers = #tpu.dot_dimension_numbers<[1], [0], [0], [1], [0, 0, 1, 1], [], []>} : vector<64x128xf32>, vector<128x128xf32>, vector<64x128xf32> -> vector<64x128xf32>
    %40 = arith.addf %35, %39 : vector<64x128xf32>
    %41 = vector.extract_strided_slice %14 {offsets = [320, 0], sizes = [64, 128], strides = [1, 1]} : vector<1024x128xf32> to vector<64x128xf32>
    %c5 = arith.constant 5 : index
    %c0_27 = arith.constant 0 : index
    %c0_28 = arith.constant 0 : index
    %42 = vector.load %arg5[%c5, %c0_27, %c0_28] : memref<16x128x128xf32, #tpu.memory_space<vmem>>, vector<1x128x128xf32>
    %43 = vector.shape_cast %42 : vector<1x128x128xf32> to vector<128x128xf32>
    %cst_29 = arith.constant dense<0.000000e+00> : vector<64x128xf32>
    %44 = tpu.matmul %41, %43, %cst_29 {dimension_numbers = #tpu.dot_dimension_numbers<[1], [0], [0], [1], [0, 0, 1, 1], [], []>} : vector<64x128xf32>, vector<128x128xf32>, vector<64x128xf32> -> vector<64x128xf32>
    %45 = arith.addf %40, %44 : vector<64x128xf32>
    %46 = vector.extract_strided_slice %14 {offsets = [384, 0], sizes = [64, 128], strides = [1, 1]} : vector<1024x128xf32> to vector<64x128xf32>
    %c6 = arith.constant 6 : index
    %c0_30 = arith.constant 0 : index
    %c0_31 = arith.constant 0 : index
    %47 = vector.load %arg5[%c6, %c0_30, %c0_31] : memref<16x128x128xf32, #tpu.memory_space<vmem>>, vector<1x128x128xf32>
    %48 = vector.shape_cast %47 : vector<1x128x128xf32> to vector<128x128xf32>
    %cst_32 = arith.constant dense<0.000000e+00> : vector<64x128xf32>
    %49 = tpu.matmul %46, %48, %cst_32 {dimension_numbers = #tpu.dot_dimension_numbers<[1], [0], [0], [1], [0, 0, 1, 1], [], []>} : vector<64x128xf32>, vector<128x128xf32>, vector<64x128xf32> -> vector<64x128xf32>
    %50 = arith.addf %45, %49 : vector<64x128xf32>
    %51 = vector.extract_strided_slice %14 {offsets = [448, 0], sizes = [64, 128], strides = [1, 1]} : vector<1024x128xf32> to vector<64x128xf32>
    %c7 = arith.constant 7 : index
    %c0_33 = arith.constant 0 : index
    %c0_34 = arith.constant 0 : index
    %52 = vector.load %arg5[%c7, %c0_33, %c0_34] : memref<16x128x128xf32, #tpu.memory_space<vmem>>, vector<1x128x128xf32>
    %53 = vector.shape_cast %52 : vector<1x128x128xf32> to vector<128x128xf32>
    %cst_35 = arith.constant dense<0.000000e+00> : vector<64x128xf32>
    %54 = tpu.matmul %51, %53, %cst_35 {dimension_numbers = #tpu.dot_dimension_numbers<[1], [0], [0], [1], [0, 0, 1, 1], [], []>} : vector<64x128xf32>, vector<128x128xf32>, vector<64x128xf32> -> vector<64x128xf32>
    %55 = arith.addf %50, %54 : vector<64x128xf32>
    %56 = vector.extract_strided_slice %14 {offsets = [512, 0], sizes = [64, 128], strides = [1, 1]} : vector<1024x128xf32> to vector<64x128xf32>
    %c8 = arith.constant 8 : index
    %c0_36 = arith.constant 0 : index
    %c0_37 = arith.constant 0 : index
    %57 = vector.load %arg5[%c8, %c0_36, %c0_37] : memref<16x128x128xf32, #tpu.memory_space<vmem>>, vector<1x128x128xf32>
    %58 = vector.shape_cast %57 : vector<1x128x128xf32> to vector<128x128xf32>
    %cst_38 = arith.constant dense<0.000000e+00> : vector<64x128xf32>
    %59 = tpu.matmul %56, %58, %cst_38 {dimension_numbers = #tpu.dot_dimension_numbers<[1], [0], [0], [1], [0, 0, 1, 1], [], []>} : vector<64x128xf32>, vector<128x128xf32>, vector<64x128xf32> -> vector<64x128xf32>
    %60 = arith.addf %55, %59 : vector<64x128xf32>
    %61 = vector.extract_strided_slice %14 {offsets = [576, 0], sizes = [64, 128], strides = [1, 1]} : vector<1024x128xf32> to vector<64x128xf32>
    %c9 = arith.constant 9 : index
    %c0_39 = arith.constant 0 : index
    %c0_40 = arith.constant 0 : index
    %62 = vector.load %arg5[%c9, %c0_39, %c0_40] : memref<16x128x128xf32, #tpu.memory_space<vmem>>, vector<1x128x128xf32>
    %63 = vector.shape_cast %62 : vector<1x128x128xf32> to vector<128x128xf32>
    %cst_41 = arith.constant dense<0.000000e+00> : vector<64x128xf32>
    %64 = tpu.matmul %61, %63, %cst_41 {dimension_numbers = #tpu.dot_dimension_numbers<[1], [0], [0], [1], [0, 0, 1, 1], [], []>} : vector<64x128xf32>, vector<128x128xf32>, vector<64x128xf32> -> vector<64x128xf32>
    %65 = arith.addf %60, %64 : vector<64x128xf32>
    %66 = vector.extract_strided_slice %14 {offsets = [640, 0], sizes = [64, 128], strides = [1, 1]} : vector<1024x128xf32> to vector<64x128xf32>
    %c10 = arith.constant 10 : index
    %c0_42 = arith.constant 0 : index
    %c0_43 = arith.constant 0 : index
    %67 = vector.load %arg5[%c10, %c0_42, %c0_43] : memref<16x128x128xf32, #tpu.memory_space<vmem>>, vector<1x128x128xf32>
    %68 = vector.shape_cast %67 : vector<1x128x128xf32> to vector<128x128xf32>
    %cst_44 = arith.constant dense<0.000000e+00> : vector<64x128xf32>
    %69 = tpu.matmul %66, %68, %cst_44 {dimension_numbers = #tpu.dot_dimension_numbers<[1], [0], [0], [1], [0, 0, 1, 1], [], []>} : vector<64x128xf32>, vector<128x128xf32>, vector<64x128xf32> -> vector<64x128xf32>
    %70 = arith.addf %65, %69 : vector<64x128xf32>
    %71 = vector.extract_strided_slice %14 {offsets = [704, 0], sizes = [64, 128], strides = [1, 1]} : vector<1024x128xf32> to vector<64x128xf32>
    %c11 = arith.constant 11 : index
    %c0_45 = arith.constant 0 : index
    %c0_46 = arith.constant 0 : index
    %72 = vector.load %arg5[%c11, %c0_45, %c0_46] : memref<16x128x128xf32, #tpu.memory_space<vmem>>, vector<1x128x128xf32>
    %73 = vector.shape_cast %72 : vector<1x128x128xf32> to vector<128x128xf32>
    %cst_47 = arith.constant dense<0.000000e+00> : vector<64x128xf32>
    %74 = tpu.matmul %71, %73, %cst_47 {dimension_numbers = #tpu.dot_dimension_numbers<[1], [0], [0], [1], [0, 0, 1, 1], [], []>} : vector<64x128xf32>, vector<128x128xf32>, vector<64x128xf32> -> vector<64x128xf32>
    %75 = arith.addf %70, %74 : vector<64x128xf32>
    %76 = vector.extract_strided_slice %14 {offsets = [768, 0], sizes = [64, 128], strides = [1, 1]} : vector<1024x128xf32> to vector<64x128xf32>
    %c12 = arith.constant 12 : index
    %c0_48 = arith.constant 0 : index
    %c0_49 = arith.constant 0 : index
    %77 = vector.load %arg5[%c12, %c0_48, %c0_49] : memref<16x128x128xf32, #tpu.memory_space<vmem>>, vector<1x128x128xf32>
    %78 = vector.shape_cast %77 : vector<1x128x128xf32> to vector<128x128xf32>
    %cst_50 = arith.constant dense<0.000000e+00> : vector<64x128xf32>
    %79 = tpu.matmul %76, %78, %cst_50 {dimension_numbers = #tpu.dot_dimension_numbers<[1], [0], [0], [1], [0, 0, 1, 1], [], []>} : vector<64x128xf32>, vector<128x128xf32>, vector<64x128xf32> -> vector<64x128xf32>
    %80 = arith.addf %75, %79 : vector<64x128xf32>
    %81 = vector.extract_strided_slice %14 {offsets = [832, 0], sizes = [64, 128], strides = [1, 1]} : vector<1024x128xf32> to vector<64x128xf32>
    %c13 = arith.constant 13 : index
    %c0_51 = arith.constant 0 : index
    %c0_52 = arith.constant 0 : index
    %82 = vector.load %arg5[%c13, %c0_51, %c0_52] : memref<16x128x128xf32, #tpu.memory_space<vmem>>, vector<1x128x128xf32>
    %83 = vector.shape_cast %82 : vector<1x128x128xf32> to vector<128x128xf32>
    %cst_53 = arith.constant dense<0.000000e+00> : vector<64x128xf32>
    %84 = tpu.matmul %81, %83, %cst_53 {dimension_numbers = #tpu.dot_dimension_numbers<[1], [0], [0], [1], [0, 0, 1, 1], [], []>} : vector<64x128xf32>, vector<128x128xf32>, vector<64x128xf32> -> vector<64x128xf32>
    %85 = arith.addf %80, %84 : vector<64x128xf32>
    %86 = vector.extract_strided_slice %14 {offsets = [896, 0], sizes = [64, 128], strides = [1, 1]} : vector<1024x128xf32> to vector<64x128xf32>
    %c14 = arith.constant 14 : index
    %c0_54 = arith.constant 0 : index
    %c0_55 = arith.constant 0 : index
    %87 = vector.load %arg5[%c14, %c0_54, %c0_55] : memref<16x128x128xf32, #tpu.memory_space<vmem>>, vector<1x128x128xf32>
    %88 = vector.shape_cast %87 : vector<1x128x128xf32> to vector<128x128xf32>
    %cst_56 = arith.constant dense<0.000000e+00> : vector<64x128xf32>
    %89 = tpu.matmul %86, %88, %cst_56 {dimension_numbers = #tpu.dot_dimension_numbers<[1], [0], [0], [1], [0, 0, 1, 1], [], []>} : vector<64x128xf32>, vector<128x128xf32>, vector<64x128xf32> -> vector<64x128xf32>
    %90 = arith.addf %85, %89 : vector<64x128xf32>
    %91 = vector.extract_strided_slice %14 {offsets = [960, 0], sizes = [64, 128], strides = [1, 1]} : vector<1024x128xf32> to vector<64x128xf32>
    %c15 = arith.constant 15 : index
    %c0_57 = arith.constant 0 : index
    %c0_58 = arith.constant 0 : index
    %92 = vector.load %arg5[%c15, %c0_57, %c0_58] : memref<16x128x128xf32, #tpu.memory_space<vmem>>, vector<1x128x128xf32>
    %93 = vector.shape_cast %92 : vector<1x128x128xf32> to vector<128x128xf32>
    %cst_59 = arith.constant dense<0.000000e+00> : vector<64x128xf32>
    %94 = tpu.matmul %91, %93, %cst_59 {dimension_numbers = #tpu.dot_dimension_numbers<[1], [0], [0], [1], [0, 0, 1, 1], [], []>} : vector<64x128xf32>, vector<128x128xf32>, vector<64x128xf32> -> vector<64x128xf32>
    %95 = arith.addf %90, %94 : vector<64x128xf32>
    %c0_60 = arith.constant 0 : index
    %c0_61 = arith.constant 0 : index
    %96 = vector.load %arg6[%c0_60, %c0_61] : memref<1x128xf32, #tpu.memory_space<vmem>>, vector<1x128xf32>
    %97 = vector.broadcast %96 : vector<1x128xf32> to vector<64x128xf32>
    %98 = arith.addf %95, %97 : vector<64x128xf32>
    %cst_62 = arith.constant 0.000000e+00 : f32
    %99 = vector.broadcast %cst_62 : f32 to vector<64x128xf32>
    %100 = arith.cmpf ogt, %98, %99 : vector<64x128xf32>
    %cst_63 = arith.constant 2.000000e-01 : f32
    %101 = vector.broadcast %cst_63 : f32 to vector<64x128xf32>
    %102 = arith.mulf %101, %98 : vector<64x128xf32>
    %103 = arith.select %100, %98, %102 : vector<64x128xi1>, vector<64x128xf32>
    %c0_64 = arith.constant 0 : index
    %c0_65 = arith.constant 0 : index
    %104 = vector.load %arg7[%c0_64, %c0_65] : memref<64x128xf32, #tpu.memory_space<vmem>>, vector<64x128xf32>
    %105 = arith.mulf %103, %104 : vector<64x128xf32>
    %106 = vector.shape_cast %105 : vector<64x128xf32> to vector<1x64x128xf32>
    %cst_66 = arith.constant dense<0.000000e+00> : vector<1xf32>
    %107 = vector.multi_reduction <add>, %106, %cst_66 [1, 2] : vector<1x64x128xf32> to vector<1xf32>
    %108 = vector.shape_cast %107 : vector<1xf32> to vector<1x1x1xf32>
    %109 = vector.extract %108[0, 0, 0] : f32 from vector<1x1x1xf32>
    %110 = vector.broadcast %109 : f32 to vector<1x1xf32>
    %c0_67 = arith.constant 0 : index
    %c0_68 = arith.constant 0 : index
    %111 = vector.load %arg8[%c0_67, %c0_68] : memref<1x1xf32, #tpu.memory_space<vmem>>, vector<1x1xf32>
    %112 = arith.addf %110, %111 : vector<1x1xf32>
    %cst_69 = arith.constant 5.000000e-01 : f32
    %113 = vector.broadcast %cst_69 : f32 to vector<1x1xf32>
    %114 = arith.mulf %113, %112 : vector<1x1xf32>
    %115 = math.tanh %114 : vector<1x1xf32>
    %cst_70 = arith.constant 1.000000e+00 : f32
    %116 = vector.broadcast %cst_70 : f32 to vector<1x1xf32>
    %117 = arith.addf %115, %116 : vector<1x1xf32>
    %cst_71 = arith.constant 5.000000e-01 : f32
    %118 = vector.broadcast %cst_71 : f32 to vector<1x1xf32>
    %119 = arith.mulf %118, %117 : vector<1x1xf32>
    %120 = vector.shape_cast %119 : vector<1x1xf32> to vector<1x1x1xf32>
    %121 = vector.broadcast %120 : vector<1x1x1xf32> to vector<1x1x128xf32>
    %c0_72 = arith.constant 0 : index
    %c0_73 = arith.constant 0 : index
    %c0_74 = arith.constant 0 : index
    %122 = vector.load %arg9[%c0_72, %c0_73, %c0_74] : memref<1x1x128xf32, #tpu.memory_space<vmem>>, vector<1x1x128xf32>
    tpu.vector_store %arg9[%c0_72, %c0_73, %c0_74], %121 {strides = array<i32>} : memref<1x1x128xf32, #tpu.memory_space<vmem>>, vector<1x1x128xf32>,
    return
  }
  func.func @transform_0(%arg0: i32) -> (i32, i32, i32) {
    %c0_i32 = arith.constant 0 : i32
    %c0_i32_0 = arith.constant 0 : i32
    %c0_i32_1 = arith.constant 0 : i32
    return %arg0, %c0_i32, %c0_i32_0 : i32, i32, i32
  }
  func.func @transform_1(%arg0: i32) -> (i32, i32) {
    %c0_i32 = arith.constant 0 : i32
    %c0_i32_0 = arith.constant 0 : i32
    %c0_i32_1 = arith.constant 0 : i32
    return %c0_i32, %c0_i32_0 : i32, i32
  }
  func.func @transform_2(%arg0: i32) -> (i32, i32) {
    %c0_i32 = arith.constant 0 : i32
    %c0_i32_0 = arith.constant 0 : i32
    %c0_i32_1 = arith.constant 0 : i32
    return %c0_i32, %c0_i32_0 : i32, i32
  }
  func.func @transform_3(%arg0: i32) -> (i32, i32) {
    %c0_i32 = arith.constant 0 : i32
    %c0_i32_0 = arith.constant 0 : i32
    %c0_i32_1 = arith.constant 0 : i32
    return %c0_i32, %c0_i32_0 : i32, i32
  }
  func.func @transform_4(%arg0: i32) -> (i32, i32, i32) {
    %c0_i32 = arith.constant 0 : i32
    %c0_i32_0 = arith.constant 0 : i32
    %c0_i32_1 = arith.constant 0 : i32
    %c0_i32_2 = arith.constant 0 : i32
    return %c0_i32, %c0_i32_0, %c0_i32_1 : i32, i32, i32
  }
  func.func @transform_5(%arg0: i32) -> (i32, i32) {
    %c0_i32 = arith.constant 0 : i32
    %c0_i32_0 = arith.constant 0 : i32
    %c0_i32_1 = arith.constant 0 : i32
    return %c0_i32, %c0_i32_0 : i32, i32
  }
  func.func @transform_6(%arg0: i32) -> (i32, i32) {
    %c0_i32 = arith.constant 0 : i32
    %c0_i32_0 = arith.constant 0 : i32
    %c0_i32_1 = arith.constant 0 : i32
    return %c0_i32, %c0_i32_0 : i32, i32
  }
  func.func @transform_7(%arg0: i32) -> (i32, i32) {
    %c0_i32 = arith.constant 0 : i32
    %c0_i32_0 = arith.constant 0 : i32
    %c0_i32_1 = arith.constant 0 : i32
    return %c0_i32, %c0_i32_0 : i32, i32
  }
  func.func @transform_8(%arg0: i32) -> (i32, i32, i32) {
    %c0_i32 = arith.constant 0 : i32
    %c0_i32_0 = arith.constant 0 : i32
    %c0_i32_1 = arith.constant 0 : i32
    return %arg0, %c0_i32, %c0_i32_0 : i32, i32, i32
  }
}

</mosaic_0001>

<llo_original>
// kernel: tpu_custom_call.1
$region0: #{tpu_custom_call.1}
  #allocation0 [shape = 'u32[]', space=smem, size = 0x4, offset = 0x4, fixed_abs, tag = 'smem constant byte address 0x4 - core index']
  #allocation1 [shape = 'u32[72,128]{1,0:T(1,128)}', space=vmem, size = 0x9000, scoped, tag = 'internal scratch']
  #allocation2 [shape = 'f32[1,1]{1,0:T(1,128)S(1)}', space=vmem, size = 0x200, scoped, tag = 'scoped memory for tpu_custom_call.1']
  %s0 = inlined_call_operand.vmem [shape: f32[2,1024,48], index: 0, kind: input, shape index: {}]
  %s1 = inlined_call_operand.vmem [shape: f32[1024,1], index: 1, kind: input, shape index: {}]
  %s2 = inlined_call_operand.vmem [shape: f32[48,128], index: 2, kind: input, shape index: {}]
  %s3 = inlined_call_operand.vmem [shape: f32[1,128], index: 3, kind: input, shape index: {}]
  %s4 = inlined_call_operand.vmem [shape: f32[16,128,128], index: 4, kind: input, shape index: {}]
  %s5 = inlined_call_operand.vmem [shape: f32[1,128], index: 5, kind: input, shape index: {}]
  %s6 = inlined_call_operand.vmem [shape: f32[64,128], index: 6, kind: input, shape index: {}]
  %s7 = inlined_call_operand.<no memory space> [shape: f32[1,1], index: 7, kind: input, shape index: {}]
  %s8 = inlined_call_operand.hbm [shape: f32[2,1,128], index: 8, kind: output, shape index: {}]
  %s9 = sld [smem:[#allocation0]]
  $region65: #{tpu_custom_call.1} parent=0
    _
  %s11 = ssub.s32 1, %s9
  %s12 = scalar_select 0, %s11, %s9
  %v13 = vstv %s7
  %14 = vst [vmem:[#allocation2] sm:$0x1] %v13
  $region1: #{tpu_custom_call.1} parent=0
    #allocation3 [shape = 'u8[1024]{0}', space=vmem, size = 0x400, scoped, tag = 'output window, operand 0']
    #allocation4 [shape = 's32[2]{0}', space=sflag, size = 0x8, scoped, tag = 'scoped memory for tpu_custom_call.1']
    %15 = vsyncpa [#allocation4], 0
    %s16 = scalar_lea.sflag [#allocation4], 1
    %17 = vsyncpa %s16, 0
    loop: start=0, step=1, limit=4
    $region2: #{tpu_custom_call.1} parent=1 // loop_pre_header
      _
    $region3: #{tpu_custom_call.1} parent=1 // loop_header
      %s19 = sphi 0, %s23
      %p20 = scmp.ge.s32.totalorder %s19, 4
      %s29 = sphi 0, %s31
      %s32 = sphi 0, %s29
      %s33 = sphi 0, %s32
      %s49 = sphi 0, %s33
      %s53 = sphi 0, %s53
      %s55 = sphi 0, %s53
      %s56 = sphi 0, %s55
      %s70 = sphi 0, %s56
      %s74 = sphi 0, %s74
      %s76 = sphi 0, %s74
      %s77 = sphi 0, %s76
      %s91 = sphi 0, %s77
      %s95 = sphi 0, %s95
      %s97 = sphi 0, %s95
      %s98 = sphi 0, %s97
      %s112 = sphi 0, %s98
      %s116 = sphi 0, %s116
      %s118 = sphi 0, %s116
      %s119 = sphi 0, %s118
      %s133 = sphi 0, %s119
      %s137 = sphi 0, %s137
      %s139 = sphi 0, %s137
      %s140 = sphi 0, %s139
      %s154 = sphi 0, %s140
      %s158 = sphi 0, %s158
      %s160 = sphi 0, %s158
      %s161 = sphi 0, %s160
      %s175 = sphi 0, %s161
      %s179 = sphi 0, %s179
      %s181 = sphi 0, %s179
      %s182 = sphi 0, %s181
      %s196 = sphi 0, %s182
      %s202 = sphi 0, %s204
      %s205 = sphi 0, %s202
      %s206 = sphi 0, %s205
      %s222 = sphi 0, %s206
    $region4: #{tpu_custom_call.1} parent=1 // loop_header_branch
      %22 = sbr.rel (%p20) target = $region8
    $region5: #{tpu_custom_call.1} parent=1 // loop_body
      %s24 = ssub.s32 %s19, 1
      %s25 = ssub.s32 %s19, 2
      %s26 = sadd.s32 %s19, 1
      %s27 = ssub.s32 %s19, %s26
      %p28 = scmp.eq.s32.totalorder %s27, 0
      %s30 = sadd.s32 %s29, 1
      %s31 = scalar_select %p28, %s29, %s30
      %p34 = pneg %p28
      %p35 = scmp.eq.s32.totalorder %s19, 1
      %p36 = por %p34, %p35
      %p37 = scmp.ne.s32.totalorder %s29, %s32
      %p38 = scmp.eq.s32.totalorder %s19, 0
      %p39 = por %p37, %p38
      %p40 = scmp.ne.s32.totalorder %s29, %s32
      %p41 = scmp.eq.s32.totalorder %s24, 1
      %p42 = por %p40, %p41
      %p43 = scmp.ne.s32.totalorder %s32, %s33
      %p44 = scmp.eq.s32.totalorder %s24, 0
      %p45 = por %p43, %p44
      %p46 = scmp.ne.s32.totalorder %s32, %s33
      %p47 = scmp.eq.s32.totalorder %s25, 1
      %p48 = por %p46, %p47
      %p50 = scmp.ne.s32.totalorder %s33, %s49
      %p51 = scmp.eq.s32.totalorder %s25, 0
      %p52 = por %p50, %p51
      %s54 = sadd.s32 %s53, 1
      %p57 = scmp.eq.s32.totalorder %s19, 1
      %p58 = scmp.ne.s32.totalorder %s53, %s55
      %p59 = scmp.eq.s32.totalorder %s19, 0
      %p60 = por %p58, %p59
      %p61 = scmp.ne.s32.totalorder %s53, %s55
      %p62 = scmp.eq.s32.totalorder %s24, 1
      %p63 = por %p61, %p62
      %p64 = scmp.ne.s32.totalorder %s55, %s56
      %p65 = scmp.eq.s32.totalorder %s24, 0
      %p66 = por %p64, %p65
      %p67 = scmp.ne.s32.totalorder %s55, %s56
      %p68 = scmp.eq.s32.totalorder %s25, 1
      %p69 = por %p67, %p68
      %p71 = scmp.ne.s32.totalorder %s56, %s70
      %p72 = scmp.eq.s32.totalorder %s25, 0
      %p73 = por %p71, %p72
      %s75 = sadd.s32 %s74, 1
      %p78 = scmp.eq.s32.totalorder %s19, 1
      %p79 = scmp.ne.s32.totalorder %s74, %s76
      %p80 = scmp.eq.s32.totalorder %s19, 0
      %p81 = por %p79, %p80
      %p82 = scmp.ne.s32.totalorder %s74, %s76
      %p83 = scmp.eq.s32.totalorder %s24, 1
      %p84 = por %p82, %p83
      %p85 = scmp.ne.s32.totalorder %s76, %s77
      %p86 = scmp.eq.s32.totalorder %s24, 0
      %p87 = por %p85, %p86
      %p88 = scmp.ne.s32.totalorder %s76, %s77
      %p89 = scmp.eq.s32.totalorder %s25, 1
      %p90 = por %p88, %p89
      %p92 = scmp.ne.s32.totalorder %s77, %s91
      %p93 = scmp.eq.s32.totalorder %s25, 0
      %p94 = por %p92, %p93
      %s96 = sadd.s32 %s95, 1
      %p99 = scmp.eq.s32.totalorder %s19, 1
      %p100 = scmp.ne.s32.totalorder %s95, %s97
      %p101 = scmp.eq.s32.totalorder %s19, 0
      %p102 = por %p100, %p101
      %p103 = scmp.ne.s32.totalorder %s95, %s97
      %p104 = scmp.eq.s32.totalorder %s24, 1
      %p105 = por %p103, %p104
      %p106 = scmp.ne.s32.totalorder %s97, %s98
      %p107 = scmp.eq.s32.totalorder %s24, 0
      %p108 = por %p106, %p107
      %p109 = scmp.ne.s32.totalorder %s97, %s98
      %p110 = scmp.eq.s32.totalorder %s25, 1
      %p111 = por %p109, %p110
      %p113 = scmp.ne.s32.totalorder %s98, %s112
      %p114 = scmp.eq.s32.totalorder %s25, 0
      %p115 = por %p113, %p114
      %s117 = sadd.s32 %s116, 1
      %p120 = scmp.eq.s32.totalorder %s19, 1
      %p121 = scmp.ne.s32.totalorder %s116, %s118
      %p122 = scmp.eq.s32.totalorder %s19, 0
      %p123 = por %p121, %p122
      %p124 = scmp.ne.s32.totalorder %s116, %s118
      %p125 = scmp.eq.s32.totalorder %s24, 1
      %p126 = por %p124, %p125
      %p127 = scmp.ne.s32.totalorder %s118, %s119
      %p128 = scmp.eq.s32.totalorder %s24, 0
      %p129 = por %p127, %p128
      %p130 = scmp.ne.s32.totalorder %s118, %s119
      %p131 = scmp.eq.s32.totalorder %s25, 1
      %p132 = por %p130, %p131
      %p134 = scmp.ne.s32.totalorder %s119, %s133
      %p135 = scmp.eq.s32.totalorder %s25, 0
      %p136 = por %p134, %p135
      %s138 = sadd.s32 %s137, 1
      %p141 = scmp.eq.s32.totalorder %s19, 1
      %p142 = scmp.ne.s32.totalorder %s137, %s139
      %p143 = scmp.eq.s32.totalorder %s19, 0
      %p144 = por %p142, %p143
      %p145 = scmp.ne.s32.totalorder %s137, %s139
      %p146 = scmp.eq.s32.totalorder %s24, 1
      %p147 = por %p145, %p146
      %p148 = scmp.ne.s32.totalorder %s139, %s140
      %p149 = scmp.eq.s32.totalorder %s24, 0
      %p150 = por %p148, %p149
      %p151 = scmp.ne.s32.totalorder %s139, %s140
      %p152 = scmp.eq.s32.totalorder %s25, 1
      %p153 = por %p151, %p152
      %p155 = scmp.ne.s32.totalorder %s140, %s154
      %p156 = scmp.eq.s32.totalorder %s25, 0
      %p157 = por %p155, %p156
      %s159 = sadd.s32 %s158, 1
      %p162 = scmp.eq.s32.totalorder %s19, 1
      %p163 = scmp.ne.s32.totalorder %s158, %s160
      %p164 = scmp.eq.s32.totalorder %s19, 0
      %p165 = por %p163, %p164
      %p166 = scmp.ne.s32.totalorder %s158, %s160
      %p167 = scmp.eq.s32.totalorder %s24, 1
      %p168 = por %p166, %p167
      %p169 = scmp.ne.s32.totalorder %s160, %s161
      %p170 = scmp.eq.s32.totalorder %s24, 0
      %p171 = por %p169, %p170
      %p172 = scmp.ne.s32.totalorder %s160, %s161
      %p173 = scmp.eq.s32.totalorder %s25, 1
      %p174 = por %p172, %p173
      %p176 = scmp.ne.s32.totalorder %s161, %s175
      %p177 = scmp.eq.s32.totalorder %s25, 0
      %p178 = por %p176, %p177
      %s180 = sadd.s32 %s179, 1
      %p183 = scmp.eq.s32.totalorder %s19, 1
      %p184 = scmp.ne.s32.totalorder %s179, %s181
      %p185 = scmp.eq.s32.totalorder %s19, 0
      %p186 = por %p184, %p185
      %p187 = scmp.ne.s32.totalorder %s179, %s181
      %p188 = scmp.eq.s32.totalorder %s24, 1
      %p189 = por %p187, %p188
      %p190 = scmp.ne.s32.totalorder %s181, %s182
      %p191 = scmp.eq.s32.totalorder %s24, 0
      %p192 = por %p190, %p191
      %p193 = scmp.ne.s32.totalorder %s181, %s182
      %p194 = scmp.eq.s32.totalorder %s25, 1
      %p195 = por %p193, %p194
      %p197 = scmp.ne.s32.totalorder %s182, %s196
      %p198 = scmp.eq.s32.totalorder %s25, 0
      %p199 = por %p197, %p198
      %s200 = ssub.s32 %s19, %s26
      %p201 = scmp.eq.s32.totalorder %s200, 0
      %s203 = sadd.s32 %s202, 1
      %s204 = scalar_select %p201, %s202, %s203
      %p207 = pneg %p201
      %p208 = scmp.eq.s32.totalorder %s19, 1
      %p209 = por %p207, %p208
      %p210 = scmp.ne.s32.totalorder %s202, %s205
      %p211 = scmp.eq.s32.totalorder %s19, 0
      %p212 = por %p210, %p211
      %p213 = scmp.ne.s32.totalorder %s202, %s205
      %p214 = scmp.eq.s32.totalorder %s24, 1
      %p215 = por %p213, %p214
      %p216 = scmp.ne.s32.totalorder %s205, %s206
      %p217 = scmp.eq.s32.totalorder %s24, 0
      %p218 = por %p216, %p217
      %p219 = scmp.ne.s32.totalorder %s205, %s206
      %p220 = scmp.eq.s32.totalorder %s25, 1
      %p221 = por %p219, %p220
      %p223 = scmp.ne.s32.totalorder %s206, %s222
      %p224 = scmp.eq.s32.totalorder %s25, 0
      %p225 = por %p223, %p224
      %p226 = scmp.le.s32.totalorder 1, %s19
      %p227 = scmp.lt.s32.totalorder %s19, 3
      %p228 = pnand %p226, %p227
      %p229 = pneg %p228
      // Predicated region
      $region9: #{tpu_custom_call.1} parent=5 // pred_check
        _
      $region10: #{tpu_custom_call.1} parent=5 // pred_check_branch
        %231 = sbr.rel (%p228) target = $region12
      $region11: #{tpu_custom_call.1} parent=5 // pred_region
        %s232 = ssub.s32 %s19, 1
        // Predicated region
        $region13: #{tpu_custom_call.1} parent=11 // pred_check
          %p233 = pneg %p66
        $region14: #{tpu_custom_call.1} parent=11 // pred_check_branch
          %235 = sbr.rel (%p233) target = $region16
        $region15: #{tpu_custom_call.1} parent=11 // pred_region
          _
        $region16: #{tpu_custom_call.1} parent=11 // pred_fallthru
          _
        // Predicated region
        $region17: #{tpu_custom_call.1} parent=11 // pred_check
          %p236 = pneg %p87
        $region18: #{tpu_custom_call.1} parent=11 // pred_check_branch
          %238 = sbr.rel (%p236) target = $region20
        $region19: #{tpu_custom_call.1} parent=11 // pred_region
          _
        $region20: #{tpu_custom_call.1} parent=11 // pred_fallthru
          _
        // Predicated region
        $region21: #{tpu_custom_call.1} parent=11 // pred_check
          %p239 = pneg %p108
        $region22: #{tpu_custom_call.1} parent=11 // pred_check_branch
          %241 = sbr.rel (%p239) target = $region24
        $region23: #{tpu_custom_call.1} parent=11 // pred_region
          _
        $region24: #{tpu_custom_call.1} parent=11 // pred_fallthru
          _
        // Predicated region
        $region25: #{tpu_custom_call.1} parent=11 // pred_check
          %p242 = pneg %p129
        $region26: #{tpu_custom_call.1} parent=11 // pred_check_branch
          %244 = sbr.rel (%p242) target = $region28
        $region27: #{tpu_custom_call.1} parent=11 // pred_region
          _
        $region28: #{tpu_custom_call.1} parent=11 // pred_fallthru
          _
        // Predicated region
        $region29: #{tpu_custom_call.1} parent=11 // pred_check
          %p245 = pneg %p150
        $region30: #{tpu_custom_call.1} parent=11 // pred_check_branch
          %247 = sbr.rel (%p245) target = $region32
        $region31: #{tpu_custom_call.1} parent=11 // pred_region
          _
        $region32: #{tpu_custom_call.1} parent=11 // pred_fallthru
          _
        // Predicated region
        $region33: #{tpu_custom_call.1} parent=11 // pred_check
          %p248 = pneg %p171
        $region34: #{tpu_custom_call.1} parent=11 // pred_check_branch
          %250 = sbr.rel (%p248) target = $region36
        $region35: #{tpu_custom_call.1} parent=11 // pred_region
          _
        $region36: #{tpu_custom_call.1} parent=11 // pred_fallthru
          _
        // Predicated region
        $region37: #{tpu_custom_call.1} parent=11 // pred_check
          %p251 = pneg %p192
        $region38: #{tpu_custom_call.1} parent=11 // pred_check_branch
          %253 = sbr.rel (%p251) target = $region40
        $region39: #{tpu_custom_call.1} parent=11 // pred_region
          _
        $region40: #{tpu_custom_call.1} parent=11 // pred_fallthru
          _
      $region12: #{tpu_custom_call.1} parent=5 // pred_fallthru
        _
      %p254 = scmp.lt.s32.totalorder %s19, 2
      // Predicated region
      $region41: #{tpu_custom_call.1} parent=5 // pred_check
        %p255 = pneg %p254
      $region42: #{tpu_custom_call.1} parent=5 // pred_check_branch
        %257 = sbr.rel (%p255) target = $region44
      $region43: #{tpu_custom_call.1} parent=5 // pred_region
        // Predicated region
        $region45: #{tpu_custom_call.1} parent=43 // pred_check
          %p258 = pneg %p39
        $region46: #{tpu_custom_call.1} parent=43 // pred_check_branch
          %260 = sbr.rel (%p258) target = $region48
        $region47: #{tpu_custom_call.1} parent=43 // pred_region
          %p261 = scmp.lt.s32.totalorder %s19, 1
          %s262 = scalar_select %p261, %s19, 1
          %s263 = smul.addr %s262, 128
          %s264 = smul.addr %s263, 8
          %s265 = scalar_lea.vmem %s0, %s264
        $region48: #{tpu_custom_call.1} parent=43 // pred_fallthru
          _
      $region44: #{tpu_custom_call.1} parent=5 // pred_fallthru
        _
      %p266 = scmp.le.s32.totalorder 1, %s19
      %p267 = scmp.lt.s32.totalorder %s19, 3
      %p268 = pnand %p266, %p267
      %p269 = pneg %p268
      // Predicated region
      $region49: #{tpu_custom_call.1} parent=5 // pred_check
        _
      $region50: #{tpu_custom_call.1} parent=5 // pred_check_branch
        %271 = sbr.rel (%p268) target = $region52
      $region51: #{tpu_custom_call.1} parent=5 // pred_region
        %s272 = ssub.s32 %s19, 1
        %p273 = scmp.lt.s32.totalorder %s24, 1
        %s274 = scalar_select %p273, %s24, 1
        %s275 = smul.addr %s274, 128
        %s276 = smul.addr %s275, 8
        %s277 = scalar_lea.vmem %s0, %s276
        %p278 = pneg %p45
        %p279 = pneg %p42
        %p280 = pneg %p66
        %p281 = pneg %p63
        %p282 = pneg %p87
        %p283 = pneg %p84
        %p284 = pneg %p108
        %p285 = pneg %p105
        %p286 = pneg %p129
        %p287 = pneg %p126
        %p288 = pneg %p150
        %p289 = pneg %p147
        %p290 = pneg %p171
        %p291 = pneg %p168
        %p292 = pneg %p192
        %p293 = pneg %p189
        %p294 = pneg %p218
        %p295 = pneg %p215
        %s296 = sand.u32 %s205, 1
        %s297 = scalar_lea.sflag [#allocation4], %s296
        %s298 = sand.u32 %s205, 1
        %s299 = scalar_lea.vmem [#allocation3], %s298
        %p300 = scmp.lt.s32.totalorder %s24, 1
        %s301 = scalar_select %p300, %s24, 1
        %s302 = smul.addr %s301, 128
        %s303 = smul.addr %s302, 8
        %s304 = scalar_lea.vmem %s0, %s303
        %v305 = vld [vmem:[%s304] sm:$0xff]
        %v306 = vld [vmem:[%s304 + $0x8] sm:$0xff]
        %v307 = vld [vmem:[%s304 + $0x10] sm:$0xff]
        %v308 = vld [vmem:[%s304 + $0x18] sm:$0xff]
        %v309 = vld [vmem:[%s304 + $0x20] sm:$0xff]
        %v310 = vld [vmem:[%s304 + $0x28] sm:$0xff]
        %v311 = vld [vmem:[%s304 + $0x30] sm:$0xff]
        %v312 = vld [vmem:[%s304 + $0x38] sm:$0xff]
        %v313 = vld [vmem:[%s304 + $0x40] sm:$0xff]
        %v314 = vld [vmem:[%s304 + $0x48] sm:$0xff]
        %v315 = vld [vmem:[%s304 + $0x50] sm:$0xff]
        %v316 = vld [vmem:[%s304 + $0x58] sm:$0xff]
        %v317 = vld [vmem:[%s304 + $0x60] sm:$0xff]
        %v318 = vld [vmem:[%s304 + $0x68] sm:$0xff]
        %v319 = vld [vmem:[%s304 + $0x70] sm:$0xff]
        %v320 = vld [vmem:[%s304 + $0x78] sm:$0xff]
        %v321 = vld [vmem:[%s304 + $0x80] sm:$0xff]
        %v322 = vld [vmem:[%s304 + $0x88] sm:$0xff]
        %v323 = vld [vmem:[%s304 + $0x90] sm:$0xff]
        %v324 = vld [vmem:[%s304 + $0x98] sm:$0xff]
        %v325 = vld [vmem:[%s304 + $0xa0] sm:$0xff]
        %v326 = vld [vmem:[%s304 + $0xa8] sm:$0xff]
        %v327 = vld [vmem:[%s304 + $0xb0] sm:$0xff]
        %v328 = vld [vmem:[%s304 + $0xb8] sm:$0xff]
        %v329 = vld [vmem:[%s304 + $0xc0] sm:$0xff]
        %v330 = vld [vmem:[%s304 + $0xc8] sm:$0xff]
        %v331 = vld [vmem:[%s304 + $0xd0] sm:$0xff]
        %v332 = vld [vmem:[%s304 + $0xd8] sm:$0xff]
        %v333 = vld [vmem:[%s304 + $0xe0] sm:$0xff]
        %v334 = vld [vmem:[%s304 + $0xe8] sm:$0xff]
        %v335 = vld [vmem:[%s304 + $0xf0] sm:$0xff]
        %v336 = vld [vmem:[%s304 + $0xf8] sm:$0xff]
        %v337 = vld [vmem:[%s304 + $0x100] sm:$0xff]
        %v338 = vld [vmem:[%s304 + $0x108] sm:$0xff]
        %v339 = vld [vmem:[%s304 + $0x110] sm:$0xff]
        %v340 = vld [vmem:[%s304 + $0x118] sm:$0xff]
        %v341 = vld [vmem:[%s304 + $0x120] sm:$0xff]
        %v342 = vld [vmem:[%s304 + $0x128] sm:$0xff]
        %v343 = vld [vmem:[%s304 + $0x130] sm:$0xff]
        %v344 = vld [vmem:[%s304 + $0x138] sm:$0xff]
        %v345 = vld [vmem:[%s304 + $0x140] sm:$0xff]
        %v346 = vld [vmem:[%s304 + $0x148] sm:$0xff]
        %v347 = vld [vmem:[%s304 + $0x150] sm:$0xff]
        %v348 = vld [vmem:[%s304 + $0x158] sm:$0xff]
        %v349 = vld [vmem:[%s304 + $0x160] sm:$0xff]
        %v350 = vld [vmem:[%s304 + $0x168] sm:$0xff]
        %v351 = vld [vmem:[%s304 + $0x170] sm:$0xff]
        %v352 = vld [vmem:[%s304 + $0x178] sm:$0xff]
        %v353 = vld [vmem:[%s304 + $0x180] sm:$0xff]
        %v354 = vld [vmem:[%s304 + $0x188] sm:$0xff]
        %v355 = vld [vmem:[%s304 + $0x190] sm:$0xff]
        %v356 = vld [vmem:[%s304 + $0x198] sm:$0xff]
        %v357 = vld [vmem:[%s304 + $0x1a0] sm:$0xff]
        %v358 = vld [vmem:[%s304 + $0x1a8] sm:$0xff]
        %v359 = vld [vmem:[%s304 + $0x1b0] sm:$0xff]
        %v360 = vld [vmem:[%s304 + $0x1b8] sm:$0xff]
        %v361 = vld [vmem:[%s304 + $0x1c0] sm:$0xff]
        %v362 = vld [vmem:[%s304 + $0x1c8] sm:$0xff]
        %v363 = vld [vmem:[%s304 + $0x1d0] sm:$0xff]
        %v364 = vld [vmem:[%s304 + $0x1d8] sm:$0xff]
        %v365 = vld [vmem:[%s304 + $0x1e0] sm:$0xff]
        %v366 = vld [vmem:[%s304 + $0x1e8] sm:$0xff]
        %v367 = vld [vmem:[%s304 + $0x1f0] sm:$0xff]
        %v368 = vld [vmem:[%s304 + $0x1f8] sm:$0xff]
        %v369 = vld [vmem:[%s304 + $0x200] sm:$0xff]
        %v370 = vld [vmem:[%s304 + $0x208] sm:$0xff]
        %v371 = vld [vmem:[%s304 + $0x210] sm:$0xff]
        %v372 = vld [vmem:[%s304 + $0x218] sm:$0xff]
        %v373 = vld [vmem:[%s304 + $0x220] sm:$0xff]
        %v374 = vld [vmem:[%s304 + $0x228] sm:$0xff]
        %v375 = vld [vmem:[%s304 + $0x230] sm:$0xff]
        %v376 = vld [vmem:[%s304 + $0x238] sm:$0xff]
        %v377 = vld [vmem:[%s304 + $0x240] sm:$0xff]
        %v378 = vld [vmem:[%s304 + $0x248] sm:$0xff]
        %v379 = vld [vmem:[%s304 + $0x250] sm:$0xff]
        %v380 = vld [vmem:[%s304 + $0x258] sm:$0xff]
        %v381 = vld [vmem:[%s304 + $0x260] sm:$0xff]
        %v382 = vld [vmem:[%s304 + $0x268] sm:$0xff]
        %v383 = vld [vmem:[%s304 + $0x270] sm:$0xff]
        %v384 = vld [vmem:[%s304 + $0x278] sm:$0xff]
        %v385 = vld [vmem:[%s304 + $0x280] sm:$0xff]
        %v386 = vld [vmem:[%s304 + $0x288] sm:$0xff]
        %v387 = vld [vmem:[%s304 + $0x290] sm:$0xff]
        %v388 = vld [vmem:[%s304 + $0x298] sm:$0xff]
        %v389 = vld [vmem:[%s304 + $0x2a0] sm:$0xff]
        %v390 = vld [vmem:[%s304 + $0x2a8] sm:$0xff]
        %v391 = vld [vmem:[%s304 + $0x2b0] sm:$0xff]
        %v392 = vld [vmem:[%s304 + $0x2b8] sm:$0xff]
        %v393 = vld [vmem:[%s304 + $0x2c0] sm:$0xff]
        %v394 = vld [vmem:[%s304 + $0x2c8] sm:$0xff]
        %v395 = vld [vmem:[%s304 + $0x2d0] sm:$0xff]
        %v396 = vld [vmem:[%s304 + $0x2d8] sm:$0xff]
        %v397 = vld [vmem:[%s304 + $0x2e0] sm:$0xff]
        %v398 = vld [vmem:[%s304 + $0x2e8] sm:$0xff]
        %v399 = vld [vmem:[%s304 + $0x2f0] sm:$0xff]
        %v400 = vld [vmem:[%s304 + $0x2f8] sm:$0xff]
        %v401 = vld [vmem:[%s304 + $0x300] sm:$0xff]
        %v402 = vld [vmem:[%s304 + $0x308] sm:$0xff]
        %v403 = vld [vmem:[%s304 + $0x310] sm:$0xff]
        %v404 = vld [vmem:[%s304 + $0x318] sm:$0xff]
        %v405 = vld [vmem:[%s304 + $0x320] sm:$0xff]
        %v406 = vld [vmem:[%s304 + $0x328] sm:$0xff]
        %v407 = vld [vmem:[%s304 + $0x330] sm:$0xff]
        %v408 = vld [vmem:[%s304 + $0x338] sm:$0xff]
        %v409 = vld [vmem:[%s304 + $0x340] sm:$0xff]
        %v410 = vld [vmem:[%s304 + $0x348] sm:$0xff]
        %v411 = vld [vmem:[%s304 + $0x350] sm:$0xff]
        %v412 = vld [vmem:[%s304 + $0x358] sm:$0xff]
        %v413 = vld [vmem:[%s304 + $0x360] sm:$0xff]
        %v414 = vld [vmem:[%s304 + $0x368] sm:$0xff]
        %v415 = vld [vmem:[%s304 + $0x370] sm:$0xff]
        %v416 = vld [vmem:[%s304 + $0x378] sm:$0xff]
        %v417 = vld [vmem:[%s304 + $0x380] sm:$0xff]
        %v418 = vld [vmem:[%s304 + $0x388] sm:$0xff]
        %v419 = vld [vmem:[%s304 + $0x390] sm:$0xff]
        %v420 = vld [vmem:[%s304 + $0x398] sm:$0xff]
        %v421 = vld [vmem:[%s304 + $0x3a0] sm:$0xff]
        %v422 = vld [vmem:[%s304 + $0x3a8] sm:$0xff]
        %v423 = vld [vmem:[%s304 + $0x3b0] sm:$0xff]
        %v424 = vld [vmem:[%s304 + $0x3b8] sm:$0xff]
        %v425 = vld [vmem:[%s304 + $0x3c0] sm:$0xff]
        %v426 = vld [vmem:[%s304 + $0x3c8] sm:$0xff]
        %v427 = vld [vmem:[%s304 + $0x3d0] sm:$0xff]
        %v428 = vld [vmem:[%s304 + $0x3d8] sm:$0xff]
        %v429 = vld [vmem:[%s304 + $0x3e0] sm:$0xff]
        %v430 = vld [vmem:[%s304 + $0x3e8] sm:$0xff]
        %v431 = vld [vmem:[%s304 + $0x3f0] sm:$0xff]
        %v432 = vld [vmem:[%s304 + $0x3f8] sm:$0xff]
        %v433 = vld [vmem:[%s2] sm:$0xff]
        %v434 = vld [vmem:[%s2 + $0x8] sm:$0xff]
        %v435 = vld [vmem:[%s2 + $0x10] sm:$0xff]
        %v436 = vld [vmem:[%s2 + $0x18] sm:$0xff]
        %v437 = vld [vmem:[%s2 + $0x20] sm:$0xff]
        %v438 = vld [vmem:[%s2 + $0x28] sm:$0xff]
        %v439 = vld [vmem:[%s3] sm:$0x1]
        %v441 = vperm.slane %v439, 0
        %vm443 = vcmask 392192
        %v445 = vsel %vm443, %v305, 0
        %v448 = vsel %vm443, %v306, 0
        %v451 = vsel %vm443, %v307, 0
        %v454 = vsel %vm443, %v308, 0
        %v457 = vsel %vm443, %v309, 0
        %v460 = vsel %vm443, %v310, 0
        %v463 = vsel %vm443, %v311, 0
        %v466 = vsel %vm443, %v312, 0
        %v469 = vsel %vm443, %v313, 0
        %v472 = vsel %vm443, %v314, 0
        %v475 = vsel %vm443, %v315, 0
        %v478 = vsel %vm443, %v316, 0
        %v481 = vsel %vm443, %v317, 0
        %v484 = vsel %vm443, %v318, 0
        %v487 = vsel %vm443, %v319, 0
        %v490 = vsel %vm443, %v320, 0
        %v493 = vsel %vm443, %v321, 0
        %v496 = vsel %vm443, %v322, 0
        %v499 = vsel %vm443, %v323, 0
        %v502 = vsel %vm443, %v324, 0
        %v505 = vsel %vm443, %v325, 0
        %v508 = vsel %vm443, %v326, 0
        %v511 = vsel %vm443, %v327, 0
        %v514 = vsel %vm443, %v328, 0
        %v517 = vsel %vm443, %v329, 0
        %v520 = vsel %vm443, %v330, 0
        %v523 = vsel %vm443, %v331, 0
        %v526 = vsel %vm443, %v332, 0
        %v529 = vsel %vm443, %v333, 0
        %v532 = vsel %vm443, %v334, 0
        %v535 = vsel %vm443, %v335, 0
        %v538 = vsel %vm443, %v336, 0
        %v541 = vsel %vm443, %v337, 0
        %v544 = vsel %vm443, %v338, 0
        %v547 = vsel %vm443, %v339, 0
        %v550 = vsel %vm443, %v340, 0
        %v553 = vsel %vm443, %v341, 0
        %v556 = vsel %vm443, %v342, 0
        %v559 = vsel %vm443, %v343, 0
        %v562 = vsel %vm443, %v344, 0
        %v565 = vsel %vm443, %v345, 0
        %v568 = vsel %vm443, %v346, 0
        %v571 = vsel %vm443, %v347, 0
        %v574 = vsel %vm443, %v348, 0
        %v577 = vsel %vm443, %v349, 0
        %v580 = vsel %vm443, %v350, 0
        %v583 = vsel %vm443, %v351, 0
        %v586 = vsel %vm443, %v352, 0
        %v589 = vsel %vm443, %v353, 0
        %v592 = vsel %vm443, %v354, 0
        %v595 = vsel %vm443, %v355, 0
        %v598 = vsel %vm443, %v356, 0
        %v601 = vsel %vm443, %v357, 0
        %v604 = vsel %vm443, %v358, 0
        %v607 = vsel %vm443, %v359, 0
        %v610 = vsel %vm443, %v360, 0
        %v613 = vsel %vm443, %v361, 0
        %v616 = vsel %vm443, %v362, 0
        %v619 = vsel %vm443, %v363, 0
        %v622 = vsel %vm443, %v364, 0
        %v625 = vsel %vm443, %v365, 0
        %v628 = vsel %vm443, %v366, 0
        %v631 = vsel %vm443, %v367, 0
        %v634 = vsel %vm443, %v368, 0
        %v637 = vsel %vm443, %v369, 0
        %v640 = vsel %vm443, %v370, 0
        %v643 = vsel %vm443, %v371, 0
        %v646 = vsel %vm443, %v372, 0
        %v649 = vsel %vm443, %v373, 0
        %v652 = vsel %vm443, %v374, 0
        %v655 = vsel %vm443, %v375, 0
        %v658 = vsel %vm443, %v376, 0
        %v661 = vsel %vm443, %v377, 0
        %v664 = vsel %vm443, %v378, 0
        %v667 = vsel %vm443, %v379, 0
        %v670 = vsel %vm443, %v380, 0
        %v673 = vsel %vm443, %v381, 0
        %v676 = vsel %vm443, %v382, 0
        %v679 = vsel %vm443, %v383, 0
        %v682 = vsel %vm443, %v384, 0
        %v685 = vsel %vm443, %v385, 0
        %v688 = vsel %vm443, %v386, 0
        %v691 = vsel %vm443, %v387, 0
        %v694 = vsel %vm443, %v388, 0
        %v697 = vsel %vm443, %v389, 0
        %v700 = vsel %vm443, %v390, 0
        %v703 = vsel %vm443, %v391, 0
        %v706 = vsel %vm443, %v392, 0
        %v709 = vsel %vm443, %v393, 0
        %v712 = vsel %vm443, %v394, 0
        %v715 = vsel %vm443, %v395, 0
        %v718 = vsel %vm443, %v396, 0
        %v721 = vsel %vm443, %v397, 0
        %v724 = vsel %vm443, %v398, 0
        %v727 = vsel %vm443, %v399, 0
        %v730 = vsel %vm443, %v400, 0
        %v733 = vsel %vm443, %v401, 0
        %v736 = vsel %vm443, %v402, 0
        %v739 = vsel %vm443, %v403, 0
        %v742 = vsel %vm443, %v404, 0
        %v745 = vsel %vm443, %v405, 0
        %v748 = vsel %vm443, %v406, 0
        %v751 = vsel %vm443, %v407, 0
        %v754 = vsel %vm443, %v408, 0
        %v757 = vsel %vm443, %v409, 0
        %v760 = vsel %vm443, %v410, 0
        %v763 = vsel %vm443, %v411, 0
        %v766 = vsel %vm443, %v412, 0
        %v769 = vsel %vm443, %v413, 0
        %v772 = vsel %vm443, %v414, 0
        %v775 = vsel %vm443, %v415, 0
        %v778 = vsel %vm443, %v416, 0
        %v781 = vsel %vm443, %v417, 0
        %v784 = vsel %vm443, %v418, 0
        %v787 = vsel %vm443, %v419, 0
        %v790 = vsel %vm443, %v420, 0
        %v793 = vsel %vm443, %v421, 0
        %v796 = vsel %vm443, %v422, 0
        %v799 = vsel %vm443, %v423, 0
        %v802 = vsel %vm443, %v424, 0
        %v805 = vsel %vm443, %v425, 0
        %v808 = vsel %vm443, %v426, 0
        %v811 = vsel %vm443, %v427, 0
        %v814 = vsel %vm443, %v428, 0
        %v817 = vsel %vm443, %v429, 0
        %v820 = vsel %vm443, %v430, 0
        %v823 = vsel %vm443, %v431, 0
        %v826 = vsel %vm443, %v432, 0
        %828 = vmatpush.msra.mxu0 0.0
        %829 = vmatpush.msra.mxu0 0.0
        %830 = vmatpush.msra.mxu0 0.0
        %831 = vmatpush.msra.mxu0 0.0
        %832 = vmatpush.msra.mxu0 0.0
        %833 = vmatpush.msra.mxu0 0.0
        %834 = vmatpush.msra.mxu0 0.0
        %835 = vmatpush.msra.mxu0 0.0
        %836 = vmatpush.msra.mxu0 0.0
        %837 = vmatpush.msra.mxu0 0.0
        %838 = vmatpush.msra.mxu0 %v438
        %839 = vmatpush.msra.mxu0 %v437
        %840 = vmatpush.msra.mxu0 %v436
        %841 = vmatpush.msra.mxu0 %v435
        %842 = vmatpush.msra.mxu0 %v434
        %843 = vmatpush.msra.mxu0 %v433
        %844 = vmatmul.f32.gmra.mxu0 %v445
        %v845 = vpop.f32.mrf.mxu0
        %v846 = vadd.f32 %v441, %v845
        %847 = vmatmul.f32.gmra.mxu0 %v448
        %v848 = vpop.f32.mrf.mxu0
        %v849 = vadd.f32 %v441, %v848
        %850 = vmatmul.f32.gmra.mxu0 %v451
        %v851 = vpop.f32.mrf.mxu0
        %v852 = vadd.f32 %v441, %v851
        %853 = vmatmul.f32.gmra.mxu0 %v454
        %v854 = vpop.f32.mrf.mxu0
        %v855 = vadd.f32 %v441, %v854
        %856 = vmatmul.f32.gmra.mxu0 %v457
        %v857 = vpop.f32.mrf.mxu0
        %v858 = vadd.f32 %v441, %v857
        %859 = vmatmul.f32.gmra.mxu0 %v460
        %v860 = vpop.f32.mrf.mxu0
        %v861 = vadd.f32 %v441, %v860
        %862 = vmatmul.f32.gmra.mxu0 %v463
        %v863 = vpop.f32.mrf.mxu0
        %v864 = vadd.f32 %v441, %v863
        %865 = vmatmul.f32.gmra.mxu0 %v466
        %v866 = vpop.f32.mrf.mxu0
        %v867 = vadd.f32 %v441, %v866
        %868 = vmatmul.f32.gmra.mxu0 %v469
        %v869 = vpop.f32.mrf.mxu0
        %v870 = vadd.f32 %v441, %v869
        %871 = vmatmul.f32.gmra.mxu0 %v472
        %v872 = vpop.f32.mrf.mxu0
        %v873 = vadd.f32 %v441, %v872
        %874 = vmatmul.f32.gmra.mxu0 %v475
        %v875 = vpop.f32.mrf.mxu0
        %v876 = vadd.f32 %v441, %v875
        %877 = vmatmul.f32.gmra.mxu0 %v478
        %v878 = vpop.f32.mrf.mxu0
        %v879 = vadd.f32 %v441, %v878
        %880 = vmatmul.f32.gmra.mxu0 %v481
        %v881 = vpop.f32.mrf.mxu0
        %v882 = vadd.f32 %v441, %v881
        %883 = vmatmul.f32.gmra.mxu0 %v484
        %v884 = vpop.f32.mrf.mxu0
        %v885 = vadd.f32 %v441, %v884
        %886 = vmatmul.f32.gmra.mxu0 %v487
        %v887 = vpop.f32.mrf.mxu0
        %v888 = vadd.f32 %v441, %v887
        %889 = vmatmul.f32.gmra.mxu0 %v490
        %v890 = vpop.f32.mrf.mxu0
        %v891 = vadd.f32 %v441, %v890
        %892 = vmatmul.f32.gmra.mxu0 %v493
        %v893 = vpop.f32.mrf.mxu0
        %v894 = vadd.f32 %v441, %v893
        %895 = vmatmul.f32.gmra.mxu0 %v496
        %v896 = vpop.f32.mrf.mxu0
        %v897 = vadd.f32 %v441, %v896
        %898 = vmatmul.f32.gmra.mxu0 %v499
        %v899 = vpop.f32.mrf.mxu0
        %v900 = vadd.f32 %v441, %v899
        %901 = vmatmul.f32.gmra.mxu0 %v502
        %v902 = vpop.f32.mrf.mxu0
        %v903 = vadd.f32 %v441, %v902
        %904 = vmatmul.f32.gmra.mxu0 %v505
        %v905 = vpop.f32.mrf.mxu0
        %v906 = vadd.f32 %v441, %v905
        %907 = vmatmul.f32.gmra.mxu0 %v508
        %v908 = vpop.f32.mrf.mxu0
        %v909 = vadd.f32 %v441, %v908
        %910 = vmatmul.f32.gmra.mxu0 %v511
        %v911 = vpop.f32.mrf.mxu0
        %v912 = vadd.f32 %v441, %v911
        %913 = vmatmul.f32.gmra.mxu0 %v514
        %v914 = vpop.f32.mrf.mxu0
        %v915 = vadd.f32 %v441, %v914
        %916 = vmatmul.f32.gmra.mxu0 %v517
        %v917 = vpop.f32.mrf.mxu0
        %v918 = vadd.f32 %v441, %v917
        %919 = vmatmul.f32.gmra.mxu0 %v520
        %v920 = vpop.f32.mrf.mxu0
        %v921 = vadd.f32 %v441, %v920
        %922 = vmatmul.f32.gmra.mxu0 %v523
        %v923 = vpop.f32.mrf.mxu0
        %v924 = vadd.f32 %v441, %v923
        %925 = vmatmul.f32.gmra.mxu0 %v526
        %v926 = vpop.f32.mrf.mxu0
        %v927 = vadd.f32 %v441, %v926
        %928 = vmatmul.f32.gmra.mxu0 %v529
        %v929 = vpop.f32.mrf.mxu0
        %v930 = vadd.f32 %v441, %v929
        %931 = vmatmul.f32.gmra.mxu0 %v532
        %v932 = vpop.f32.mrf.mxu0
        %v933 = vadd.f32 %v441, %v932
        %934 = vmatmul.f32.gmra.mxu0 %v535
        %v935 = vpop.f32.mrf.mxu0
        %v936 = vadd.f32 %v441, %v935
        %937 = vmatmul.f32.gmra.mxu0 %v538
        %v938 = vpop.f32.mrf.mxu0
        %v939 = vadd.f32 %v441, %v938
        %940 = vmatmul.f32.gmra.mxu0 %v541
        %v941 = vpop.f32.mrf.mxu0
        %v942 = vadd.f32 %v441, %v941
        %943 = vmatmul.f32.gmra.mxu0 %v544
        %v944 = vpop.f32.mrf.mxu0
        %v945 = vadd.f32 %v441, %v944
        %946 = vmatmul.f32.gmra.mxu0 %v547
        %v947 = vpop.f32.mrf.mxu0
        %v948 = vadd.f32 %v441, %v947
        %949 = vmatmul.f32.gmra.mxu0 %v550
        %v950 = vpop.f32.mrf.mxu0
        %v951 = vadd.f32 %v441, %v950
        %952 = vmatmul.f32.gmra.mxu0 %v553
        %v953 = vpop.f32.mrf.mxu0
        %v954 = vadd.f32 %v441, %v953
        %955 = vmatmul.f32.gmra.mxu0 %v556
        %v956 = vpop.f32.mrf.mxu0
        %v957 = vadd.f32 %v441, %v956
        %958 = vmatmul.f32.gmra.mxu0 %v559
        %v959 = vpop.f32.mrf.mxu0
        %v960 = vadd.f32 %v441, %v959
        %961 = vmatmul.f32.gmra.mxu0 %v562
        %v962 = vpop.f32.mrf.mxu0
        %v963 = vadd.f32 %v441, %v962
        %964 = vmatmul.f32.gmra.mxu0 %v565
        %v965 = vpop.f32.mrf.mxu0
        %v966 = vadd.f32 %v441, %v965
        %967 = vmatmul.f32.gmra.mxu0 %v568
        %v968 = vpop.f32.mrf.mxu0
        %v969 = vadd.f32 %v441, %v968
        %970 = vmatmul.f32.gmra.mxu0 %v571
        %v971 = vpop.f32.mrf.mxu0
        %v972 = vadd.f32 %v441, %v971
        %973 = vmatmul.f32.gmra.mxu0 %v574
        %v974 = vpop.f32.mrf.mxu0
        %v975 = vadd.f32 %v441, %v974
        %976 = vmatmul.f32.gmra.mxu0 %v577
        %v977 = vpop.f32.mrf.mxu0
        %v978 = vadd.f32 %v441, %v977
        %979 = vmatmul.f32.gmra.mxu0 %v580
        %v980 = vpop.f32.mrf.mxu0
        %v981 = vadd.f32 %v441, %v980
        %982 = vmatmul.f32.gmra.mxu0 %v583
        %v983 = vpop.f32.mrf.mxu0
        %v984 = vadd.f32 %v441, %v983
        %985 = vmatmul.f32.gmra.mxu0 %v586
        %v986 = vpop.f32.mrf.mxu0
        %v987 = vadd.f32 %v441, %v986
        %988 = vmatmul.f32.gmra.mxu0 %v589
        %v989 = vpop.f32.mrf.mxu0
        %v990 = vadd.f32 %v441, %v989
        %991 = vmatmul.f32.gmra.mxu0 %v592
        %v992 = vpop.f32.mrf.mxu0
        %v993 = vadd.f32 %v441, %v992
        %994 = vmatmul.f32.gmra.mxu0 %v595
        %v995 = vpop.f32.mrf.mxu0
        %v996 = vadd.f32 %v441, %v995
        %997 = vmatmul.f32.gmra.mxu0 %v598
        %v998 = vpop.f32.mrf.mxu0
        %v999 = vadd.f32 %v441, %v998
        %1000 = vmatmul.f32.gmra.mxu0 %v601
        %v1001 = vpop.f32.mrf.mxu0
        %v1002 = vadd.f32 %v441, %v1001
        %1003 = vmatmul.f32.gmra.mxu0 %v604
        %v1004 = vpop.f32.mrf.mxu0
        %v1005 = vadd.f32 %v441, %v1004
        %1006 = vmatmul.f32.gmra.mxu0 %v607
        %v1007 = vpop.f32.mrf.mxu0
        %v1008 = vadd.f32 %v441, %v1007
        %1009 = vmatmul.f32.gmra.mxu0 %v610
        %v1010 = vpop.f32.mrf.mxu0
        %v1011 = vadd.f32 %v441, %v1010
        %1012 = vmatmul.f32.gmra.mxu0 %v613
        %v1013 = vpop.f32.mrf.mxu0
        %v1014 = vadd.f32 %v441, %v1013
        %1015 = vmatmul.f32.gmra.mxu0 %v616
        %v1016 = vpop.f32.mrf.mxu0
        %v1017 = vadd.f32 %v441, %v1016
        %1018 = vmatmul.f32.gmra.mxu0 %v619
        %v1019 = vpop.f32.mrf.mxu0
        %v1020 = vadd.f32 %v441, %v1019
        %1021 = vmatmul.f32.gmra.mxu0 %v622
        %v1022 = vpop.f32.mrf.mxu0
        %v1023 = vadd.f32 %v441, %v1022
        %1024 = vmatmul.f32.gmra.mxu0 %v625
        %v1025 = vpop.f32.mrf.mxu0
        %v1026 = vadd.f32 %v441, %v1025
        %1027 = vmatmul.f32.gmra.mxu0 %v628
        %v1028 = vpop.f32.mrf.mxu0
        %v1029 = vadd.f32 %v441, %v1028
        %1030 = vmatmul.f32.gmra.mxu0 %v631
        %v1031 = vpop.f32.mrf.mxu0
        %v1032 = vadd.f32 %v441, %v1031
        %1033 = vmatmul.f32.gmra.mxu0 %v634
        %v1034 = vpop.f32.mrf.mxu0
        %v1035 = vadd.f32 %v441, %v1034
        %1036 = vmatmul.f32.gmra.mxu0 %v637
        %v1037 = vpop.f32.mrf.mxu0
        %v1038 = vadd.f32 %v441, %v1037
        %1039 = vmatmul.f32.gmra.mxu0 %v640
        %v1040 = vpop.f32.mrf.mxu0
        %v1041 = vadd.f32 %v441, %v1040
        %1042 = vmatmul.f32.gmra.mxu0 %v643
        %v1043 = vpop.f32.mrf.mxu0
        %v1044 = vadd.f32 %v441, %v1043
        %1045 = vmatmul.f32.gmra.mxu0 %v646
        %v1046 = vpop.f32.mrf.mxu0
        %v1047 = vadd.f32 %v441, %v1046
        %1048 = vmatmul.f32.gmra.mxu0 %v649
        %v1049 = vpop.f32.mrf.mxu0
        %v1050 = vadd.f32 %v441, %v1049
        %1051 = vmatmul.f32.gmra.mxu0 %v652
        %v1052 = vpop.f32.mrf.mxu0
        %v1053 = vadd.f32 %v441, %v1052
        %1054 = vmatmul.f32.gmra.mxu0 %v655
        %v1055 = vpop.f32.mrf.mxu0
        %v1056 = vadd.f32 %v441, %v1055
        %1057 = vmatmul.f32.gmra.mxu0 %v658
        %v1058 = vpop.f32.mrf.mxu0
        %v1059 = vadd.f32 %v441, %v1058
        %1060 = vmatmul.f32.gmra.mxu0 %v661
        %v1061 = vpop.f32.mrf.mxu0
        %v1062 = vadd.f32 %v441, %v1061
        %1063 = vmatmul.f32.gmra.mxu0 %v664
        %v1064 = vpop.f32.mrf.mxu0
        %v1065 = vadd.f32 %v441, %v1064
        %1066 = vmatmul.f32.gmra.mxu0 %v667
        %v1067 = vpop.f32.mrf.mxu0
        %v1068 = vadd.f32 %v441, %v1067
        %1069 = vmatmul.f32.gmra.mxu0 %v670
        %v1070 = vpop.f32.mrf.mxu0
        %v1071 = vadd.f32 %v441, %v1070
        %1072 = vmatmul.f32.gmra.mxu0 %v673
        %v1073 = vpop.f32.mrf.mxu0
        %v1074 = vadd.f32 %v441, %v1073
        %1075 = vmatmul.f32.gmra.mxu0 %v676
        %v1076 = vpop.f32.mrf.mxu0
        %v1077 = vadd.f32 %v441, %v1076
        %1078 = vmatmul.f32.gmra.mxu0 %v679
        %v1079 = vpop.f32.mrf.mxu0
        %v1080 = vadd.f32 %v441, %v1079
        %1081 = vmatmul.f32.gmra.mxu0 %v682
        %v1082 = vpop.f32.mrf.mxu0
        %v1083 = vadd.f32 %v441, %v1082
        %1084 = vmatmul.f32.gmra.mxu0 %v685
        %v1085 = vpop.f32.mrf.mxu0
        %v1086 = vadd.f32 %v441, %v1085
        %1087 = vmatmul.f32.gmra.mxu0 %v688
        %v1088 = vpop.f32.mrf.mxu0
        %v1089 = vadd.f32 %v441, %v1088
        %1090 = vmatmul.f32.gmra.mxu0 %v691
        %v1091 = vpop.f32.mrf.mxu0
        %v1092 = vadd.f32 %v441, %v1091
        %1093 = vmatmul.f32.gmra.mxu0 %v694
        %v1094 = vpop.f32.mrf.mxu0
        %v1095 = vadd.f32 %v441, %v1094
        %1096 = vmatmul.f32.gmra.mxu0 %v697
        %v1097 = vpop.f32.mrf.mxu0
        %v1098 = vadd.f32 %v441, %v1097
        %1099 = vmatmul.f32.gmra.mxu0 %v700
        %v1100 = vpop.f32.mrf.mxu0
        %v1101 = vadd.f32 %v441, %v1100
        %1102 = vmatmul.f32.gmra.mxu0 %v703
        %v1103 = vpop.f32.mrf.mxu0
        %v1104 = vadd.f32 %v441, %v1103
        %1105 = vmatmul.f32.gmra.mxu0 %v706
        %v1106 = vpop.f32.mrf.mxu0
        %v1107 = vadd.f32 %v441, %v1106
        %1108 = vmatmul.f32.gmra.mxu0 %v709
        %v1109 = vpop.f32.mrf.mxu0
        %v1110 = vadd.f32 %v441, %v1109
        %1111 = vmatmul.f32.gmra.mxu0 %v712
        %v1112 = vpop.f32.mrf.mxu0
        %v1113 = vadd.f32 %v441, %v1112
        %1114 = vmatmul.f32.gmra.mxu0 %v715
        %v1115 = vpop.f32.mrf.mxu0
        %v1116 = vadd.f32 %v441, %v1115
        %1117 = vmatmul.f32.gmra.mxu0 %v718
        %v1118 = vpop.f32.mrf.mxu0
        %v1119 = vadd.f32 %v441, %v1118
        %1120 = vmatmul.f32.gmra.mxu0 %v721
        %v1121 = vpop.f32.mrf.mxu0
        %v1122 = vadd.f32 %v441, %v1121
        %1123 = vmatmul.f32.gmra.mxu0 %v724
        %v1124 = vpop.f32.mrf.mxu0
        %v1125 = vadd.f32 %v441, %v1124
        %1126 = vmatmul.f32.gmra.mxu0 %v727
        %v1127 = vpop.f32.mrf.mxu0
        %v1128 = vadd.f32 %v441, %v1127
        %1129 = vmatmul.f32.gmra.mxu0 %v730
        %v1130 = vpop.f32.mrf.mxu0
        %v1131 = vadd.f32 %v441, %v1130
        %1132 = vmatmul.f32.gmra.mxu0 %v733
        %v1133 = vpop.f32.mrf.mxu0
        %v1134 = vadd.f32 %v441, %v1133
        %1135 = vmatmul.f32.gmra.mxu0 %v736
        %v1136 = vpop.f32.mrf.mxu0
        %v1137 = vadd.f32 %v441, %v1136
        %1138 = vmatmul.f32.gmra.mxu0 %v739
        %v1139 = vpop.f32.mrf.mxu0
        %v1140 = vadd.f32 %v441, %v1139
        %1141 = vmatmul.f32.gmra.mxu0 %v742
        %v1142 = vpop.f32.mrf.mxu0
        %v1143 = vadd.f32 %v441, %v1142
        %1144 = vmatmul.f32.gmra.mxu0 %v745
        %v1145 = vpop.f32.mrf.mxu0
        %v1146 = vadd.f32 %v441, %v1145
        %1147 = vmatmul.f32.gmra.mxu0 %v748
        %v1148 = vpop.f32.mrf.mxu0
        %v1149 = vadd.f32 %v441, %v1148
        %1150 = vmatmul.f32.gmra.mxu0 %v751
        %v1151 = vpop.f32.mrf.mxu0
        %v1152 = vadd.f32 %v441, %v1151
        %1153 = vmatmul.f32.gmra.mxu0 %v754
        %v1154 = vpop.f32.mrf.mxu0
        %v1155 = vadd.f32 %v441, %v1154
        %1156 = vmatmul.f32.gmra.mxu0 %v757
        %v1157 = vpop.f32.mrf.mxu0
        %v1158 = vadd.f32 %v441, %v1157
        %1159 = vmatmul.f32.gmra.mxu0 %v760
        %v1160 = vpop.f32.mrf.mxu0
        %v1161 = vadd.f32 %v441, %v1160
        %1162 = vmatmul.f32.gmra.mxu0 %v763
        %v1163 = vpop.f32.mrf.mxu0
        %v1164 = vadd.f32 %v441, %v1163
        %1165 = vmatmul.f32.gmra.mxu0 %v766
        %v1166 = vpop.f32.mrf.mxu0
        %v1167 = vadd.f32 %v441, %v1166
        %1168 = vmatmul.f32.gmra.mxu0 %v769
        %v1169 = vpop.f32.mrf.mxu0
        %v1170 = vadd.f32 %v441, %v1169
        %1171 = vmatmul.f32.gmra.mxu0 %v772
        %v1172 = vpop.f32.mrf.mxu0
        %v1173 = vadd.f32 %v441, %v1172
        %1174 = vmatmul.f32.gmra.mxu0 %v775
        %v1175 = vpop.f32.mrf.mxu0
        %v1176 = vadd.f32 %v441, %v1175
        %1177 = vmatmul.f32.gmra.mxu0 %v778
        %v1178 = vpop.f32.mrf.mxu0
        %v1179 = vadd.f32 %v441, %v1178
        %1180 = vmatmul.f32.gmra.mxu0 %v781
        %v1181 = vpop.f32.mrf.mxu0
        %v1182 = vadd.f32 %v441, %v1181
        %1183 = vmatmul.f32.gmra.mxu0 %v784
        %v1184 = vpop.f32.mrf.mxu0
        %v1185 = vadd.f32 %v441, %v1184
        %1186 = vmatmul.f32.gmra.mxu0 %v787
        %v1187 = vpop.f32.mrf.mxu0
        %v1188 = vadd.f32 %v441, %v1187
        %1189 = vmatmul.f32.gmra.mxu0 %v790
        %v1190 = vpop.f32.mrf.mxu0
        %v1191 = vadd.f32 %v441, %v1190
        %1192 = vmatmul.f32.gmra.mxu0 %v793
        %v1193 = vpop.f32.mrf.mxu0
        %v1194 = vadd.f32 %v441, %v1193
        %1195 = vmatmul.f32.gmra.mxu0 %v796
        %v1196 = vpop.f32.mrf.mxu0
        %v1197 = vadd.f32 %v441, %v1196
        %1198 = vmatmul.f32.gmra.mxu0 %v799
        %v1199 = vpop.f32.mrf.mxu0
        %v1200 = vadd.f32 %v441, %v1199
        %1201 = vmatmul.f32.gmra.mxu0 %v802
        %v1202 = vpop.f32.mrf.mxu0
        %v1203 = vadd.f32 %v441, %v1202
        %1204 = vmatmul.f32.gmra.mxu0 %v805
        %v1205 = vpop.f32.mrf.mxu0
        %v1206 = vadd.f32 %v441, %v1205
        %1207 = vmatmul.f32.gmra.mxu0 %v808
        %v1208 = vpop.f32.mrf.mxu0
        %v1209 = vadd.f32 %v441, %v1208
        %1210 = vmatmul.f32.gmra.mxu0 %v811
        %v1211 = vpop.f32.mrf.mxu0
        %v1212 = vadd.f32 %v441, %v1211
        %1213 = vmatmul.f32.gmra.mxu0 %v814
        %v1214 = vpop.f32.mrf.mxu0
        %v1215 = vadd.f32 %v441, %v1214
        %1216 = vmatmul.f32.gmra.mxu0 %v817
        %v1217 = vpop.f32.mrf.mxu0
        %v1218 = vadd.f32 %v441, %v1217
        %1219 = vmatmul.f32.gmra.mxu0 %v820
        %v1220 = vpop.f32.mrf.mxu0
        %v1221 = vadd.f32 %v441, %v1220
        %1222 = vmatmul.f32.gmra.mxu0 %v823
        %v1223 = vpop.f32.mrf.mxu0
        %v1224 = vadd.f32 %v441, %v1223
        %1225 = vmatmul.f32.gmra.mxu0 %v826
        %v1226 = vpop.f32.mrf.mxu0
        %v1227 = vadd.f32 %v441, %v1226
        %1228 = vdwg.mxu0
        %vm1229 = vcmp.gt.f32.partialorder %v846, 0.0
        %vm1230 = vcmp.gt.f32.partialorder %v849, 0.0
        %vm1231 = vcmp.gt.f32.partialorder %v852, 0.0
        %vm1232 = vcmp.gt.f32.partialorder %v855, 0.0
        %vm1233 = vcmp.gt.f32.partialorder %v858, 0.0
        %vm1234 = vcmp.gt.f32.partialorder %v861, 0.0
        %vm1235 = vcmp.gt.f32.partialorder %v864, 0.0
        %vm1236 = vcmp.gt.f32.partialorder %v867, 0.0
        %vm1237 = vcmp.gt.f32.partialorder %v870, 0.0
        %vm1238 = vcmp.gt.f32.partialorder %v873, 0.0
        %vm1239 = vcmp.gt.f32.partialorder %v876, 0.0
        %vm1240 = vcmp.gt.f32.partialorder %v879, 0.0
        %vm1241 = vcmp.gt.f32.partialorder %v882, 0.0
        %vm1242 = vcmp.gt.f32.partialorder %v885, 0.0
        %vm1243 = vcmp.gt.f32.partialorder %v888, 0.0
        %vm1244 = vcmp.gt.f32.partialorder %v891, 0.0
        %vm1245 = vcmp.gt.f32.partialorder %v894, 0.0
        %vm1246 = vcmp.gt.f32.partialorder %v897, 0.0
        %vm1247 = vcmp.gt.f32.partialorder %v900, 0.0
        %vm1248 = vcmp.gt.f32.partialorder %v903, 0.0
        %vm1249 = vcmp.gt.f32.partialorder %v906, 0.0
        %vm1250 = vcmp.gt.f32.partialorder %v909, 0.0
        %vm1251 = vcmp.gt.f32.partialorder %v912, 0.0
        %vm1252 = vcmp.gt.f32.partialorder %v915, 0.0
        %vm1253 = vcmp.gt.f32.partialorder %v918, 0.0
        %vm1254 = vcmp.gt.f32.partialorder %v921, 0.0
        %vm1255 = vcmp.gt.f32.partialorder %v924, 0.0
        %vm1256 = vcmp.gt.f32.partialorder %v927, 0.0
        %vm1257 = vcmp.gt.f32.partialorder %v930, 0.0
        %vm1258 = vcmp.gt.f32.partialorder %v933, 0.0
        %vm1259 = vcmp.gt.f32.partialorder %v936, 0.0
        %vm1260 = vcmp.gt.f32.partialorder %v939, 0.0
        %vm1261 = vcmp.gt.f32.partialorder %v942, 0.0
        %vm1262 = vcmp.gt.f32.partialorder %v945, 0.0
        %vm1263 = vcmp.gt.f32.partialorder %v948, 0.0
        %vm1264 = vcmp.gt.f32.partialorder %v951, 0.0
        %vm1265 = vcmp.gt.f32.partialorder %v954, 0.0
        %vm1266 = vcmp.gt.f32.partialorder %v957, 0.0
        %vm1267 = vcmp.gt.f32.partialorder %v960, 0.0
        %vm1268 = vcmp.gt.f32.partialorder %v963, 0.0
        %vm1269 = vcmp.gt.f32.partialorder %v966, 0.0
        %vm1270 = vcmp.gt.f32.partialorder %v969, 0.0
        %vm1271 = vcmp.gt.f32.partialorder %v972, 0.0
        %vm1272 = vcmp.gt.f32.partialorder %v975, 0.0
        %vm1273 = vcmp.gt.f32.partialorder %v978, 0.0
        %vm1274 = vcmp.gt.f32.partialorder %v981, 0.0
        %vm1275 = vcmp.gt.f32.partialorder %v984, 0.0
        %vm1276 = vcmp.gt.f32.partialorder %v987, 0.0
        %vm1277 = vcmp.gt.f32.partialorder %v990, 0.0
        %vm1278 = vcmp.gt.f32.partialorder %v993, 0.0
        %vm1279 = vcmp.gt.f32.partialorder %v996, 0.0
        %vm1280 = vcmp.gt.f32.partialorder %v999, 0.0
        %vm1281 = vcmp.gt.f32.partialorder %v1002, 0.0
        %vm1282 = vcmp.gt.f32.partialorder %v1005, 0.0
        %vm1283 = vcmp.gt.f32.partialorder %v1008, 0.0
        %vm1284 = vcmp.gt.f32.partialorder %v1011, 0.0
        %vm1285 = vcmp.gt.f32.partialorder %v1014, 0.0
        %vm1286 = vcmp.gt.f32.partialorder %v1017, 0.0
        %vm1287 = vcmp.gt.f32.partialorder %v1020, 0.0
        %vm1288 = vcmp.gt.f32.partialorder %v1023, 0.0
        %vm1289 = vcmp.gt.f32.partialorder %v1026, 0.0
        %vm1290 = vcmp.gt.f32.partialorder %v1029, 0.0
        %vm1291 = vcmp.gt.f32.partialorder %v1032, 0.0
        %vm1292 = vcmp.gt.f32.partialorder %v1035, 0.0
        %vm1293 = vcmp.gt.f32.partialorder %v1038, 0.0
        %vm1294 = vcmp.gt.f32.partialorder %v1041, 0.0
        %vm1295 = vcmp.gt.f32.partialorder %v1044, 0.0
        %vm1296 = vcmp.gt.f32.partialorder %v1047, 0.0
        %vm1297 = vcmp.gt.f32.partialorder %v1050, 0.0
        %vm1298 = vcmp.gt.f32.partialorder %v1053, 0.0
        %vm1299 = vcmp.gt.f32.partialorder %v1056, 0.0
        %vm1300 = vcmp.gt.f32.partialorder %v1059, 0.0
        %vm1301 = vcmp.gt.f32.partialorder %v1062, 0.0
        %vm1302 = vcmp.gt.f32.partialorder %v1065, 0.0
        %vm1303 = vcmp.gt.f32.partialorder %v1068, 0.0
        %vm1304 = vcmp.gt.f32.partialorder %v1071, 0.0
        %vm1305 = vcmp.gt.f32.partialorder %v1074, 0.0
        %vm1306 = vcmp.gt.f32.partialorder %v1077, 0.0
        %vm1307 = vcmp.gt.f32.partialorder %v1080, 0.0
        %vm1308 = vcmp.gt.f32.partialorder %v1083, 0.0
        %vm1309 = vcmp.gt.f32.partialorder %v1086, 0.0
        %vm1310 = vcmp.gt.f32.partialorder %v1089, 0.0
        %vm1311 = vcmp.gt.f32.partialorder %v1092, 0.0
        %vm1312 = vcmp.gt.f32.partialorder %v1095, 0.0
        %vm1313 = vcmp.gt.f32.partialorder %v1098, 0.0
        %vm1314 = vcmp.gt.f32.partialorder %v1101, 0.0
        %vm1315 = vcmp.gt.f32.partialorder %v1104, 0.0
        %vm1316 = vcmp.gt.f32.partialorder %v1107, 0.0
        %vm1317 = vcmp.gt.f32.partialorder %v1110, 0.0
        %vm1318 = vcmp.gt.f32.partialorder %v1113, 0.0
        %vm1319 = vcmp.gt.f32.partialorder %v1116, 0.0
        %vm1320 = vcmp.gt.f32.partialorder %v1119, 0.0
        %vm1321 = vcmp.gt.f32.partialorder %v1122, 0.0
        %vm1322 = vcmp.gt.f32.partialorder %v1125, 0.0
        %vm1323 = vcmp.gt.f32.partialorder %v1128, 0.0
        %vm1324 = vcmp.gt.f32.partialorder %v1131, 0.0
        %vm1325 = vcmp.gt.f32.partialorder %v1134, 0.0
        %vm1326 = vcmp.gt.f32.partialorder %v1137, 0.0
        %vm1327 = vcmp.gt.f32.partialorder %v1140, 0.0
        %vm1328 = vcmp.gt.f32.partialorder %v1143, 0.0
        %vm1329 = vcmp.gt.f32.partialorder %v1146, 0.0
        %vm1330 = vcmp.gt.f32.partialorder %v1149, 0.0
        %vm1331 = vcmp.gt.f32.partialorder %v1152, 0.0
        %vm1332 = vcmp.gt.f32.partialorder %v1155, 0.0
        %vm1333 = vcmp.gt.f32.partialorder %v1158, 0.0
        %vm1334 = vcmp.gt.f32.partialorder %v1161, 0.0
        %vm1335 = vcmp.gt.f32.partialorder %v1164, 0.0
        %vm1336 = vcmp.gt.f32.partialorder %v1167, 0.0
        %vm1337 = vcmp.gt.f32.partialorder %v1170, 0.0
        %vm1338 = vcmp.gt.f32.partialorder %v1173, 0.0
        %vm1339 = vcmp.gt.f32.partialorder %v1176, 0.0
        %vm1340 = vcmp.gt.f32.partialorder %v1179, 0.0
        %vm1341 = vcmp.gt.f32.partialorder %v1182, 0.0
        %vm1342 = vcmp.gt.f32.partialorder %v1185, 0.0
        %vm1343 = vcmp.gt.f32.partialorder %v1188, 0.0
        %vm1344 = vcmp.gt.f32.partialorder %v1191, 0.0
        %vm1345 = vcmp.gt.f32.partialorder %v1194, 0.0
        %vm1346 = vcmp.gt.f32.partialorder %v1197, 0.0
        %vm1347 = vcmp.gt.f32.partialorder %v1200, 0.0
        %vm1348 = vcmp.gt.f32.partialorder %v1203, 0.0
        %vm1349 = vcmp.gt.f32.partialorder %v1206, 0.0
        %vm1350 = vcmp.gt.f32.partialorder %v1209, 0.0
        %vm1351 = vcmp.gt.f32.partialorder %v1212, 0.0
        %vm1352 = vcmp.gt.f32.partialorder %v1215, 0.0
        %vm1353 = vcmp.gt.f32.partialorder %v1218, 0.0
        %vm1354 = vcmp.gt.f32.partialorder %v1221, 0.0
        %vm1355 = vcmp.gt.f32.partialorder %v1224, 0.0
        %vm1356 = vcmp.gt.f32.partialorder %v1227, 0.0
        %v1357 = vmul.f32 %v846, 0.2
        %v1358 = vmul.f32 %v849, 0.2
        %v1359 = vmul.f32 %v852, 0.2
        %v1360 = vmul.f32 %v855, 0.2
        %v1361 = vmul.f32 %v858, 0.2
        %v1362 = vmul.f32 %v861, 0.2
        %v1363 = vmul.f32 %v864, 0.2
        %v1364 = vmul.f32 %v867, 0.2
        %v1365 = vmul.f32 %v870, 0.2
        %v1366 = vmul.f32 %v873, 0.2
        %v1367 = vmul.f32 %v876, 0.2
        %v1368 = vmul.f32 %v879, 0.2
        %v1369 = vmul.f32 %v882, 0.2
        %v1370 = vmul.f32 %v885, 0.2
        %v1371 = vmul.f32 %v888, 0.2
        %v1372 = vmul.f32 %v891, 0.2
        %v1373 = vmul.f32 %v894, 0.2
        %v1374 = vmul.f32 %v897, 0.2
        %v1375 = vmul.f32 %v900, 0.2
        %v1376 = vmul.f32 %v903, 0.2
        %v1377 = vmul.f32 %v906, 0.2
        %v1378 = vmul.f32 %v909, 0.2
        %v1379 = vmul.f32 %v912, 0.2
        %v1380 = vmul.f32 %v915, 0.2
        %v1381 = vmul.f32 %v918, 0.2
        %v1382 = vmul.f32 %v921, 0.2
        %v1383 = vmul.f32 %v924, 0.2
        %v1384 = vmul.f32 %v927, 0.2
        %v1385 = vmul.f32 %v930, 0.2
        %v1386 = vmul.f32 %v933, 0.2
        %v1387 = vmul.f32 %v936, 0.2
        %v1388 = vmul.f32 %v939, 0.2
        %v1389 = vmul.f32 %v942, 0.2
        %v1390 = vmul.f32 %v945, 0.2
        %v1391 = vmul.f32 %v948, 0.2
        %v1392 = vmul.f32 %v951, 0.2
        %v1393 = vmul.f32 %v954, 0.2
        %v1394 = vmul.f32 %v957, 0.2
        %v1395 = vmul.f32 %v960, 0.2
        %v1396 = vmul.f32 %v963, 0.2
        %v1397 = vmul.f32 %v966, 0.2
        %v1398 = vmul.f32 %v969, 0.2
        %v1399 = vmul.f32 %v972, 0.2
        %v1400 = vmul.f32 %v975, 0.2
        %v1401 = vmul.f32 %v978, 0.2
        %v1402 = vmul.f32 %v981, 0.2
        %v1403 = vmul.f32 %v984, 0.2
        %v1404 = vmul.f32 %v987, 0.2
        %v1405 = vmul.f32 %v990, 0.2
        %v1406 = vmul.f32 %v993, 0.2
        %v1407 = vmul.f32 %v996, 0.2
        %v1408 = vmul.f32 %v999, 0.2
        %v1409 = vmul.f32 %v1002, 0.2
        %v1410 = vmul.f32 %v1005, 0.2
        %v1411 = vmul.f32 %v1008, 0.2
        %v1412 = vmul.f32 %v1011, 0.2
        %v1413 = vmul.f32 %v1014, 0.2
        %v1414 = vmul.f32 %v1017, 0.2
        %v1415 = vmul.f32 %v1020, 0.2
        %v1416 = vmul.f32 %v1023, 0.2
        %v1417 = vmul.f32 %v1026, 0.2
        %v1418 = vmul.f32 %v1029, 0.2
        %v1419 = vmul.f32 %v1032, 0.2
        %v1420 = vmul.f32 %v1035, 0.2
        %v1421 = vmul.f32 %v1038, 0.2
        %v1422 = vmul.f32 %v1041, 0.2
        %v1423 = vmul.f32 %v1044, 0.2
        %v1424 = vmul.f32 %v1047, 0.2
        %v1425 = vmul.f32 %v1050, 0.2
        %v1426 = vmul.f32 %v1053, 0.2
        %v1427 = vmul.f32 %v1056, 0.2
        %v1428 = vmul.f32 %v1059, 0.2
        %v1429 = vmul.f32 %v1062, 0.2
        %v1430 = vmul.f32 %v1065, 0.2
        %v1431 = vmul.f32 %v1068, 0.2
        %v1432 = vmul.f32 %v1071, 0.2
        %v1433 = vmul.f32 %v1074, 0.2
        %v1434 = vmul.f32 %v1077, 0.2
        %v1435 = vmul.f32 %v1080, 0.2
        %v1436 = vmul.f32 %v1083, 0.2
        %v1437 = vmul.f32 %v1086, 0.2
        %v1438 = vmul.f32 %v1089, 0.2
        %v1439 = vmul.f32 %v1092, 0.2
        %v1440 = vmul.f32 %v1095, 0.2
        %v1441 = vmul.f32 %v1098, 0.2
        %v1442 = vmul.f32 %v1101, 0.2
        %v1443 = vmul.f32 %v1104, 0.2
        %v1444 = vmul.f32 %v1107, 0.2
        %v1445 = vmul.f32 %v1110, 0.2
        %v1446 = vmul.f32 %v1113, 0.2
        %v1447 = vmul.f32 %v1116, 0.2
        %v1448 = vmul.f32 %v1119, 0.2
        %v1449 = vmul.f32 %v1122, 0.2
        %v1450 = vmul.f32 %v1125, 0.2
        %v1451 = vmul.f32 %v1128, 0.2
        %v1452 = vmul.f32 %v1131, 0.2
        %v1453 = vmul.f32 %v1134, 0.2
        %v1454 = vmul.f32 %v1137, 0.2
        %v1455 = vmul.f32 %v1140, 0.2
        %v1456 = vmul.f32 %v1143, 0.2
        %v1457 = vmul.f32 %v1146, 0.2
        %v1458 = vmul.f32 %v1149, 0.2
        %v1459 = vmul.f32 %v1152, 0.2
        %v1460 = vmul.f32 %v1155, 0.2
        %v1461 = vmul.f32 %v1158, 0.2
        %v1462 = vmul.f32 %v1161, 0.2
        %v1463 = vmul.f32 %v1164, 0.2
        %v1464 = vmul.f32 %v1167, 0.2
        %v1465 = vmul.f32 %v1170, 0.2
        %v1466 = vmul.f32 %v1173, 0.2
        %v1467 = vmul.f32 %v1176, 0.2
        %v1468 = vmul.f32 %v1179, 0.2
        %v1469 = vmul.f32 %v1182, 0.2
        %v1470 = vmul.f32 %v1185, 0.2
        %v1471 = vmul.f32 %v1188, 0.2
        %v1472 = vmul.f32 %v1191, 0.2
        %v1473 = vmul.f32 %v1194, 0.2
        %v1474 = vmul.f32 %v1197, 0.2
        %v1475 = vmul.f32 %v1200, 0.2
        %v1476 = vmul.f32 %v1203, 0.2
        %v1477 = vmul.f32 %v1206, 0.2
        %v1478 = vmul.f32 %v1209, 0.2
        %v1479 = vmul.f32 %v1212, 0.2
        %v1480 = vmul.f32 %v1215, 0.2
        %v1481 = vmul.f32 %v1218, 0.2
        %v1482 = vmul.f32 %v1221, 0.2
        %v1483 = vmul.f32 %v1224, 0.2
        %v1484 = vmul.f32 %v1227, 0.2
        %v1485 = vsel %vm1229, %v846, %v1357
        %v1486 = vsel %vm1230, %v849, %v1358
        %v1487 = vsel %vm1231, %v852, %v1359
        %v1488 = vsel %vm1232, %v855, %v1360
        %v1489 = vsel %vm1233, %v858, %v1361
        %v1490 = vsel %vm1234, %v861, %v1362
        %v1491 = vsel %vm1235, %v864, %v1363
        %v1492 = vsel %vm1236, %v867, %v1364
        %v1493 = vsel %vm1237, %v870, %v1365
        %v1494 = vsel %vm1238, %v873, %v1366
        %v1495 = vsel %vm1239, %v876, %v1367
        %v1496 = vsel %vm1240, %v879, %v1368
        %v1497 = vsel %vm1241, %v882, %v1369
        %v1498 = vsel %vm1242, %v885, %v1370
        %v1499 = vsel %vm1243, %v888, %v1371
        %v1500 = vsel %vm1244, %v891, %v1372
        %v1501 = vsel %vm1245, %v894, %v1373
        %v1502 = vsel %vm1246, %v897, %v1374
        %v1503 = vsel %vm1247, %v900, %v1375
        %v1504 = vsel %vm1248, %v903, %v1376
        %v1505 = vsel %vm1249, %v906, %v1377
        %v1506 = vsel %vm1250, %v909, %v1378
        %v1507 = vsel %vm1251, %v912, %v1379
        %v1508 = vsel %vm1252, %v915, %v1380
        %v1509 = vsel %vm1253, %v918, %v1381
        %v1510 = vsel %vm1254, %v921, %v1382
        %v1511 = vsel %vm1255, %v924, %v1383
        %v1512 = vsel %vm1256, %v927, %v1384
        %v1513 = vsel %vm1257, %v930, %v1385
        %v1514 = vsel %vm1258, %v933, %v1386
        %v1515 = vsel %vm1259, %v936, %v1387
        %v1516 = vsel %vm1260, %v939, %v1388
        %v1517 = vsel %vm1261, %v942, %v1389
        %v1518 = vsel %vm1262, %v945, %v1390
        %v1519 = vsel %vm1263, %v948, %v1391
        %v1520 = vsel %vm1264, %v951, %v1392
        %v1521 = vsel %vm1265, %v954, %v1393
        %v1522 = vsel %vm1266, %v957, %v1394
        %v1523 = vsel %vm1267, %v960, %v1395
        %v1524 = vsel %vm1268, %v963, %v1396
        %v1525 = vsel %vm1269, %v966, %v1397
        %v1526 = vsel %vm1270, %v969, %v1398
        %v1527 = vsel %vm1271, %v972, %v1399
        %v1528 = vsel %vm1272, %v975, %v1400
        %v1529 = vsel %vm1273, %v978, %v1401
        %v1530 = vsel %vm1274, %v981, %v1402
        %v1531 = vsel %vm1275, %v984, %v1403
        %v1532 = vsel %vm1276, %v987, %v1404
        %v1533 = vsel %vm1277, %v990, %v1405
        %v1534 = vsel %vm1278, %v993, %v1406
        %v1535 = vsel %vm1279, %v996, %v1407
        %v1536 = vsel %vm1280, %v999, %v1408
        %v1537 = vsel %vm1281, %v1002, %v1409
        %v1538 = vsel %vm1282, %v1005, %v1410
        %v1539 = vsel %vm1283, %v1008, %v1411
        %v1540 = vsel %vm1284, %v1011, %v1412
        %v1541 = vsel %vm1285, %v1014, %v1413
        %v1542 = vsel %vm1286, %v1017, %v1414
        %v1543 = vsel %vm1287, %v1020, %v1415
        %v1544 = vsel %vm1288, %v1023, %v1416
        %v1545 = vsel %vm1289, %v1026, %v1417
        %v1546 = vsel %vm1290, %v1029, %v1418
        %v1547 = vsel %vm1291, %v1032, %v1419
        %v1548 = vsel %vm1292, %v1035, %v1420
        %v1549 = vsel %vm1293, %v1038, %v1421
        %v1550 = vsel %vm1294, %v1041, %v1422
        %v1551 = vsel %vm1295, %v1044, %v1423
        %v1552 = vsel %vm1296, %v1047, %v1424
        %v1553 = vsel %vm1297, %v1050, %v1425
        %v1554 = vsel %vm1298, %v1053, %v1426
        %v1555 = vsel %vm1299, %v1056, %v1427
        %v1556 = vsel %vm1300, %v1059, %v1428
        %v1557 = vsel %vm1301, %v1062, %v1429
        %v1558 = vsel %vm1302, %v1065, %v1430
        %v1559 = vsel %vm1303, %v1068, %v1431
        %v1560 = vsel %vm1304, %v1071, %v1432
        %v1561 = vsel %vm1305, %v1074, %v1433
        %v1562 = vsel %vm1306, %v1077, %v1434
        %v1563 = vsel %vm1307, %v1080, %v1435
        %v1564 = vsel %vm1308, %v1083, %v1436
        %v1565 = vsel %vm1309, %v1086, %v1437
        %v1566 = vsel %vm1310, %v1089, %v1438
        %v1567 = vsel %vm1311, %v1092, %v1439
        %v1568 = vsel %vm1312, %v1095, %v1440
        %v1569 = vsel %vm1313, %v1098, %v1441
        %v1570 = vsel %vm1314, %v1101, %v1442
        %v1571 = vsel %vm1315, %v1104, %v1443
        %v1572 = vsel %vm1316, %v1107, %v1444
        %v1573 = vsel %vm1317, %v1110, %v1445
        %v1574 = vsel %vm1318, %v1113, %v1446
        %v1575 = vsel %vm1319, %v1116, %v1447
        %v1576 = vsel %vm1320, %v1119, %v1448
        %v1577 = vsel %vm1321, %v1122, %v1449
        %v1578 = vsel %vm1322, %v1125, %v1450
        %v1579 = vsel %vm1323, %v1128, %v1451
        %v1580 = vsel %vm1324, %v1131, %v1452
        %v1581 = vsel %vm1325, %v1134, %v1453
        %v1582 = vsel %vm1326, %v1137, %v1454
        %v1583 = vsel %vm1327, %v1140, %v1455
        %v1584 = vsel %vm1328, %v1143, %v1456
        %v1585 = vsel %vm1329, %v1146, %v1457
        %v1586 = vsel %vm1330, %v1149, %v1458
        %v1587 = vsel %vm1331, %v1152, %v1459
        %v1588 = vsel %vm1332, %v1155, %v1460
        %v1589 = vsel %vm1333, %v1158, %v1461
        %v1590 = vsel %vm1334, %v1161, %v1462
        %v1591 = vsel %vm1335, %v1164, %v1463
        %v1592 = vsel %vm1336, %v1167, %v1464
        %v1593 = vsel %vm1337, %v1170, %v1465
        %v1594 = vsel %vm1338, %v1173, %v1466
        %v1595 = vsel %vm1339, %v1176, %v1467
        %v1596 = vsel %vm1340, %v1179, %v1468
        %v1597 = vsel %vm1341, %v1182, %v1469
        %v1598 = vsel %vm1342, %v1185, %v1470
        %v1599 = vsel %vm1343, %v1188, %v1471
        %v1600 = vsel %vm1344, %v1191, %v1472
        %v1601 = vsel %vm1345, %v1194, %v1473
        %v1602 = vsel %vm1346, %v1197, %v1474
        %v1603 = vsel %vm1347, %v1200, %v1475
        %v1604 = vsel %vm1348, %v1203, %v1476
        %v1605 = vsel %vm1349, %v1206, %v1477
        %v1606 = vsel %vm1350, %v1209, %v1478
        %v1607 = vsel %vm1351, %v1212, %v1479
        %v1608 = vsel %vm1352, %v1215, %v1480
        %v1609 = vsel %vm1353, %v1218, %v1481
        %v1610 = vsel %vm1354, %v1221, %v1482
        %v1611 = vsel %vm1355, %v1224, %v1483
        %v1612 = vsel %vm1356, %v1227, %v1484
        %v1613 = vld [vmem:[%s1] sm:$0xff]
        %v1614 = vld [vmem:[%s1 + $0x8] sm:$0xff]
        %v1615 = vld [vmem:[%s1 + $0x10] sm:$0xff]
        %v1616 = vld [vmem:[%s1 + $0x18] sm:$0xff]
        %v1617 = vld [vmem:[%s1 + $0x20] sm:$0xff]
        %v1618 = vld [vmem:[%s1 + $0x28] sm:$0xff]
        %v1619 = vld [vmem:[%s1 + $0x30] sm:$0xff]
        %v1620 = vld [vmem:[%s1 + $0x38] sm:$0xff]
        %v1621 = vld [vmem:[%s1 + $0x40] sm:$0xff]
        %v1622 = vld [vmem:[%s1 + $0x48] sm:$0xff]
        %v1623 = vld [vmem:[%s1 + $0x50] sm:$0xff]
        %v1624 = vld [vmem:[%s1 + $0x58] sm:$0xff]
        %v1625 = vld [vmem:[%s1 + $0x60] sm:$0xff]
        %v1626 = vld [vmem:[%s1 + $0x68] sm:$0xff]
        %v1627 = vld [vmem:[%s1 + $0x70] sm:$0xff]
        %v1628 = vld [vmem:[%s1 + $0x78] sm:$0xff]
        %v1629 = vld [vmem:[%s1 + $0x80] sm:$0xff]
        %v1630 = vld [vmem:[%s1 + $0x88] sm:$0xff]
        %v1631 = vld [vmem:[%s1 + $0x90] sm:$0xff]
        %v1632 = vld [vmem:[%s1 + $0x98] sm:$0xff]
        %v1633 = vld [vmem:[%s1 + $0xa0] sm:$0xff]
        %v1634 = vld [vmem:[%s1 + $0xa8] sm:$0xff]
        %v1635 = vld [vmem:[%s1 + $0xb0] sm:$0xff]
        %v1636 = vld [vmem:[%s1 + $0xb8] sm:$0xff]
        %v1637 = vld [vmem:[%s1 + $0xc0] sm:$0xff]
        %v1638 = vld [vmem:[%s1 + $0xc8] sm:$0xff]
        %v1639 = vld [vmem:[%s1 + $0xd0] sm:$0xff]
        %v1640 = vld [vmem:[%s1 + $0xd8] sm:$0xff]
        %v1641 = vld [vmem:[%s1 + $0xe0] sm:$0xff]
        %v1642 = vld [vmem:[%s1 + $0xe8] sm:$0xff]
        %v1643 = vld [vmem:[%s1 + $0xf0] sm:$0xff]
        %v1644 = vld [vmem:[%s1 + $0xf8] sm:$0xff]
        %v1645 = vld [vmem:[%s1 + $0x100] sm:$0xff]
        %v1646 = vld [vmem:[%s1 + $0x108] sm:$0xff]
        %v1647 = vld [vmem:[%s1 + $0x110] sm:$0xff]
        %v1648 = vld [vmem:[%s1 + $0x118] sm:$0xff]
        %v1649 = vld [vmem:[%s1 + $0x120] sm:$0xff]
        %v1650 = vld [vmem:[%s1 + $0x128] sm:$0xff]
        %v1651 = vld [vmem:[%s1 + $0x130] sm:$0xff]
        %v1652 = vld [vmem:[%s1 + $0x138] sm:$0xff]
        %v1653 = vld [vmem:[%s1 + $0x140] sm:$0xff]
        %v1654 = vld [vmem:[%s1 + $0x148] sm:$0xff]
        %v1655 = vld [vmem:[%s1 + $0x150] sm:$0xff]
        %v1656 = vld [vmem:[%s1 + $0x158] sm:$0xff]
        %v1657 = vld [vmem:[%s1 + $0x160] sm:$0xff]
        %v1658 = vld [vmem:[%s1 + $0x168] sm:$0xff]
        %v1659 = vld [vmem:[%s1 + $0x170] sm:$0xff]
        %v1660 = vld [vmem:[%s1 + $0x178] sm:$0xff]
        %v1661 = vld [vmem:[%s1 + $0x180] sm:$0xff]
        %v1662 = vld [vmem:[%s1 + $0x188] sm:$0xff]
        %v1663 = vld [vmem:[%s1 + $0x190] sm:$0xff]
        %v1664 = vld [vmem:[%s1 + $0x198] sm:$0xff]
        %v1665 = vld [vmem:[%s1 + $0x1a0] sm:$0xff]
        %v1666 = vld [vmem:[%s1 + $0x1a8] sm:$0xff]
        %v1667 = vld [vmem:[%s1 + $0x1b0] sm:$0xff]
        %v1668 = vld [vmem:[%s1 + $0x1b8] sm:$0xff]
        %v1669 = vld [vmem:[%s1 + $0x1c0] sm:$0xff]
        %v1670 = vld [vmem:[%s1 + $0x1c8] sm:$0xff]
        %v1671 = vld [vmem:[%s1 + $0x1d0] sm:$0xff]
        %v1672 = vld [vmem:[%s1 + $0x1d8] sm:$0xff]
        %v1673 = vld [vmem:[%s1 + $0x1e0] sm:$0xff]
        %v1674 = vld [vmem:[%s1 + $0x1e8] sm:$0xff]
        %v1675 = vld [vmem:[%s1 + $0x1f0] sm:$0xff]
        %v1676 = vld [vmem:[%s1 + $0x1f8] sm:$0xff]
        %v1677 = vld [vmem:[%s1 + $0x200] sm:$0xff]
        %v1678 = vld [vmem:[%s1 + $0x208] sm:$0xff]
        %v1679 = vld [vmem:[%s1 + $0x210] sm:$0xff]
        %v1680 = vld [vmem:[%s1 + $0x218] sm:$0xff]
        %v1681 = vld [vmem:[%s1 + $0x220] sm:$0xff]
        %v1682 = vld [vmem:[%s1 + $0x228] sm:$0xff]
        %v1683 = vld [vmem:[%s1 + $0x230] sm:$0xff]
        %v1684 = vld [vmem:[%s1 + $0x238] sm:$0xff]
        %v1685 = vld [vmem:[%s1 + $0x240] sm:$0xff]
        %v1686 = vld [vmem:[%s1 + $0x248] sm:$0xff]
        %v1687 = vld [vmem:[%s1 + $0x250] sm:$0xff]
        %v1688 = vld [vmem:[%s1 + $0x258] sm:$0xff]
        %v1689 = vld [vmem:[%s1 + $0x260] sm:$0xff]
        %v1690 = vld [vmem:[%s1 + $0x268] sm:$0xff]
        %v1691 = vld [vmem:[%s1 + $0x270] sm:$0xff]
        %v1692 = vld [vmem:[%s1 + $0x278] sm:$0xff]
        %v1693 = vld [vmem:[%s1 + $0x280] sm:$0xff]
        %v1694 = vld [vmem:[%s1 + $0x288] sm:$0xff]
        %v1695 = vld [vmem:[%s1 + $0x290] sm:$0xff]
        %v1696 = vld [vmem:[%s1 + $0x298] sm:$0xff]
        %v1697 = vld [vmem:[%s1 + $0x2a0] sm:$0xff]
        %v1698 = vld [vmem:[%s1 + $0x2a8] sm:$0xff]
        %v1699 = vld [vmem:[%s1 + $0x2b0] sm:$0xff]
        %v1700 = vld [vmem:[%s1 + $0x2b8] sm:$0xff]
        %v1701 = vld [vmem:[%s1 + $0x2c0] sm:$0xff]
        %v1702 = vld [vmem:[%s1 + $0x2c8] sm:$0xff]
        %v1703 = vld [vmem:[%s1 + $0x2d0] sm:$0xff]
        %v1704 = vld [vmem:[%s1 + $0x2d8] sm:$0xff]
        %v1705 = vld [vmem:[%s1 + $0x2e0] sm:$0xff]
        %v1706 = vld [vmem:[%s1 + $0x2e8] sm:$0xff]
        %v1707 = vld [vmem:[%s1 + $0x2f0] sm:$0xff]
        %v1708 = vld [vmem:[%s1 + $0x2f8] sm:$0xff]
        %v1709 = vld [vmem:[%s1 + $0x300] sm:$0xff]
        %v1710 = vld [vmem:[%s1 + $0x308] sm:$0xff]
        %v1711 = vld [vmem:[%s1 + $0x310] sm:$0xff]
        %v1712 = vld [vmem:[%s1 + $0x318] sm:$0xff]
        %v1713 = vld [vmem:[%s1 + $0x320] sm:$0xff]
        %v1714 = vld [vmem:[%s1 + $0x328] sm:$0xff]
        %v1715 = vld [vmem:[%s1 + $0x330] sm:$0xff]
        %v1716 = vld [vmem:[%s1 + $0x338] sm:$0xff]
        %v1717 = vld [vmem:[%s1 + $0x340] sm:$0xff]
        %v1718 = vld [vmem:[%s1 + $0x348] sm:$0xff]
        %v1719 = vld [vmem:[%s1 + $0x350] sm:$0xff]
        %v1720 = vld [vmem:[%s1 + $0x358] sm:$0xff]
        %v1721 = vld [vmem:[%s1 + $0x360] sm:$0xff]
        %v1722 = vld [vmem:[%s1 + $0x368] sm:$0xff]
        %v1723 = vld [vmem:[%s1 + $0x370] sm:$0xff]
        %v1724 = vld [vmem:[%s1 + $0x378] sm:$0xff]
        %v1725 = vld [vmem:[%s1 + $0x380] sm:$0xff]
        %v1726 = vld [vmem:[%s1 + $0x388] sm:$0xff]
        %v1727 = vld [vmem:[%s1 + $0x390] sm:$0xff]
        %v1728 = vld [vmem:[%s1 + $0x398] sm:$0xff]
        %v1729 = vld [vmem:[%s1 + $0x3a0] sm:$0xff]
        %v1730 = vld [vmem:[%s1 + $0x3a8] sm:$0xff]
        %v1731 = vld [vmem:[%s1 + $0x3b0] sm:$0xff]
        %v1732 = vld [vmem:[%s1 + $0x3b8] sm:$0xff]
        %v1733 = vld [vmem:[%s1 + $0x3c0] sm:$0xff]
        %v1734 = vld [vmem:[%s1 + $0x3c8] sm:$0xff]
        %v1735 = vld [vmem:[%s1 + $0x3d0] sm:$0xff]
        %v1736 = vld [vmem:[%s1 + $0x3d8] sm:$0xff]
        %v1737 = vld [vmem:[%s1 + $0x3e0] sm:$0xff]
        %v1738 = vld [vmem:[%s1 + $0x3e8] sm:$0xff]
        %v1739 = vld [vmem:[%s1 + $0x3f0] sm:$0xff]
        %v1740 = vld [vmem:[%s1 + $0x3f8] sm:$0xff]
        %1742 = vset.pattern.permute.xlu0 0
        %1743 = vperm.xlu0 %1742, %v1613
        %v1744 = vpop.permute.xlu0 %1743
        %1747 = vset.pattern.permute.xlu0 0
        %1748 = vperm.xlu0 %1747, %v1614
        %v1749 = vpop.permute.xlu0 %1748
        %1752 = vset.pattern.permute.xlu0 0
        %1753 = vperm.xlu0 %1752, %v1615
        %v1754 = vpop.permute.xlu0 %1753
        %1757 = vset.pattern.permute.xlu0 0
        %1758 = vperm.xlu0 %1757, %v1616
        %v1759 = vpop.permute.xlu0 %1758
        %1762 = vset.pattern.permute.xlu0 0
        %1763 = vperm.xlu0 %1762, %v1617
        %v1764 = vpop.permute.xlu0 %1763
        %1767 = vset.pattern.permute.xlu0 0
        %1768 = vperm.xlu0 %1767, %v1618
        %v1769 = vpop.permute.xlu0 %1768
        %1772 = vset.pattern.permute.xlu0 0
        %1773 = vperm.xlu0 %1772, %v1619
        %v1774 = vpop.permute.xlu0 %1773
        %1777 = vset.pattern.permute.xlu0 0
        %1778 = vperm.xlu0 %1777, %v1620
        %v1779 = vpop.permute.xlu0 %1778
        %1782 = vset.pattern.permute.xlu0 0
        %1783 = vperm.xlu0 %1782, %v1621
        %v1784 = vpop.permute.xlu0 %1783
        %1787 = vset.pattern.permute.xlu0 0
        %1788 = vperm.xlu0 %1787, %v1622
        %v1789 = vpop.permute.xlu0 %1788
        %1792 = vset.pattern.permute.xlu0 0
        %1793 = vperm.xlu0 %1792, %v1623
        %v1794 = vpop.permute.xlu0 %1793
        %1797 = vset.pattern.permute.xlu0 0
        %1798 = vperm.xlu0 %1797, %v1624
        %v1799 = vpop.permute.xlu0 %1798
        %1802 = vset.pattern.permute.xlu0 0
        %1803 = vperm.xlu0 %1802, %v1625
        %v1804 = vpop.permute.xlu0 %1803
        %1807 = vset.pattern.permute.xlu0 0
        %1808 = vperm.xlu0 %1807, %v1626
        %v1809 = vpop.permute.xlu0 %1808
        %1812 = vset.pattern.permute.xlu0 0
        %1813 = vperm.xlu0 %1812, %v1627
        %v1814 = vpop.permute.xlu0 %1813
        %1817 = vset.pattern.permute.xlu0 0
        %1818 = vperm.xlu0 %1817, %v1628
        %v1819 = vpop.permute.xlu0 %1818
        %1822 = vset.pattern.permute.xlu0 0
        %1823 = vperm.xlu0 %1822, %v1629
        %v1824 = vpop.permute.xlu0 %1823
        %1827 = vset.pattern.permute.xlu0 0
        %1828 = vperm.xlu0 %1827, %v1630
        %v1829 = vpop.permute.xlu0 %1828
        %1832 = vset.pattern.permute.xlu0 0
        %1833 = vperm.xlu0 %1832, %v1631
        %v1834 = vpop.permute.xlu0 %1833
        %1837 = vset.pattern.permute.xlu0 0
        %1838 = vperm.xlu0 %1837, %v1632
        %v1839 = vpop.permute.xlu0 %1838
        %1842 = vset.pattern.permute.xlu0 0
        %1843 = vperm.xlu0 %1842, %v1633
        %v1844 = vpop.permute.xlu0 %1843
        %1847 = vset.pattern.permute.xlu0 0
        %1848 = vperm.xlu0 %1847, %v1634
        %v1849 = vpop.permute.xlu0 %1848
        %1852 = vset.pattern.permute.xlu0 0
        %1853 = vperm.xlu0 %1852, %v1635
        %v1854 = vpop.permute.xlu0 %1853
        %1857 = vset.pattern.permute.xlu0 0
        %1858 = vperm.xlu0 %1857, %v1636
        %v1859 = vpop.permute.xlu0 %1858
        %1862 = vset.pattern.permute.xlu0 0
        %1863 = vperm.xlu0 %1862, %v1637
        %v1864 = vpop.permute.xlu0 %1863
        %1867 = vset.pattern.permute.xlu0 0
        %1868 = vperm.xlu0 %1867, %v1638
        %v1869 = vpop.permute.xlu0 %1868
        %1872 = vset.pattern.permute.xlu0 0
        %1873 = vperm.xlu0 %1872, %v1639
        %v1874 = vpop.permute.xlu0 %1873
        %1877 = vset.pattern.permute.xlu0 0
        %1878 = vperm.xlu0 %1877, %v1640
        %v1879 = vpop.permute.xlu0 %1878
        %1882 = vset.pattern.permute.xlu0 0
        %1883 = vperm.xlu0 %1882, %v1641
        %v1884 = vpop.permute.xlu0 %1883
        %1887 = vset.pattern.permute.xlu0 0
        %1888 = vperm.xlu0 %1887, %v1642
        %v1889 = vpop.permute.xlu0 %1888
        %1892 = vset.pattern.permute.xlu0 0
        %1893 = vperm.xlu0 %1892, %v1643
        %v1894 = vpop.permute.xlu0 %1893
        %1897 = vset.pattern.permute.xlu0 0
        %1898 = vperm.xlu0 %1897, %v1644
        %v1899 = vpop.permute.xlu0 %1898
        %1902 = vset.pattern.permute.xlu0 0
        %1903 = vperm.xlu0 %1902, %v1645
        %v1904 = vpop.permute.xlu0 %1903
        %1907 = vset.pattern.permute.xlu0 0
        %1908 = vperm.xlu0 %1907, %v1646
        %v1909 = vpop.permute.xlu0 %1908
        %1912 = vset.pattern.permute.xlu0 0
        %1913 = vperm.xlu0 %1912, %v1647
        %v1914 = vpop.permute.xlu0 %1913
        %1917 = vset.pattern.permute.xlu0 0
        %1918 = vperm.xlu0 %1917, %v1648
        %v1919 = vpop.permute.xlu0 %1918
        %1922 = vset.pattern.permute.xlu0 0
        %1923 = vperm.xlu0 %1922, %v1649
        %v1924 = vpop.permute.xlu0 %1923
        %1927 = vset.pattern.permute.xlu0 0
        %1928 = vperm.xlu0 %1927, %v1650
        %v1929 = vpop.permute.xlu0 %1928
        %1932 = vset.pattern.permute.xlu0 0
        %1933 = vperm.xlu0 %1932, %v1651
        %v1934 = vpop.permute.xlu0 %1933
        %1937 = vset.pattern.permute.xlu0 0
        %1938 = vperm.xlu0 %1937, %v1652
        %v1939 = vpop.permute.xlu0 %1938
        %1942 = vset.pattern.permute.xlu0 0
        %1943 = vperm.xlu0 %1942, %v1653
        %v1944 = vpop.permute.xlu0 %1943
        %1947 = vset.pattern.permute.xlu0 0
        %1948 = vperm.xlu0 %1947, %v1654
        %v1949 = vpop.permute.xlu0 %1948
        %1952 = vset.pattern.permute.xlu0 0
        %1953 = vperm.xlu0 %1952, %v1655
        %v1954 = vpop.permute.xlu0 %1953
        %1957 = vset.pattern.permute.xlu0 0
        %1958 = vperm.xlu0 %1957, %v1656
        %v1959 = vpop.permute.xlu0 %1958
        %1962 = vset.pattern.permute.xlu0 0
        %1963 = vperm.xlu0 %1962, %v1657
        %v1964 = vpop.permute.xlu0 %1963
        %1967 = vset.pattern.permute.xlu0 0
        %1968 = vperm.xlu0 %1967, %v1658
        %v1969 = vpop.permute.xlu0 %1968
        %1972 = vset.pattern.permute.xlu0 0
        %1973 = vperm.xlu0 %1972, %v1659
        %v1974 = vpop.permute.xlu0 %1973
        %1977 = vset.pattern.permute.xlu0 0
        %1978 = vperm.xlu0 %1977, %v1660
        %v1979 = vpop.permute.xlu0 %1978
        %1982 = vset.pattern.permute.xlu0 0
        %1983 = vperm.xlu0 %1982, %v1661
        %v1984 = vpop.permute.xlu0 %1983
        %1987 = vset.pattern.permute.xlu0 0
        %1988 = vperm.xlu0 %1987, %v1662
        %v1989 = vpop.permute.xlu0 %1988
        %1992 = vset.pattern.permute.xlu0 0
        %1993 = vperm.xlu0 %1992, %v1663
        %v1994 = vpop.permute.xlu0 %1993
        %1997 = vset.pattern.permute.xlu0 0
        %1998 = vperm.xlu0 %1997, %v1664
        %v1999 = vpop.permute.xlu0 %1998
        %2002 = vset.pattern.permute.xlu0 0
        %2003 = vperm.xlu0 %2002, %v1665
        %v2004 = vpop.permute.xlu0 %2003
        %2007 = vset.pattern.permute.xlu0 0
        %2008 = vperm.xlu0 %2007, %v1666
        %v2009 = vpop.permute.xlu0 %2008
        %2012 = vset.pattern.permute.xlu0 0
        %2013 = vperm.xlu0 %2012, %v1667
        %v2014 = vpop.permute.xlu0 %2013
        %2017 = vset.pattern.permute.xlu0 0
        %2018 = vperm.xlu0 %2017, %v1668
        %v2019 = vpop.permute.xlu0 %2018
        %2022 = vset.pattern.permute.xlu0 0
        %2023 = vperm.xlu0 %2022, %v1669
        %v2024 = vpop.permute.xlu0 %2023
        %2027 = vset.pattern.permute.xlu0 0
        %2028 = vperm.xlu0 %2027, %v1670
        %v2029 = vpop.permute.xlu0 %2028
        %2032 = vset.pattern.permute.xlu0 0
        %2033 = vperm.xlu0 %2032, %v1671
        %v2034 = vpop.permute.xlu0 %2033
        %2037 = vset.pattern.permute.xlu0 0
        %2038 = vperm.xlu0 %2037, %v1672
        %v2039 = vpop.permute.xlu0 %2038
        %2042 = vset.pattern.permute.xlu0 0
        %2043 = vperm.xlu0 %2042, %v1673
        %v2044 = vpop.permute.xlu0 %2043
        %2047 = vset.pattern.permute.xlu0 0
        %2048 = vperm.xlu0 %2047, %v1674
        %v2049 = vpop.permute.xlu0 %2048
        %2052 = vset.pattern.permute.xlu0 0
        %2053 = vperm.xlu0 %2052, %v1675
        %v2054 = vpop.permute.xlu0 %2053
        %2057 = vset.pattern.permute.xlu0 0
        %2058 = vperm.xlu0 %2057, %v1676
        %v2059 = vpop.permute.xlu0 %2058
        %2062 = vset.pattern.permute.xlu0 0
        %2063 = vperm.xlu0 %2062, %v1677
        %v2064 = vpop.permute.xlu0 %2063
        %2067 = vset.pattern.permute.xlu0 0
        %2068 = vperm.xlu0 %2067, %v1678
        %v2069 = vpop.permute.xlu0 %2068
        %2072 = vset.pattern.permute.xlu0 0
        %2073 = vperm.xlu0 %2072, %v1679
        %v2074 = vpop.permute.xlu0 %2073
        %2077 = vset.pattern.permute.xlu0 0
        %2078 = vperm.xlu0 %2077, %v1680
        %v2079 = vpop.permute.xlu0 %2078
        %2082 = vset.pattern.permute.xlu0 0
        %2083 = vperm.xlu0 %2082, %v1681
        %v2084 = vpop.permute.xlu0 %2083
        %2087 = vset.pattern.permute.xlu0 0
        %2088 = vperm.xlu0 %2087, %v1682
        %v2089 = vpop.permute.xlu0 %2088
        %2092 = vset.pattern.permute.xlu0 0
        %2093 = vperm.xlu0 %2092, %v1683
        %v2094 = vpop.permute.xlu0 %2093
        %2097 = vset.pattern.permute.xlu0 0
        %2098 = vperm.xlu0 %2097, %v1684
        %v2099 = vpop.permute.xlu0 %2098
        %2102 = vset.pattern.permute.xlu0 0
        %2103 = vperm.xlu0 %2102, %v1685
        %v2104 = vpop.permute.xlu0 %2103
        %2107 = vset.pattern.permute.xlu0 0
        %2108 = vperm.xlu0 %2107, %v1686
        %v2109 = vpop.permute.xlu0 %2108
        %2112 = vset.pattern.permute.xlu0 0
        %2113 = vperm.xlu0 %2112, %v1687
        %v2114 = vpop.permute.xlu0 %2113
        %2117 = vset.pattern.permute.xlu0 0
        %2118 = vperm.xlu0 %2117, %v1688
        %v2119 = vpop.permute.xlu0 %2118
        %2122 = vset.pattern.permute.xlu0 0
        %2123 = vperm.xlu0 %2122, %v1689
        %v2124 = vpop.permute.xlu0 %2123
        %2127 = vset.pattern.permute.xlu0 0
        %2128 = vperm.xlu0 %2127, %v1690
        %v2129 = vpop.permute.xlu0 %2128
        %2132 = vset.pattern.permute.xlu0 0
        %2133 = vperm.xlu0 %2132, %v1691
        %v2134 = vpop.permute.xlu0 %2133
        %2137 = vset.pattern.permute.xlu0 0
        %2138 = vperm.xlu0 %2137, %v1692
        %v2139 = vpop.permute.xlu0 %2138
        %2142 = vset.pattern.permute.xlu0 0
        %2143 = vperm.xlu0 %2142, %v1693
        %v2144 = vpop.permute.xlu0 %2143
        %2147 = vset.pattern.permute.xlu0 0
        %2148 = vperm.xlu0 %2147, %v1694
        %v2149 = vpop.permute.xlu0 %2148
        %2152 = vset.pattern.permute.xlu0 0
        %2153 = vperm.xlu0 %2152, %v1695
        %v2154 = vpop.permute.xlu0 %2153
        %2157 = vset.pattern.permute.xlu0 0
        %2158 = vperm.xlu0 %2157, %v1696
        %v2159 = vpop.permute.xlu0 %2158
        %2162 = vset.pattern.permute.xlu0 0
        %2163 = vperm.xlu0 %2162, %v1697
        %v2164 = vpop.permute.xlu0 %2163
        %2167 = vset.pattern.permute.xlu0 0
        %2168 = vperm.xlu0 %2167, %v1698
        %v2169 = vpop.permute.xlu0 %2168
        %2172 = vset.pattern.permute.xlu0 0
        %2173 = vperm.xlu0 %2172, %v1699
        %v2174 = vpop.permute.xlu0 %2173
        %2177 = vset.pattern.permute.xlu0 0
        %2178 = vperm.xlu0 %2177, %v1700
        %v2179 = vpop.permute.xlu0 %2178
        %2182 = vset.pattern.permute.xlu0 0
        %2183 = vperm.xlu0 %2182, %v1701
        %v2184 = vpop.permute.xlu0 %2183
        %2187 = vset.pattern.permute.xlu0 0
        %2188 = vperm.xlu0 %2187, %v1702
        %v2189 = vpop.permute.xlu0 %2188
        %2192 = vset.pattern.permute.xlu0 0
        %2193 = vperm.xlu0 %2192, %v1703
        %v2194 = vpop.permute.xlu0 %2193
        %2197 = vset.pattern.permute.xlu0 0
        %2198 = vperm.xlu0 %2197, %v1704
        %v2199 = vpop.permute.xlu0 %2198
        %2202 = vset.pattern.permute.xlu0 0
        %2203 = vperm.xlu0 %2202, %v1705
        %v2204 = vpop.permute.xlu0 %2203
        %2207 = vset.pattern.permute.xlu0 0
        %2208 = vperm.xlu0 %2207, %v1706
        %v2209 = vpop.permute.xlu0 %2208
        %2212 = vset.pattern.permute.xlu0 0
        %2213 = vperm.xlu0 %2212, %v1707
        %v2214 = vpop.permute.xlu0 %2213
        %2217 = vset.pattern.permute.xlu0 0
        %2218 = vperm.xlu0 %2217, %v1708
        %v2219 = vpop.permute.xlu0 %2218
        %2222 = vset.pattern.permute.xlu0 0
        %2223 = vperm.xlu0 %2222, %v1709
        %v2224 = vpop.permute.xlu0 %2223
        %2227 = vset.pattern.permute.xlu0 0
        %2228 = vperm.xlu0 %2227, %v1710
        %v2229 = vpop.permute.xlu0 %2228
        %2232 = vset.pattern.permute.xlu0 0
        %2233 = vperm.xlu0 %2232, %v1711
        %v2234 = vpop.permute.xlu0 %2233
        %2237 = vset.pattern.permute.xlu0 0
        %2238 = vperm.xlu0 %2237, %v1712
        %v2239 = vpop.permute.xlu0 %2238
        %2242 = vset.pattern.permute.xlu0 0
        %2243 = vperm.xlu0 %2242, %v1713
        %v2244 = vpop.permute.xlu0 %2243
        %2247 = vset.pattern.permute.xlu0 0
        %2248 = vperm.xlu0 %2247, %v1714
        %v2249 = vpop.permute.xlu0 %2248
        %2252 = vset.pattern.permute.xlu0 0
        %2253 = vperm.xlu0 %2252, %v1715
        %v2254 = vpop.permute.xlu0 %2253
        %2257 = vset.pattern.permute.xlu0 0
        %2258 = vperm.xlu0 %2257, %v1716
        %v2259 = vpop.permute.xlu0 %2258
        %2262 = vset.pattern.permute.xlu0 0
        %2263 = vperm.xlu0 %2262, %v1717
        %v2264 = vpop.permute.xlu0 %2263
        %2267 = vset.pattern.permute.xlu0 0
        %2268 = vperm.xlu0 %2267, %v1718
        %v2269 = vpop.permute.xlu0 %2268
        %2272 = vset.pattern.permute.xlu0 0
        %2273 = vperm.xlu0 %2272, %v1719
        %v2274 = vpop.permute.xlu0 %2273
        %2277 = vset.pattern.permute.xlu0 0
        %2278 = vperm.xlu0 %2277, %v1720
        %v2279 = vpop.permute.xlu0 %2278
        %2282 = vset.pattern.permute.xlu0 0
        %2283 = vperm.xlu0 %2282, %v1721
        %v2284 = vpop.permute.xlu0 %2283
        %2287 = vset.pattern.permute.xlu0 0
        %2288 = vperm.xlu0 %2287, %v1722
        %v2289 = vpop.permute.xlu0 %2288
        %2292 = vset.pattern.permute.xlu0 0
        %2293 = vperm.xlu0 %2292, %v1723
        %v2294 = vpop.permute.xlu0 %2293
        %2297 = vset.pattern.permute.xlu0 0
        %2298 = vperm.xlu0 %2297, %v1724
        %v2299 = vpop.permute.xlu0 %2298
        %2302 = vset.pattern.permute.xlu0 0
        %2303 = vperm.xlu0 %2302, %v1725
        %v2304 = vpop.permute.xlu0 %2303
        %2307 = vset.pattern.permute.xlu0 0
        %2308 = vperm.xlu0 %2307, %v1726
        %v2309 = vpop.permute.xlu0 %2308
        %2312 = vset.pattern.permute.xlu0 0
        %2313 = vperm.xlu0 %2312, %v1727
        %v2314 = vpop.permute.xlu0 %2313
        %2317 = vset.pattern.permute.xlu0 0
        %2318 = vperm.xlu0 %2317, %v1728
        %v2319 = vpop.permute.xlu0 %2318
        %2322 = vset.pattern.permute.xlu0 0
        %2323 = vperm.xlu0 %2322, %v1729
        %v2324 = vpop.permute.xlu0 %2323
        %2327 = vset.pattern.permute.xlu0 0
        %2328 = vperm.xlu0 %2327, %v1730
        %v2329 = vpop.permute.xlu0 %2328
        %2332 = vset.pattern.permute.xlu0 0
        %2333 = vperm.xlu0 %2332, %v1731
        %v2334 = vpop.permute.xlu0 %2333
        %2337 = vset.pattern.permute.xlu0 0
        %2338 = vperm.xlu0 %2337, %v1732
        %v2339 = vpop.permute.xlu0 %2338
        %2342 = vset.pattern.permute.xlu0 0
        %2343 = vperm.xlu0 %2342, %v1733
        %v2344 = vpop.permute.xlu0 %2343
        %2347 = vset.pattern.permute.xlu0 0
        %2348 = vperm.xlu0 %2347, %v1734
        %v2349 = vpop.permute.xlu0 %2348
        %2352 = vset.pattern.permute.xlu0 0
        %2353 = vperm.xlu0 %2352, %v1735
        %v2354 = vpop.permute.xlu0 %2353
        %2357 = vset.pattern.permute.xlu0 0
        %2358 = vperm.xlu0 %2357, %v1736
        %v2359 = vpop.permute.xlu0 %2358
        %2362 = vset.pattern.permute.xlu0 0
        %2363 = vperm.xlu0 %2362, %v1737
        %v2364 = vpop.permute.xlu0 %2363
        %2367 = vset.pattern.permute.xlu0 0
        %2368 = vperm.xlu0 %2367, %v1738
        %v2369 = vpop.permute.xlu0 %2368
        %2372 = vset.pattern.permute.xlu0 0
        %2373 = vperm.xlu0 %2372, %v1739
        %v2374 = vpop.permute.xlu0 %2373
        %2377 = vset.pattern.permute.xlu0 0
        %2378 = vperm.xlu0 %2377, %v1740
        %v2379 = vpop.permute.xlu0 %2378
        %v2381 = vmul.f32 %v1485, %v1744
        %v2382 = vmul.f32 %v1486, %v1749
        %v2383 = vmul.f32 %v1487, %v1754
        %v2384 = vmul.f32 %v1488, %v1759
        %v2385 = vmul.f32 %v1489, %v1764
        %v2386 = vmul.f32 %v1490, %v1769
        %v2387 = vmul.f32 %v1491, %v1774
        %v2388 = vmul.f32 %v1492, %v1779
        %v2389 = vmul.f32 %v1493, %v1784
        %v2390 = vmul.f32 %v1494, %v1789
        %v2391 = vmul.f32 %v1495, %v1794
        %v2392 = vmul.f32 %v1496, %v1799
        %v2393 = vmul.f32 %v1497, %v1804
        %v2394 = vmul.f32 %v1498, %v1809
        %v2395 = vmul.f32 %v1499, %v1814
        %v2396 = vmul.f32 %v1500, %v1819
        %v2397 = vmul.f32 %v1501, %v1824
        %v2398 = vmul.f32 %v1502, %v1829
        %v2399 = vmul.f32 %v1503, %v1834
        %v2400 = vmul.f32 %v1504, %v1839
        %v2401 = vmul.f32 %v1505, %v1844
        %v2402 = vmul.f32 %v1506, %v1849
        %v2403 = vmul.f32 %v1507, %v1854
        %v2404 = vmul.f32 %v1508, %v1859
        %v2405 = vmul.f32 %v1509, %v1864
        %v2406 = vmul.f32 %v1510, %v1869
        %v2407 = vmul.f32 %v1511, %v1874
        %v2408 = vmul.f32 %v1512, %v1879
        %v2409 = vmul.f32 %v1513, %v1884
        %v2410 = vmul.f32 %v1514, %v1889
        %v2411 = vmul.f32 %v1515, %v1894
        %v2412 = vmul.f32 %v1516, %v1899
        %v2413 = vmul.f32 %v1517, %v1904
        %v2414 = vmul.f32 %v1518, %v1909
        %v2415 = vmul.f32 %v1519, %v1914
        %v2416 = vmul.f32 %v1520, %v1919
        %v2417 = vmul.f32 %v1521, %v1924
        %v2418 = vmul.f32 %v1522, %v1929
        %v2419 = vmul.f32 %v1523, %v1934
        %v2420 = vmul.f32 %v1524, %v1939
        %v2421 = vmul.f32 %v1525, %v1944
        %v2422 = vmul.f32 %v1526, %v1949
        %v2423 = vmul.f32 %v1527, %v1954
        %v2424 = vmul.f32 %v1528, %v1959
        %v2425 = vmul.f32 %v1529, %v1964
        %v2426 = vmul.f32 %v1530, %v1969
        %v2427 = vmul.f32 %v1531, %v1974
        %v2428 = vmul.f32 %v1532, %v1979
        %v2429 = vmul.f32 %v1533, %v1984
        %v2430 = vmul.f32 %v1534, %v1989
        %v2431 = vmul.f32 %v1535, %v1994
        %v2432 = vmul.f32 %v1536, %v1999
        %v2433 = vmul.f32 %v1537, %v2004
        %v2434 = vmul.f32 %v1538, %v2009
        %v2435 = vmul.f32 %v1539, %v2014
        %v2436 = vmul.f32 %v1540, %v2019
        %v2437 = vmul.f32 %v1541, %v2024
        %v2438 = vmul.f32 %v1542, %v2029
        %v2439 = vmul.f32 %v1543, %v2034
        %v2440 = vmul.f32 %v1544, %v2039
        %v2441 = vmul.f32 %v1545, %v2044
        %v2442 = vmul.f32 %v1546, %v2049
        %v2443 = vmul.f32 %v1547, %v2054
        %v2444 = vmul.f32 %v1548, %v2059
        %v2445 = vmul.f32 %v1549, %v2064
        %v2446 = vmul.f32 %v1550, %v2069
        %v2447 = vmul.f32 %v1551, %v2074
        %v2448 = vmul.f32 %v1552, %v2079
        %v2449 = vmul.f32 %v1553, %v2084
        %v2450 = vmul.f32 %v1554, %v2089
        %v2451 = vmul.f32 %v1555, %v2094
        %v2452 = vmul.f32 %v1556, %v2099
        %v2453 = vmul.f32 %v1557, %v2104
        %v2454 = vmul.f32 %v1558, %v2109
        %v2455 = vmul.f32 %v1559, %v2114
        %v2456 = vmul.f32 %v1560, %v2119
        %v2457 = vmul.f32 %v1561, %v2124
        %v2458 = vmul.f32 %v1562, %v2129
        %v2459 = vmul.f32 %v1563, %v2134
        %v2460 = vmul.f32 %v1564, %v2139
        %v2461 = vmul.f32 %v1565, %v2144
        %v2462 = vmul.f32 %v1566, %v2149
        %v2463 = vmul.f32 %v1567, %v2154
        %v2464 = vmul.f32 %v1568, %v2159
        %v2465 = vmul.f32 %v1569, %v2164
        %v2466 = vmul.f32 %v1570, %v2169
        %v2467 = vmul.f32 %v1571, %v2174
        %v2468 = vmul.f32 %v1572, %v2179
        %v2469 = vmul.f32 %v1573, %v2184
        %v2470 = vmul.f32 %v1574, %v2189
        %v2471 = vmul.f32 %v1575, %v2194
        %v2472 = vmul.f32 %v1576, %v2199
        %v2473 = vmul.f32 %v1577, %v2204
        %v2474 = vmul.f32 %v1578, %v2209
        %v2475 = vmul.f32 %v1579, %v2214
        %v2476 = vmul.f32 %v1580, %v2219
        %v2477 = vmul.f32 %v1581, %v2224
        %v2478 = vmul.f32 %v1582, %v2229
        %v2479 = vmul.f32 %v1583, %v2234
        %v2480 = vmul.f32 %v1584, %v2239
        %v2481 = vmul.f32 %v1585, %v2244
        %v2482 = vmul.f32 %v1586, %v2249
        %v2483 = vmul.f32 %v1587, %v2254
        %v2484 = vmul.f32 %v1588, %v2259
        %v2485 = vmul.f32 %v1589, %v2264
        %v2486 = vmul.f32 %v1590, %v2269
        %v2487 = vmul.f32 %v1591, %v2274
        %v2488 = vmul.f32 %v1592, %v2279
        %v2489 = vmul.f32 %v1593, %v2284
        %v2490 = vmul.f32 %v1594, %v2289
        %v2491 = vmul.f32 %v1595, %v2294
        %v2492 = vmul.f32 %v1596, %v2299
        %v2493 = vmul.f32 %v1597, %v2304
        %v2494 = vmul.f32 %v1598, %v2309
        %v2495 = vmul.f32 %v1599, %v2314
        %v2496 = vmul.f32 %v1600, %v2319
        %v2497 = vmul.f32 %v1601, %v2324
        %v2498 = vmul.f32 %v1602, %v2329
        %v2499 = vmul.f32 %v1603, %v2334
        %v2500 = vmul.f32 %v1604, %v2339
        %v2501 = vmul.f32 %v1605, %v2344
        %v2502 = vmul.f32 %v1606, %v2349
        %v2503 = vmul.f32 %v1607, %v2354
        %v2504 = vmul.f32 %v1608, %v2359
        %v2505 = vmul.f32 %v1609, %v2364
        %v2506 = vmul.f32 %v1610, %v2369
        %v2507 = vmul.f32 %v1611, %v2374
        %v2508 = vmul.f32 %v1612, %v2379
        %v2509 = vld [vmem:[%s4] sm:$0xff]
        %v2510 = vld [vmem:[%s4 + $0x8] sm:$0xff]
        %v2511 = vld [vmem:[%s4 + $0x10] sm:$0xff]
        %v2512 = vld [vmem:[%s4 + $0x18] sm:$0xff]
        %v2513 = vld [vmem:[%s4 + $0x20] sm:$0xff]
        %v2514 = vld [vmem:[%s4 + $0x28] sm:$0xff]
        %v2515 = vld [vmem:[%s4 + $0x30] sm:$0xff]
        %v2516 = vld [vmem:[%s4 + $0x38] sm:$0xff]
        %v2517 = vld [vmem:[%s4 + $0x40] sm:$0xff]
        %v2518 = vld [vmem:[%s4 + $0x48] sm:$0xff]
        %v2519 = vld [vmem:[%s4 + $0x50] sm:$0xff]
        %v2520 = vld [vmem:[%s4 + $0x58] sm:$0xff]
        %v2521 = vld [vmem:[%s4 + $0x60] sm:$0xff]
        %v2522 = vld [vmem:[%s4 + $0x68] sm:$0xff]
        %v2523 = vld [vmem:[%s4 + $0x70] sm:$0xff]
        %v2524 = vld [vmem:[%s4 + $0x78] sm:$0xff]
        %s2525 = scalar_lea.vmem %s4, 128
        %v2526 = vld [vmem:[%s2525] sm:$0xff]
        %v2527 = vld [vmem:[%s2525 + $0x8] sm:$0xff]
        %v2528 = vld [vmem:[%s2525 + $0x10] sm:$0xff]
        %v2529 = vld [vmem:[%s2525 + $0x18] sm:$0xff]
        %v2530 = vld [vmem:[%s2525 + $0x20] sm:$0xff]
        %v2531 = vld [vmem:[%s2525 + $0x28] sm:$0xff]
        %v2532 = vld [vmem:[%s2525 + $0x30] sm:$0xff]
        %v2533 = vld [vmem:[%s2525 + $0x38] sm:$0xff]
        %v2534 = vld [vmem:[%s2525 + $0x40] sm:$0xff]
        %v2535 = vld [vmem:[%s2525 + $0x48] sm:$0xff]
        %v2536 = vld [vmem:[%s2525 + $0x50] sm:$0xff]
        %v2537 = vld [vmem:[%s2525 + $0x58] sm:$0xff]
        %v2538 = vld [vmem:[%s2525 + $0x60] sm:$0xff]
        %v2539 = vld [vmem:[%s2525 + $0x68] sm:$0xff]
        %v2540 = vld [vmem:[%s2525 + $0x70] sm:$0xff]
        %v2541 = vld [vmem:[%s2525 + $0x78] sm:$0xff]
        %2542 = vmatpush.msra.mxu0 %v2541
        %2543 = vmatpush.msra.mxu0 %v2540
        %2544 = vmatpush.msra.mxu0 %v2539
        %2545 = vmatpush.msra.mxu0 %v2538
        %2546 = vmatpush.msra.mxu0 %v2537
        %2547 = vmatpush.msra.mxu0 %v2536
        %2548 = vmatpush.msra.mxu0 %v2535
        %2549 = vmatpush.msra.mxu0 %v2534
        %2550 = vmatpush.msra.mxu0 %v2533
        %2551 = vmatpush.msra.mxu0 %v2532
        %2552 = vmatpush.msra.mxu0 %v2531
        %2553 = vmatpush.msra.mxu0 %v2530
        %2554 = vmatpush.msra.mxu0 %v2529
        %2555 = vmatpush.msra.mxu0 %v2528
        %2556 = vmatpush.msra.mxu0 %v2527
        %2557 = vmatpush.msra.mxu0 %v2526
        %2558 = vmatmul.f32.gmra.mxu0 %v2389
        %v2559 = vpop.f32.mrf.mxu0
        %v2560 = vadd.f32 0.0, %v2559
        %2561 = vmatmul.f32.gmra.mxu0 %v2390
        %v2562 = vpop.f32.mrf.mxu0
        %v2563 = vadd.f32 0.0, %v2562
        %2564 = vmatmul.f32.gmra.mxu0 %v2391
        %v2565 = vpop.f32.mrf.mxu0
        %v2566 = vadd.f32 0.0, %v2565
        %2567 = vmatmul.f32.gmra.mxu0 %v2392
        %v2568 = vpop.f32.mrf.mxu0
        %v2569 = vadd.f32 0.0, %v2568
        %2570 = vmatmul.f32.gmra.mxu0 %v2393
        %v2571 = vpop.f32.mrf.mxu0
        %v2572 = vadd.f32 0.0, %v2571
        %2573 = vmatmul.f32.gmra.mxu0 %v2394
        %v2574 = vpop.f32.mrf.mxu0
        %v2575 = vadd.f32 0.0, %v2574
        %2576 = vmatmul.f32.gmra.mxu0 %v2395
        %v2577 = vpop.f32.mrf.mxu0
        %v2578 = vadd.f32 0.0, %v2577
        %2579 = vmatmul.f32.gmra.mxu0 %v2396
        %v2580 = vpop.f32.mrf.mxu0
        %v2581 = vadd.f32 0.0, %v2580
        %2582 = vdwg.mxu0
        %2583 = vmatpush.msra.mxu0 %v2524
        %2584 = vmatpush.msra.mxu0 %v2523
        %2585 = vmatpush.msra.mxu0 %v2522
        %2586 = vmatpush.msra.mxu0 %v2521
        %2587 = vmatpush.msra.mxu0 %v2520
        %2588 = vmatpush.msra.mxu0 %v2519
        %2589 = vmatpush.msra.mxu0 %v2518
        %2590 = vmatpush.msra.mxu0 %v2517
        %2591 = vmatpush.msra.mxu0 %v2516
        %2592 = vmatpush.msra.mxu0 %v2515
        %2593 = vmatpush.msra.mxu0 %v2514
        %2594 = vmatpush.msra.mxu0 %v2513
        %2595 = vmatpush.msra.mxu0 %v2512
        %2596 = vmatpush.msra.mxu0 %v2511
        %2597 = vmatpush.msra.mxu0 %v2510
        %2598 = vmatpush.msra.mxu0 %v2509
        %2599 = vmatmul.f32.gmra.mxu0 %v2381
        %v2600 = vpop.f32.mrf.mxu0
        %v2601 = vadd.f32 %v2560, %v2600
        %2602 = vmatmul.f32.gmra.mxu0 %v2382
        %v2603 = vpop.f32.mrf.mxu0
        %v2604 = vadd.f32 %v2563, %v2603
        %2605 = vmatmul.f32.gmra.mxu0 %v2383
        %v2606 = vpop.f32.mrf.mxu0
        %v2607 = vadd.f32 %v2566, %v2606
        %2608 = vmatmul.f32.gmra.mxu0 %v2384
        %v2609 = vpop.f32.mrf.mxu0
        %v2610 = vadd.f32 %v2569, %v2609
        %2611 = vmatmul.f32.gmra.mxu0 %v2385
        %v2612 = vpop.f32.mrf.mxu0
        %v2613 = vadd.f32 %v2572, %v2612
        %2614 = vmatmul.f32.gmra.mxu0 %v2386
        %v2615 = vpop.f32.mrf.mxu0
        %v2616 = vadd.f32 %v2575, %v2615
        %2617 = vmatmul.f32.gmra.mxu0 %v2387
        %v2618 = vpop.f32.mrf.mxu0
        %v2619 = vadd.f32 %v2578, %v2618
        %2620 = vmatmul.f32.gmra.mxu0 %v2388
        %v2621 = vpop.f32.mrf.mxu0
        %v2622 = vadd.f32 %v2581, %v2621
        %2623 = vdwg.mxu0
        %s2624 = scalar_lea.vmem %s4, 256
        %v2625 = vld [vmem:[%s2624] sm:$0xff]
        %v2626 = vld [vmem:[%s2624 + $0x8] sm:$0xff]
        %v2627 = vld [vmem:[%s2624 + $0x10] sm:$0xff]
        %v2628 = vld [vmem:[%s2624 + $0x18] sm:$0xff]
        %v2629 = vld [vmem:[%s2624 + $0x20] sm:$0xff]
        %v2630 = vld [vmem:[%s2624 + $0x28] sm:$0xff]
        %v2631 = vld [vmem:[%s2624 + $0x30] sm:$0xff]
        %v2632 = vld [vmem:[%s2624 + $0x38] sm:$0xff]
        %v2633 = vld [vmem:[%s2624 + $0x40] sm:$0xff]
        %v2634 = vld [vmem:[%s2624 + $0x48] sm:$0xff]
        %v2635 = vld [vmem:[%s2624 + $0x50] sm:$0xff]
        %v2636 = vld [vmem:[%s2624 + $0x58] sm:$0xff]
        %v2637 = vld [vmem:[%s2624 + $0x60] sm:$0xff]
        %v2638 = vld [vmem:[%s2624 + $0x68] sm:$0xff]
        %v2639 = vld [vmem:[%s2624 + $0x70] sm:$0xff]
        %v2640 = vld [vmem:[%s2624 + $0x78] sm:$0xff]
        %2641 = vmatpush.msra.mxu0 %v2640
        %2642 = vmatpush.msra.mxu0 %v2639
        %2643 = vmatpush.msra.mxu0 %v2638
        %2644 = vmatpush.msra.mxu0 %v2637
        %2645 = vmatpush.msra.mxu0 %v2636
        %2646 = vmatpush.msra.mxu0 %v2635
        %2647 = vmatpush.msra.mxu0 %v2634
        %2648 = vmatpush.msra.mxu0 %v2633
        %2649 = vmatpush.msra.mxu0 %v2632
        %2650 = vmatpush.msra.mxu0 %v2631
        %2651 = vmatpush.msra.mxu0 %v2630
        %2652 = vmatpush.msra.mxu0 %v2629
        %2653 = vmatpush.msra.mxu0 %v2628
        %2654 = vmatpush.msra.mxu0 %v2627
        %2655 = vmatpush.msra.mxu0 %v2626
        %2656 = vmatpush.msra.mxu0 %v2625
        %2657 = vmatmul.f32.gmra.mxu0 %v2397
        %v2658 = vpop.f32.mrf.mxu0
        %v2659 = vadd.f32 0.0, %v2658
        %2660 = vmatmul.f32.gmra.mxu0 %v2398
        %v2661 = vpop.f32.mrf.mxu0
        %v2662 = vadd.f32 0.0, %v2661
        %2663 = vmatmul.f32.gmra.mxu0 %v2399
        %v2664 = vpop.f32.mrf.mxu0
        %v2665 = vadd.f32 0.0, %v2664
        %2666 = vmatmul.f32.gmra.mxu0 %v2400
        %v2667 = vpop.f32.mrf.mxu0
        %v2668 = vadd.f32 0.0, %v2667
        %2669 = vmatmul.f32.gmra.mxu0 %v2401
        %v2670 = vpop.f32.mrf.mxu0
        %v2671 = vadd.f32 0.0, %v2670
        %2672 = vmatmul.f32.gmra.mxu0 %v2402
        %v2673 = vpop.f32.mrf.mxu0
        %v2674 = vadd.f32 0.0, %v2673
        %2675 = vmatmul.f32.gmra.mxu0 %v2403
        %v2676 = vpop.f32.mrf.mxu0
        %v2677 = vadd.f32 0.0, %v2676
        %2678 = vmatmul.f32.gmra.mxu0 %v2404
        %v2679 = vpop.f32.mrf.mxu0
        %v2680 = vadd.f32 0.0, %v2679
        %2681 = vdwg.mxu0
        %v2682 = vadd.f32 %v2601, %v2659
        %v2683 = vadd.f32 %v2604, %v2662
        %v2684 = vadd.f32 %v2607, %v2665
        %v2685 = vadd.f32 %v2610, %v2668
        %v2686 = vadd.f32 %v2613, %v2671
        %v2687 = vadd.f32 %v2616, %v2674
        %v2688 = vadd.f32 %v2619, %v2677
        %v2689 = vadd.f32 %v2622, %v2680
        %s2690 = scalar_lea.vmem %s4, 384
        %v2691 = vld [vmem:[%s2690] sm:$0xff]
        %v2692 = vld [vmem:[%s2690 + $0x8] sm:$0xff]
        %v2693 = vld [vmem:[%s2690 + $0x10] sm:$0xff]
        %v2694 = vld [vmem:[%s2690 + $0x18] sm:$0xff]
        %v2695 = vld [vmem:[%s2690 + $0x20] sm:$0xff]
        %v2696 = vld [vmem:[%s2690 + $0x28] sm:$0xff]
        %v2697 = vld [vmem:[%s2690 + $0x30] sm:$0xff]
        %v2698 = vld [vmem:[%s2690 + $0x38] sm:$0xff]
        %v2699 = vld [vmem:[%s2690 + $0x40] sm:$0xff]
        %v2700 = vld [vmem:[%s2690 + $0x48] sm:$0xff]
        %v2701 = vld [vmem:[%s2690 + $0x50] sm:$0xff]
        %v2702 = vld [vmem:[%s2690 + $0x58] sm:$0xff]
        %v2703 = vld [vmem:[%s2690 + $0x60] sm:$0xff]
        %v2704 = vld [vmem:[%s2690 + $0x68] sm:$0xff]
        %v2705 = vld [vmem:[%s2690 + $0x70] sm:$0xff]
        %v2706 = vld [vmem:[%s2690 + $0x78] sm:$0xff]
        %2707 = vmatpush.msra.mxu0 %v2706
        %2708 = vmatpush.msra.mxu0 %v2705
        %2709 = vmatpush.msra.mxu0 %v2704
        %2710 = vmatpush.msra.mxu0 %v2703
        %2711 = vmatpush.msra.mxu0 %v2702
        %2712 = vmatpush.msra.mxu0 %v2701
        %2713 = vmatpush.msra.mxu0 %v2700
        %2714 = vmatpush.msra.mxu0 %v2699
        %2715 = vmatpush.msra.mxu0 %v2698
        %2716 = vmatpush.msra.mxu0 %v2697
        %2717 = vmatpush.msra.mxu0 %v2696
        %2718 = vmatpush.msra.mxu0 %v2695
        %2719 = vmatpush.msra.mxu0 %v2694
        %2720 = vmatpush.msra.mxu0 %v2693
        %2721 = vmatpush.msra.mxu0 %v2692
        %2722 = vmatpush.msra.mxu0 %v2691
        %2723 = vmatmul.f32.gmra.mxu0 %v2405
        %v2724 = vpop.f32.mrf.mxu0
        %v2725 = vadd.f32 0.0, %v2724
        %2726 = vmatmul.f32.gmra.mxu0 %v2406
        %v2727 = vpop.f32.mrf.mxu0
        %v2728 = vadd.f32 0.0, %v2727
        %2729 = vmatmul.f32.gmra.mxu0 %v2407
        %v2730 = vpop.f32.mrf.mxu0
        %v2731 = vadd.f32 0.0, %v2730
        %2732 = vmatmul.f32.gmra.mxu0 %v2408
        %v2733 = vpop.f32.mrf.mxu0
        %v2734 = vadd.f32 0.0, %v2733
        %2735 = vmatmul.f32.gmra.mxu0 %v2409
        %v2736 = vpop.f32.mrf.mxu0
        %v2737 = vadd.f32 0.0, %v2736
        %2738 = vmatmul.f32.gmra.mxu0 %v2410
        %v2739 = vpop.f32.mrf.mxu0
        %v2740 = vadd.f32 0.0, %v2739
        %2741 = vmatmul.f32.gmra.mxu0 %v2411
        %v2742 = vpop.f32.mrf.mxu0
        %v2743 = vadd.f32 0.0, %v2742
        %2744 = vmatmul.f32.gmra.mxu0 %v2412
        %v2745 = vpop.f32.mrf.mxu0
        %v2746 = vadd.f32 0.0, %v2745
        %2747 = vdwg.mxu0
        %v2748 = vadd.f32 %v2682, %v2725
        %v2749 = vadd.f32 %v2683, %v2728
        %v2750 = vadd.f32 %v2684, %v2731
        %v2751 = vadd.f32 %v2685, %v2734
        %v2752 = vadd.f32 %v2686, %v2737
        %v2753 = vadd.f32 %v2687, %v2740
        %v2754 = vadd.f32 %v2688, %v2743
        %v2755 = vadd.f32 %v2689, %v2746
        %s2756 = scalar_lea.vmem %s4, 512
        %v2757 = vld [vmem:[%s2756] sm:$0xff]
        %v2758 = vld [vmem:[%s2756 + $0x8] sm:$0xff]
        %v2759 = vld [vmem:[%s2756 + $0x10] sm:$0xff]
        %v2760 = vld [vmem:[%s2756 + $0x18] sm:$0xff]
        %v2761 = vld [vmem:[%s2756 + $0x20] sm:$0xff]
        %v2762 = vld [vmem:[%s2756 + $0x28] sm:$0xff]
        %v2763 = vld [vmem:[%s2756 + $0x30] sm:$0xff]
        %v2764 = vld [vmem:[%s2756 + $0x38] sm:$0xff]
        %v2765 = vld [vmem:[%s2756 + $0x40] sm:$0xff]
        %v2766 = vld [vmem:[%s2756 + $0x48] sm:$0xff]
        %v2767 = vld [vmem:[%s2756 + $0x50] sm:$0xff]
        %v2768 = vld [vmem:[%s2756 + $0x58] sm:$0xff]
        %v2769 = vld [vmem:[%s2756 + $0x60] sm:$0xff]
        %v2770 = vld [vmem:[%s2756 + $0x68] sm:$0xff]
        %v2771 = vld [vmem:[%s2756 + $0x70] sm:$0xff]
        %v2772 = vld [vmem:[%s2756 + $0x78] sm:$0xff]
        %2773 = vmatpush.msra.mxu0 %v2772
        %2774 = vmatpush.msra.mxu0 %v2771
        %2775 = vmatpush.msra.mxu0 %v2770
        %2776 = vmatpush.msra.mxu0 %v2769
        %2777 = vmatpush.msra.mxu0 %v2768
        %2778 = vmatpush.msra.mxu0 %v2767
        %2779 = vmatpush.msra.mxu0 %v2766
        %2780 = vmatpush.msra.mxu0 %v2765
        %2781 = vmatpush.msra.mxu0 %v2764
        %2782 = vmatpush.msra.mxu0 %v2763
        %2783 = vmatpush.msra.mxu0 %v2762
        %2784 = vmatpush.msra.mxu0 %v2761
        %2785 = vmatpush.msra.mxu0 %v2760
        %2786 = vmatpush.msra.mxu0 %v2759
        %2787 = vmatpush.msra.mxu0 %v2758
        %2788 = vmatpush.msra.mxu0 %v2757
        %2789 = vmatmul.f32.gmra.mxu0 %v2413
        %v2790 = vpop.f32.mrf.mxu0
        %v2791 = vadd.f32 0.0, %v2790
        %2792 = vmatmul.f32.gmra.mxu0 %v2414
        %v2793 = vpop.f32.mrf.mxu0
        %v2794 = vadd.f32 0.0, %v2793
        %2795 = vmatmul.f32.gmra.mxu0 %v2415
        %v2796 = vpop.f32.mrf.mxu0
        %v2797 = vadd.f32 0.0, %v2796
        %2798 = vmatmul.f32.gmra.mxu0 %v2416
        %v2799 = vpop.f32.mrf.mxu0
        %v2800 = vadd.f32 0.0, %v2799
        %2801 = vmatmul.f32.gmra.mxu0 %v2417
        %v2802 = vpop.f32.mrf.mxu0
        %v2803 = vadd.f32 0.0, %v2802
        %2804 = vmatmul.f32.gmra.mxu0 %v2418
        %v2805 = vpop.f32.mrf.mxu0
        %v2806 = vadd.f32 0.0, %v2805
        %2807 = vmatmul.f32.gmra.mxu0 %v2419
        %v2808 = vpop.f32.mrf.mxu0
        %v2809 = vadd.f32 0.0, %v2808
        %2810 = vmatmul.f32.gmra.mxu0 %v2420
        %v2811 = vpop.f32.mrf.mxu0
        %v2812 = vadd.f32 0.0, %v2811
        %2813 = vdwg.mxu0
        %v2814 = vadd.f32 %v2748, %v2791
        %v2815 = vadd.f32 %v2749, %v2794
        %v2816 = vadd.f32 %v2750, %v2797
        %v2817 = vadd.f32 %v2751, %v2800
        %v2818 = vadd.f32 %v2752, %v2803
        %v2819 = vadd.f32 %v2753, %v2806
        %v2820 = vadd.f32 %v2754, %v2809
        %v2821 = vadd.f32 %v2755, %v2812
        %s2822 = scalar_lea.vmem %s4, 640
        %v2823 = vld [vmem:[%s2822] sm:$0xff]
        %v2824 = vld [vmem:[%s2822 + $0x8] sm:$0xff]
        %v2825 = vld [vmem:[%s2822 + $0x10] sm:$0xff]
        %v2826 = vld [vmem:[%s2822 + $0x18] sm:$0xff]
        %v2827 = vld [vmem:[%s2822 + $0x20] sm:$0xff]
        %v2828 = vld [vmem:[%s2822 + $0x28] sm:$0xff]
        %v2829 = vld [vmem:[%s2822 + $0x30] sm:$0xff]
        %v2830 = vld [vmem:[%s2822 + $0x38] sm:$0xff]
        %v2831 = vld [vmem:[%s2822 + $0x40] sm:$0xff]
        %v2832 = vld [vmem:[%s2822 + $0x48] sm:$0xff]
        %v2833 = vld [vmem:[%s2822 + $0x50] sm:$0xff]
        %v2834 = vld [vmem:[%s2822 + $0x58] sm:$0xff]
        %v2835 = vld [vmem:[%s2822 + $0x60] sm:$0xff]
        %v2836 = vld [vmem:[%s2822 + $0x68] sm:$0xff]
        %v2837 = vld [vmem:[%s2822 + $0x70] sm:$0xff]
        %v2838 = vld [vmem:[%s2822 + $0x78] sm:$0xff]
        %2839 = vmatpush.msra.mxu0 %v2838
        %2840 = vmatpush.msra.mxu0 %v2837
        %2841 = vmatpush.msra.mxu0 %v2836
        %2842 = vmatpush.msra.mxu0 %v2835
        %2843 = vmatpush.msra.mxu0 %v2834
        %2844 = vmatpush.msra.mxu0 %v2833
        %2845 = vmatpush.msra.mxu0 %v2832
        %2846 = vmatpush.msra.mxu0 %v2831
        %2847 = vmatpush.msra.mxu0 %v2830
        %2848 = vmatpush.msra.mxu0 %v2829
        %2849 = vmatpush.msra.mxu0 %v2828
        %2850 = vmatpush.msra.mxu0 %v2827
        %2851 = vmatpush.msra.mxu0 %v2826
        %2852 = vmatpush.msra.mxu0 %v2825
        %2853 = vmatpush.msra.mxu0 %v2824
        %2854 = vmatpush.msra.mxu0 %v2823
        %2855 = vmatmul.f32.gmra.mxu0 %v2421
        %v2856 = vpop.f32.mrf.mxu0
        %v2857 = vadd.f32 0.0, %v2856
        %2858 = vmatmul.f32.gmra.mxu0 %v2422
        %v2859 = vpop.f32.mrf.mxu0
        %v2860 = vadd.f32 0.0, %v2859
        %2861 = vmatmul.f32.gmra.mxu0 %v2423
        %v2862 = vpop.f32.mrf.mxu0
        %v2863 = vadd.f32 0.0, %v2862
        %2864 = vmatmul.f32.gmra.mxu0 %v2424
        %v2865 = vpop.f32.mrf.mxu0
        %v2866 = vadd.f32 0.0, %v2865
        %2867 = vmatmul.f32.gmra.mxu0 %v2425
        %v2868 = vpop.f32.mrf.mxu0
        %v2869 = vadd.f32 0.0, %v2868
        %2870 = vmatmul.f32.gmra.mxu0 %v2426
        %v2871 = vpop.f32.mrf.mxu0
        %v2872 = vadd.f32 0.0, %v2871
        %2873 = vmatmul.f32.gmra.mxu0 %v2427
        %v2874 = vpop.f32.mrf.mxu0
        %v2875 = vadd.f32 0.0, %v2874
        %2876 = vmatmul.f32.gmra.mxu0 %v2428
        %v2877 = vpop.f32.mrf.mxu0
        %v2878 = vadd.f32 0.0, %v2877
        %2879 = vdwg.mxu0
        %v2880 = vadd.f32 %v2814, %v2857
        %v2881 = vadd.f32 %v2815, %v2860
        %v2882 = vadd.f32 %v2816, %v2863
        %v2883 = vadd.f32 %v2817, %v2866
        %v2884 = vadd.f32 %v2818, %v2869
        %v2885 = vadd.f32 %v2819, %v2872
        %v2886 = vadd.f32 %v2820, %v2875
        %v2887 = vadd.f32 %v2821, %v2878
        %s2888 = scalar_lea.vmem %s4, 768
        %v2889 = vld [vmem:[%s2888] sm:$0xff]
        %v2890 = vld [vmem:[%s2888 + $0x8] sm:$0xff]
        %v2891 = vld [vmem:[%s2888 + $0x10] sm:$0xff]
        %v2892 = vld [vmem:[%s2888 + $0x18] sm:$0xff]
        %v2893 = vld [vmem:[%s2888 + $0x20] sm:$0xff]
        %v2894 = vld [vmem:[%s2888 + $0x28] sm:$0xff]
        %v2895 = vld [vmem:[%s2888 + $0x30] sm:$0xff]
        %v2896 = vld [vmem:[%s2888 + $0x38] sm:$0xff]
        %v2897 = vld [vmem:[%s2888 + $0x40] sm:$0xff]
        %v2898 = vld [vmem:[%s2888 + $0x48] sm:$0xff]
        %v2899 = vld [vmem:[%s2888 + $0x50] sm:$0xff]
        %v2900 = vld [vmem:[%s2888 + $0x58] sm:$0xff]
        %v2901 = vld [vmem:[%s2888 + $0x60] sm:$0xff]
        %v2902 = vld [vmem:[%s2888 + $0x68] sm:$0xff]
        %v2903 = vld [vmem:[%s2888 + $0x70] sm:$0xff]
        %v2904 = vld [vmem:[%s2888 + $0x78] sm:$0xff]
        %2905 = vmatpush.msra.mxu0 %v2904
        %2906 = vmatpush.msra.mxu0 %v2903
        %2907 = vmatpush.msra.mxu0 %v2902
        %2908 = vmatpush.msra.mxu0 %v2901
        %2909 = vmatpush.msra.mxu0 %v2900
        %2910 = vmatpush.msra.mxu0 %v2899
        %2911 = vmatpush.msra.mxu0 %v2898
        %2912 = vmatpush.msra.mxu0 %v2897
        %2913 = vmatpush.msra.mxu0 %v2896
        %2914 = vmatpush.msra.mxu0 %v2895
        %2915 = vmatpush.msra.mxu0 %v2894
        %2916 = vmatpush.msra.mxu0 %v2893
        %2917 = vmatpush.msra.mxu0 %v2892
        %2918 = vmatpush.msra.mxu0 %v2891
        %2919 = vmatpush.msra.mxu0 %v2890
        %2920 = vmatpush.msra.mxu0 %v2889
        %2921 = vmatmul.f32.gmra.mxu0 %v2429
        %v2922 = vpop.f32.mrf.mxu0
        %v2923 = vadd.f32 0.0, %v2922
        %2924 = vmatmul.f32.gmra.mxu0 %v2430
        %v2925 = vpop.f32.mrf.mxu0
        %v2926 = vadd.f32 0.0, %v2925
        %2927 = vmatmul.f32.gmra.mxu0 %v2431
        %v2928 = vpop.f32.mrf.mxu0
        %v2929 = vadd.f32 0.0, %v2928
        %2930 = vmatmul.f32.gmra.mxu0 %v2432
        %v2931 = vpop.f32.mrf.mxu0
        %v2932 = vadd.f32 0.0, %v2931
        %2933 = vmatmul.f32.gmra.mxu0 %v2433
        %v2934 = vpop.f32.mrf.mxu0
        %v2935 = vadd.f32 0.0, %v2934
        %2936 = vmatmul.f32.gmra.mxu0 %v2434
        %v2937 = vpop.f32.mrf.mxu0
        %v2938 = vadd.f32 0.0, %v2937
        %2939 = vmatmul.f32.gmra.mxu0 %v2435
        %v2940 = vpop.f32.mrf.mxu0
        %v2941 = vadd.f32 0.0, %v2940
        %2942 = vmatmul.f32.gmra.mxu0 %v2436
        %v2943 = vpop.f32.mrf.mxu0
        %v2944 = vadd.f32 0.0, %v2943
        %2945 = vdwg.mxu0
        %v2946 = vadd.f32 %v2880, %v2923
        %v2947 = vadd.f32 %v2881, %v2926
        %v2948 = vadd.f32 %v2882, %v2929
        %v2949 = vadd.f32 %v2883, %v2932
        %v2950 = vadd.f32 %v2884, %v2935
        %v2951 = vadd.f32 %v2885, %v2938
        %v2952 = vadd.f32 %v2886, %v2941
        %v2953 = vadd.f32 %v2887, %v2944
        %s2954 = scalar_lea.vmem %s4, 896
        %v2955 = vld [vmem:[%s2954] sm:$0xff]
        %v2956 = vld [vmem:[%s2954 + $0x8] sm:$0xff]
        %v2957 = vld [vmem:[%s2954 + $0x10] sm:$0xff]
        %v2958 = vld [vmem:[%s2954 + $0x18] sm:$0xff]
        %v2959 = vld [vmem:[%s2954 + $0x20] sm:$0xff]
        %v2960 = vld [vmem:[%s2954 + $0x28] sm:$0xff]
        %v2961 = vld [vmem:[%s2954 + $0x30] sm:$0xff]
        %v2962 = vld [vmem:[%s2954 + $0x38] sm:$0xff]
        %v2963 = vld [vmem:[%s2954 + $0x40] sm:$0xff]
        %v2964 = vld [vmem:[%s2954 + $0x48] sm:$0xff]
        %v2965 = vld [vmem:[%s2954 + $0x50] sm:$0xff]
        %v2966 = vld [vmem:[%s2954 + $0x58] sm:$0xff]
        %v2967 = vld [vmem:[%s2954 + $0x60] sm:$0xff]
        %v2968 = vld [vmem:[%s2954 + $0x68] sm:$0xff]
        %v2969 = vld [vmem:[%s2954 + $0x70] sm:$0xff]
        %v2970 = vld [vmem:[%s2954 + $0x78] sm:$0xff]
        %2971 = vmatpush.msra.mxu0 %v2970
        %2972 = vmatpush.msra.mxu0 %v2969
        %2973 = vmatpush.msra.mxu0 %v2968
        %2974 = vmatpush.msra.mxu0 %v2967
        %2975 = vmatpush.msra.mxu0 %v2966
        %2976 = vmatpush.msra.mxu0 %v2965
        %2977 = vmatpush.msra.mxu0 %v2964
        %2978 = vmatpush.msra.mxu0 %v2963
        %2979 = vmatpush.msra.mxu0 %v2962
        %2980 = vmatpush.msra.mxu0 %v2961
        %2981 = vmatpush.msra.mxu0 %v2960
        %2982 = vmatpush.msra.mxu0 %v2959
        %2983 = vmatpush.msra.mxu0 %v2958
        %2984 = vmatpush.msra.mxu0 %v2957
        %2985 = vmatpush.msra.mxu0 %v2956
        %2986 = vmatpush.msra.mxu0 %v2955
        %2987 = vmatmul.f32.gmra.mxu0 %v2437
        %v2988 = vpop.f32.mrf.mxu0
        %v2989 = vadd.f32 0.0, %v2988
        %2990 = vmatmul.f32.gmra.mxu0 %v2438
        %v2991 = vpop.f32.mrf.mxu0
        %v2992 = vadd.f32 0.0, %v2991
        %2993 = vmatmul.f32.gmra.mxu0 %v2439
        %v2994 = vpop.f32.mrf.mxu0
        %v2995 = vadd.f32 0.0, %v2994
        %2996 = vmatmul.f32.gmra.mxu0 %v2440
        %v2997 = vpop.f32.mrf.mxu0
        %v2998 = vadd.f32 0.0, %v2997
        %2999 = vmatmul.f32.gmra.mxu0 %v2441
        %v3000 = vpop.f32.mrf.mxu0
        %v3001 = vadd.f32 0.0, %v3000
        %3002 = vmatmul.f32.gmra.mxu0 %v2442
        %v3003 = vpop.f32.mrf.mxu0
        %v3004 = vadd.f32 0.0, %v3003
        %3005 = vmatmul.f32.gmra.mxu0 %v2443
        %v3006 = vpop.f32.mrf.mxu0
        %v3007 = vadd.f32 0.0, %v3006
        %3008 = vmatmul.f32.gmra.mxu0 %v2444
        %v3009 = vpop.f32.mrf.mxu0
        %v3010 = vadd.f32 0.0, %v3009
        %3011 = vdwg.mxu0
        %v3012 = vadd.f32 %v2946, %v2989
        %v3013 = vadd.f32 %v2947, %v2992
        %v3014 = vadd.f32 %v2948, %v2995
        %v3015 = vadd.f32 %v2949, %v2998
        %v3016 = vadd.f32 %v2950, %v3001
        %v3017 = vadd.f32 %v2951, %v3004
        %v3018 = vadd.f32 %v2952, %v3007
        %v3019 = vadd.f32 %v2953, %v3010
        %s3020 = scalar_lea.vmem %s4, 1024
        %v3021 = vld [vmem:[%s3020] sm:$0xff]
        %v3022 = vld [vmem:[%s3020 + $0x8] sm:$0xff]
        %v3023 = vld [vmem:[%s3020 + $0x10] sm:$0xff]
        %v3024 = vld [vmem:[%s3020 + $0x18] sm:$0xff]
        %v3025 = vld [vmem:[%s3020 + $0x20] sm:$0xff]
        %v3026 = vld [vmem:[%s3020 + $0x28] sm:$0xff]
        %v3027 = vld [vmem:[%s3020 + $0x30] sm:$0xff]
        %v3028 = vld [vmem:[%s3020 + $0x38] sm:$0xff]
        %v3029 = vld [vmem:[%s3020 + $0x40] sm:$0xff]
        %v3030 = vld [vmem:[%s3020 + $0x48] sm:$0xff]
        %v3031 = vld [vmem:[%s3020 + $0x50] sm:$0xff]
        %v3032 = vld [vmem:[%s3020 + $0x58] sm:$0xff]
        %v3033 = vld [vmem:[%s3020 + $0x60] sm:$0xff]
        %v3034 = vld [vmem:[%s3020 + $0x68] sm:$0xff]
        %v3035 = vld [vmem:[%s3020 + $0x70] sm:$0xff]
        %v3036 = vld [vmem:[%s3020 + $0x78] sm:$0xff]
        %3037 = vmatpush.msra.mxu0 %v3036
        %3038 = vmatpush.msra.mxu0 %v3035
        %3039 = vmatpush.msra.mxu0 %v3034
        %3040 = vmatpush.msra.mxu0 %v3033
        %3041 = vmatpush.msra.mxu0 %v3032
        %3042 = vmatpush.msra.mxu0 %v3031
        %3043 = vmatpush.msra.mxu0 %v3030
        %3044 = vmatpush.msra.mxu0 %v3029
        %3045 = vmatpush.msra.mxu0 %v3028
        %3046 = vmatpush.msra.mxu0 %v3027
        %3047 = vmatpush.msra.mxu0 %v3026
        %3048 = vmatpush.msra.mxu0 %v3025
        %3049 = vmatpush.msra.mxu0 %v3024
        %3050 = vmatpush.msra.mxu0 %v3023
        %3051 = vmatpush.msra.mxu0 %v3022
        %3052 = vmatpush.msra.mxu0 %v3021
        %3053 = vmatmul.f32.gmra.mxu0 %v2445
        %v3054 = vpop.f32.mrf.mxu0
        %v3055 = vadd.f32 0.0, %v3054
        %3056 = vmatmul.f32.gmra.mxu0 %v2446
        %v3057 = vpop.f32.mrf.mxu0
        %v3058 = vadd.f32 0.0, %v3057
        %3059 = vmatmul.f32.gmra.mxu0 %v2447
        %v3060 = vpop.f32.mrf.mxu0
        %v3061 = vadd.f32 0.0, %v3060
        %3062 = vmatmul.f32.gmra.mxu0 %v2448
        %v3063 = vpop.f32.mrf.mxu0
        %v3064 = vadd.f32 0.0, %v3063
        %3065 = vmatmul.f32.gmra.mxu0 %v2449
        %v3066 = vpop.f32.mrf.mxu0
        %v3067 = vadd.f32 0.0, %v3066
        %3068 = vmatmul.f32.gmra.mxu0 %v2450
        %v3069 = vpop.f32.mrf.mxu0
        %v3070 = vadd.f32 0.0, %v3069
        %3071 = vmatmul.f32.gmra.mxu0 %v2451
        %v3072 = vpop.f32.mrf.mxu0
        %v3073 = vadd.f32 0.0, %v3072
        %3074 = vmatmul.f32.gmra.mxu0 %v2452
        %v3075 = vpop.f32.mrf.mxu0
        %v3076 = vadd.f32 0.0, %v3075
        %3077 = vdwg.mxu0
        %v3078 = vadd.f32 %v3012, %v3055
        %v3079 = vadd.f32 %v3013, %v3058
        %v3080 = vadd.f32 %v3014, %v3061
        %v3081 = vadd.f32 %v3015, %v3064
        %v3082 = vadd.f32 %v3016, %v3067
        %v3083 = vadd.f32 %v3017, %v3070
        %v3084 = vadd.f32 %v3018, %v3073
        %v3085 = vadd.f32 %v3019, %v3076
        %s3086 = scalar_lea.vmem %s4, 1152
        %v3087 = vld [vmem:[%s3086] sm:$0xff]
        %v3088 = vld [vmem:[%s3086 + $0x8] sm:$0xff]
        %v3089 = vld [vmem:[%s3086 + $0x10] sm:$0xff]
        %v3090 = vld [vmem:[%s3086 + $0x18] sm:$0xff]
        %v3091 = vld [vmem:[%s3086 + $0x20] sm:$0xff]
        %v3092 = vld [vmem:[%s3086 + $0x28] sm:$0xff]
        %v3093 = vld [vmem:[%s3086 + $0x30] sm:$0xff]
        %v3094 = vld [vmem:[%s3086 + $0x38] sm:$0xff]
        %v3095 = vld [vmem:[%s3086 + $0x40] sm:$0xff]
        %v3096 = vld [vmem:[%s3086 + $0x48] sm:$0xff]
        %v3097 = vld [vmem:[%s3086 + $0x50] sm:$0xff]
        %v3098 = vld [vmem:[%s3086 + $0x58] sm:$0xff]
        %v3099 = vld [vmem:[%s3086 + $0x60] sm:$0xff]
        %v3100 = vld [vmem:[%s3086 + $0x68] sm:$0xff]
        %v3101 = vld [vmem:[%s3086 + $0x70] sm:$0xff]
        %v3102 = vld [vmem:[%s3086 + $0x78] sm:$0xff]
        %3103 = vmatpush.msra.mxu0 %v3102
        %3104 = vmatpush.msra.mxu0 %v3101
        %3105 = vmatpush.msra.mxu0 %v3100
        %3106 = vmatpush.msra.mxu0 %v3099
        %3107 = vmatpush.msra.mxu0 %v3098
        %3108 = vmatpush.msra.mxu0 %v3097
        %3109 = vmatpush.msra.mxu0 %v3096
        %3110 = vmatpush.msra.mxu0 %v3095
        %3111 = vmatpush.msra.mxu0 %v3094
        %3112 = vmatpush.msra.mxu0 %v3093
        %3113 = vmatpush.msra.mxu0 %v3092
        %3114 = vmatpush.msra.mxu0 %v3091
        %3115 = vmatpush.msra.mxu0 %v3090
        %3116 = vmatpush.msra.mxu0 %v3089
        %3117 = vmatpush.msra.mxu0 %v3088
        %3118 = vmatpush.msra.mxu0 %v3087
        %3119 = vmatmul.f32.gmra.mxu0 %v2453
        %v3120 = vpop.f32.mrf.mxu0
        %v3121 = vadd.f32 0.0, %v3120
        %3122 = vmatmul.f32.gmra.mxu0 %v2454
        %v3123 = vpop.f32.mrf.mxu0
        %v3124 = vadd.f32 0.0, %v3123
        %3125 = vmatmul.f32.gmra.mxu0 %v2455
        %v3126 = vpop.f32.mrf.mxu0
        %v3127 = vadd.f32 0.0, %v3126
        %3128 = vmatmul.f32.gmra.mxu0 %v2456
        %v3129 = vpop.f32.mrf.mxu0
        %v3130 = vadd.f32 0.0, %v3129
        %3131 = vmatmul.f32.gmra.mxu0 %v2457
        %v3132 = vpop.f32.mrf.mxu0
        %v3133 = vadd.f32 0.0, %v3132
        %3134 = vmatmul.f32.gmra.mxu0 %v2458
        %v3135 = vpop.f32.mrf.mxu0
        %v3136 = vadd.f32 0.0, %v3135
        %3137 = vmatmul.f32.gmra.mxu0 %v2459
        %v3138 = vpop.f32.mrf.mxu0
        %v3139 = vadd.f32 0.0, %v3138
        %3140 = vmatmul.f32.gmra.mxu0 %v2460
        %v3141 = vpop.f32.mrf.mxu0
        %v3142 = vadd.f32 0.0, %v3141
        %3143 = vdwg.mxu0
        %v3144 = vadd.f32 %v3078, %v3121
        %v3145 = vadd.f32 %v3079, %v3124
        %v3146 = vadd.f32 %v3080, %v3127
        %v3147 = vadd.f32 %v3081, %v3130
        %v3148 = vadd.f32 %v3082, %v3133
        %v3149 = vadd.f32 %v3083, %v3136
        %v3150 = vadd.f32 %v3084, %v3139
        %v3151 = vadd.f32 %v3085, %v3142
        %s3152 = scalar_lea.vmem %s4, 1280
        %v3153 = vld [vmem:[%s3152] sm:$0xff]
        %v3154 = vld [vmem:[%s3152 + $0x8] sm:$0xff]
        %v3155 = vld [vmem:[%s3152 + $0x10] sm:$0xff]
        %v3156 = vld [vmem:[%s3152 + $0x18] sm:$0xff]
        %v3157 = vld [vmem:[%s3152 + $0x20] sm:$0xff]
        %v3158 = vld [vmem:[%s3152 + $0x28] sm:$0xff]
        %v3159 = vld [vmem:[%s3152 + $0x30] sm:$0xff]
        %v3160 = vld [vmem:[%s3152 + $0x38] sm:$0xff]
        %v3161 = vld [vmem:[%s3152 + $0x40] sm:$0xff]
        %v3162 = vld [vmem:[%s3152 + $0x48] sm:$0xff]
        %v3163 = vld [vmem:[%s3152 + $0x50] sm:$0xff]
        %v3164 = vld [vmem:[%s3152 + $0x58] sm:$0xff]
        %v3165 = vld [vmem:[%s3152 + $0x60] sm:$0xff]
        %v3166 = vld [vmem:[%s3152 + $0x68] sm:$0xff]
        %v3167 = vld [vmem:[%s3152 + $0x70] sm:$0xff]
        %v3168 = vld [vmem:[%s3152 + $0x78] sm:$0xff]
        %3169 = vmatpush.msra.mxu0 %v3168
        %3170 = vmatpush.msra.mxu0 %v3167
        %3171 = vmatpush.msra.mxu0 %v3166
        %3172 = vmatpush.msra.mxu0 %v3165
        %3173 = vmatpush.msra.mxu0 %v3164
        %3174 = vmatpush.msra.mxu0 %v3163
        %3175 = vmatpush.msra.mxu0 %v3162
        %3176 = vmatpush.msra.mxu0 %v3161
        %3177 = vmatpush.msra.mxu0 %v3160
        %3178 = vmatpush.msra.mxu0 %v3159
        %3179 = vmatpush.msra.mxu0 %v3158
        %3180 = vmatpush.msra.mxu0 %v3157
        %3181 = vmatpush.msra.mxu0 %v3156
        %3182 = vmatpush.msra.mxu0 %v3155
        %3183 = vmatpush.msra.mxu0 %v3154
        %3184 = vmatpush.msra.mxu0 %v3153
        %3185 = vmatmul.f32.gmra.mxu0 %v2461
        %v3186 = vpop.f32.mrf.mxu0
        %v3187 = vadd.f32 0.0, %v3186
        %3188 = vmatmul.f32.gmra.mxu0 %v2462
        %v3189 = vpop.f32.mrf.mxu0
        %v3190 = vadd.f32 0.0, %v3189
        %3191 = vmatmul.f32.gmra.mxu0 %v2463
        %v3192 = vpop.f32.mrf.mxu0
        %v3193 = vadd.f32 0.0, %v3192
        %3194 = vmatmul.f32.gmra.mxu0 %v2464
        %v3195 = vpop.f32.mrf.mxu0
        %v3196 = vadd.f32 0.0, %v3195
        %3197 = vmatmul.f32.gmra.mxu0 %v2465
        %v3198 = vpop.f32.mrf.mxu0
        %v3199 = vadd.f32 0.0, %v3198
        %3200 = vmatmul.f32.gmra.mxu0 %v2466
        %v3201 = vpop.f32.mrf.mxu0
        %v3202 = vadd.f32 0.0, %v3201
        %3203 = vmatmul.f32.gmra.mxu0 %v2467
        %v3204 = vpop.f32.mrf.mxu0
        %v3205 = vadd.f32 0.0, %v3204
        %3206 = vmatmul.f32.gmra.mxu0 %v2468
        %v3207 = vpop.f32.mrf.mxu0
        %v3208 = vadd.f32 0.0, %v3207
        %3209 = vdwg.mxu0
        %v3210 = vadd.f32 %v3144, %v3187
        %v3211 = vadd.f32 %v3145, %v3190
        %v3212 = vadd.f32 %v3146, %v3193
        %v3213 = vadd.f32 %v3147, %v3196
        %v3214 = vadd.f32 %v3148, %v3199
        %v3215 = vadd.f32 %v3149, %v3202
        %v3216 = vadd.f32 %v3150, %v3205
        %v3217 = vadd.f32 %v3151, %v3208
        %s3218 = scalar_lea.vmem %s4, 1408
        %v3219 = vld [vmem:[%s3218] sm:$0xff]
        %v3220 = vld [vmem:[%s3218 + $0x8] sm:$0xff]
        %v3221 = vld [vmem:[%s3218 + $0x10] sm:$0xff]
        %v3222 = vld [vmem:[%s3218 + $0x18] sm:$0xff]
        %v3223 = vld [vmem:[%s3218 + $0x20] sm:$0xff]
        %v3224 = vld [vmem:[%s3218 + $0x28] sm:$0xff]
        %v3225 = vld [vmem:[%s3218 + $0x30] sm:$0xff]
        %v3226 = vld [vmem:[%s3218 + $0x38] sm:$0xff]
        %v3227 = vld [vmem:[%s3218 + $0x40] sm:$0xff]
        %v3228 = vld [vmem:[%s3218 + $0x48] sm:$0xff]
        %v3229 = vld [vmem:[%s3218 + $0x50] sm:$0xff]
        %v3230 = vld [vmem:[%s3218 + $0x58] sm:$0xff]
        %v3231 = vld [vmem:[%s3218 + $0x60] sm:$0xff]
        %v3232 = vld [vmem:[%s3218 + $0x68] sm:$0xff]
        %v3233 = vld [vmem:[%s3218 + $0x70] sm:$0xff]
        %v3234 = vld [vmem:[%s3218 + $0x78] sm:$0xff]
        %3235 = vmatpush.msra.mxu0 %v3234
        %3236 = vmatpush.msra.mxu0 %v3233
        %3237 = vmatpush.msra.mxu0 %v3232
        %3238 = vmatpush.msra.mxu0 %v3231
        %3239 = vmatpush.msra.mxu0 %v3230
        %3240 = vmatpush.msra.mxu0 %v3229
        %3241 = vmatpush.msra.mxu0 %v3228
        %3242 = vmatpush.msra.mxu0 %v3227
        %3243 = vmatpush.msra.mxu0 %v3226
        %3244 = vmatpush.msra.mxu0 %v3225
        %3245 = vmatpush.msra.mxu0 %v3224
        %3246 = vmatpush.msra.mxu0 %v3223
        %3247 = vmatpush.msra.mxu0 %v3222
        %3248 = vmatpush.msra.mxu0 %v3221
        %3249 = vmatpush.msra.mxu0 %v3220
        %3250 = vmatpush.msra.mxu0 %v3219
        %3251 = vmatmul.f32.gmra.mxu0 %v2469
        %v3252 = vpop.f32.mrf.mxu0
        %v3253 = vadd.f32 0.0, %v3252
        %3254 = vmatmul.f32.gmra.mxu0 %v2470
        %v3255 = vpop.f32.mrf.mxu0
        %v3256 = vadd.f32 0.0, %v3255
        %3257 = vmatmul.f32.gmra.mxu0 %v2471
        %v3258 = vpop.f32.mrf.mxu0
        %v3259 = vadd.f32 0.0, %v3258
        %3260 = vmatmul.f32.gmra.mxu0 %v2472
        %v3261 = vpop.f32.mrf.mxu0
        %v3262 = vadd.f32 0.0, %v3261
        %3263 = vmatmul.f32.gmra.mxu0 %v2473
        %v3264 = vpop.f32.mrf.mxu0
        %v3265 = vadd.f32 0.0, %v3264
        %3266 = vmatmul.f32.gmra.mxu0 %v2474
        %v3267 = vpop.f32.mrf.mxu0
        %v3268 = vadd.f32 0.0, %v3267
        %3269 = vmatmul.f32.gmra.mxu0 %v2475
        %v3270 = vpop.f32.mrf.mxu0
        %v3271 = vadd.f32 0.0, %v3270
        %3272 = vmatmul.f32.gmra.mxu0 %v2476
        %v3273 = vpop.f32.mrf.mxu0
        %v3274 = vadd.f32 0.0, %v3273
        %3275 = vdwg.mxu0
        %v3276 = vadd.f32 %v3210, %v3253
        %v3277 = vadd.f32 %v3211, %v3256
        %v3278 = vadd.f32 %v3212, %v3259
        %v3279 = vadd.f32 %v3213, %v3262
        %v3280 = vadd.f32 %v3214, %v3265
        %v3281 = vadd.f32 %v3215, %v3268
        %v3282 = vadd.f32 %v3216, %v3271
        %v3283 = vadd.f32 %v3217, %v3274
        %s3284 = scalar_lea.vmem %s4, 1536
        %v3285 = vld [vmem:[%s3284] sm:$0xff]
        %v3286 = vld [vmem:[%s3284 + $0x8] sm:$0xff]
        %v3287 = vld [vmem:[%s3284 + $0x10] sm:$0xff]
        %v3288 = vld [vmem:[%s3284 + $0x18] sm:$0xff]
        %v3289 = vld [vmem:[%s3284 + $0x20] sm:$0xff]
        %v3290 = vld [vmem:[%s3284 + $0x28] sm:$0xff]
        %v3291 = vld [vmem:[%s3284 + $0x30] sm:$0xff]
        %v3292 = vld [vmem:[%s3284 + $0x38] sm:$0xff]
        %v3293 = vld [vmem:[%s3284 + $0x40] sm:$0xff]
        %v3294 = vld [vmem:[%s3284 + $0x48] sm:$0xff]
        %v3295 = vld [vmem:[%s3284 + $0x50] sm:$0xff]
        %v3296 = vld [vmem:[%s3284 + $0x58] sm:$0xff]
        %v3297 = vld [vmem:[%s3284 + $0x60] sm:$0xff]
        %v3298 = vld [vmem:[%s3284 + $0x68] sm:$0xff]
        %v3299 = vld [vmem:[%s3284 + $0x70] sm:$0xff]
        %v3300 = vld [vmem:[%s3284 + $0x78] sm:$0xff]
        %3301 = vmatpush.msra.mxu0 %v3300
        %3302 = vmatpush.msra.mxu0 %v3299
        %3303 = vmatpush.msra.mxu0 %v3298
        %3304 = vmatpush.msra.mxu0 %v3297
        %3305 = vmatpush.msra.mxu0 %v3296
        %3306 = vmatpush.msra.mxu0 %v3295
        %3307 = vmatpush.msra.mxu0 %v3294
        %3308 = vmatpush.msra.mxu0 %v3293
        %3309 = vmatpush.msra.mxu0 %v3292
        %3310 = vmatpush.msra.mxu0 %v3291
        %3311 = vmatpush.msra.mxu0 %v3290
        %3312 = vmatpush.msra.mxu0 %v3289
        %3313 = vmatpush.msra.mxu0 %v3288
        %3314 = vmatpush.msra.mxu0 %v3287
        %3315 = vmatpush.msra.mxu0 %v3286
        %3316 = vmatpush.msra.mxu0 %v3285
        %3317 = vmatmul.f32.gmra.mxu0 %v2477
        %v3318 = vpop.f32.mrf.mxu0
        %v3319 = vadd.f32 0.0, %v3318
        %3320 = vmatmul.f32.gmra.mxu0 %v2478
        %v3321 = vpop.f32.mrf.mxu0
        %v3322 = vadd.f32 0.0, %v3321
        %3323 = vmatmul.f32.gmra.mxu0 %v2479
        %v3324 = vpop.f32.mrf.mxu0
        %v3325 = vadd.f32 0.0, %v3324
        %3326 = vmatmul.f32.gmra.mxu0 %v2480
        %v3327 = vpop.f32.mrf.mxu0
        %v3328 = vadd.f32 0.0, %v3327
        %3329 = vmatmul.f32.gmra.mxu0 %v2481
        %v3330 = vpop.f32.mrf.mxu0
        %v3331 = vadd.f32 0.0, %v3330
        %3332 = vmatmul.f32.gmra.mxu0 %v2482
        %v3333 = vpop.f32.mrf.mxu0
        %v3334 = vadd.f32 0.0, %v3333
        %3335 = vmatmul.f32.gmra.mxu0 %v2483
        %v3336 = vpop.f32.mrf.mxu0
        %v3337 = vadd.f32 0.0, %v3336
        %3338 = vmatmul.f32.gmra.mxu0 %v2484
        %v3339 = vpop.f32.mrf.mxu0
        %v3340 = vadd.f32 0.0, %v3339
        %3341 = vdwg.mxu0
        %v3342 = vadd.f32 %v3276, %v3319
        %v3343 = vadd.f32 %v3277, %v3322
        %v3344 = vadd.f32 %v3278, %v3325
        %v3345 = vadd.f32 %v3279, %v3328
        %v3346 = vadd.f32 %v3280, %v3331
        %v3347 = vadd.f32 %v3281, %v3334
        %v3348 = vadd.f32 %v3282, %v3337
        %v3349 = vadd.f32 %v3283, %v3340
        %s3350 = scalar_lea.vmem %s4, 1664
        %v3351 = vld [vmem:[%s3350] sm:$0xff]
        %v3352 = vld [vmem:[%s3350 + $0x8] sm:$0xff]
        %v3353 = vld [vmem:[%s3350 + $0x10] sm:$0xff]
        %v3354 = vld [vmem:[%s3350 + $0x18] sm:$0xff]
        %v3355 = vld [vmem:[%s3350 + $0x20] sm:$0xff]
        %v3356 = vld [vmem:[%s3350 + $0x28] sm:$0xff]
        %v3357 = vld [vmem:[%s3350 + $0x30] sm:$0xff]
        %v3358 = vld [vmem:[%s3350 + $0x38] sm:$0xff]
        %v3359 = vld [vmem:[%s3350 + $0x40] sm:$0xff]
        %v3360 = vld [vmem:[%s3350 + $0x48] sm:$0xff]
        %v3361 = vld [vmem:[%s3350 + $0x50] sm:$0xff]
        %v3362 = vld [vmem:[%s3350 + $0x58] sm:$0xff]
        %v3363 = vld [vmem:[%s3350 + $0x60] sm:$0xff]
        %v3364 = vld [vmem:[%s3350 + $0x68] sm:$0xff]
        %v3365 = vld [vmem:[%s3350 + $0x70] sm:$0xff]
        %v3366 = vld [vmem:[%s3350 + $0x78] sm:$0xff]
        %3367 = vmatpush.msra.mxu0 %v3366
        %3368 = vmatpush.msra.mxu0 %v3365
        %3369 = vmatpush.msra.mxu0 %v3364
        %3370 = vmatpush.msra.mxu0 %v3363
        %3371 = vmatpush.msra.mxu0 %v3362
        %3372 = vmatpush.msra.mxu0 %v3361
        %3373 = vmatpush.msra.mxu0 %v3360
        %3374 = vmatpush.msra.mxu0 %v3359
        %3375 = vmatpush.msra.mxu0 %v3358
        %3376 = vmatpush.msra.mxu0 %v3357
        %3377 = vmatpush.msra.mxu0 %v3356
        %3378 = vmatpush.msra.mxu0 %v3355
        %3379 = vmatpush.msra.mxu0 %v3354
        %3380 = vmatpush.msra.mxu0 %v3353
        %3381 = vmatpush.msra.mxu0 %v3352
        %3382 = vmatpush.msra.mxu0 %v3351
        %3383 = vmatmul.f32.gmra.mxu0 %v2485
        %v3384 = vpop.f32.mrf.mxu0
        %v3385 = vadd.f32 0.0, %v3384
        %3386 = vmatmul.f32.gmra.mxu0 %v2486
        %v3387 = vpop.f32.mrf.mxu0
        %v3388 = vadd.f32 0.0, %v3387
        %3389 = vmatmul.f32.gmra.mxu0 %v2487
        %v3390 = vpop.f32.mrf.mxu0
        %v3391 = vadd.f32 0.0, %v3390
        %3392 = vmatmul.f32.gmra.mxu0 %v2488
        %v3393 = vpop.f32.mrf.mxu0
        %v3394 = vadd.f32 0.0, %v3393
        %3395 = vmatmul.f32.gmra.mxu0 %v2489
        %v3396 = vpop.f32.mrf.mxu0
        %v3397 = vadd.f32 0.0, %v3396
        %3398 = vmatmul.f32.gmra.mxu0 %v2490
        %v3399 = vpop.f32.mrf.mxu0
        %v3400 = vadd.f32 0.0, %v3399
        %3401 = vmatmul.f32.gmra.mxu0 %v2491
        %v3402 = vpop.f32.mrf.mxu0
        %v3403 = vadd.f32 0.0, %v3402
        %3404 = vmatmul.f32.gmra.mxu0 %v2492
        %v3405 = vpop.f32.mrf.mxu0
        %v3406 = vadd.f32 0.0, %v3405
        %3407 = vdwg.mxu0
        %v3408 = vadd.f32 %v3342, %v3385
        %v3409 = vadd.f32 %v3343, %v3388
        %v3410 = vadd.f32 %v3344, %v3391
        %v3411 = vadd.f32 %v3345, %v3394
        %v3412 = vadd.f32 %v3346, %v3397
        %v3413 = vadd.f32 %v3347, %v3400
        %v3414 = vadd.f32 %v3348, %v3403
        %v3415 = vadd.f32 %v3349, %v3406
        %s3416 = scalar_lea.vmem %s4, 1792
        %v3417 = vld [vmem:[%s3416] sm:$0xff]
        %v3418 = vld [vmem:[%s3416 + $0x8] sm:$0xff]
        %v3419 = vld [vmem:[%s3416 + $0x10] sm:$0xff]
        %v3420 = vld [vmem:[%s3416 + $0x18] sm:$0xff]
        %v3421 = vld [vmem:[%s3416 + $0x20] sm:$0xff]
        %v3422 = vld [vmem:[%s3416 + $0x28] sm:$0xff]
        %v3423 = vld [vmem:[%s3416 + $0x30] sm:$0xff]
        %v3424 = vld [vmem:[%s3416 + $0x38] sm:$0xff]
        %v3425 = vld [vmem:[%s3416 + $0x40] sm:$0xff]
        %v3426 = vld [vmem:[%s3416 + $0x48] sm:$0xff]
        %v3427 = vld [vmem:[%s3416 + $0x50] sm:$0xff]
        %v3428 = vld [vmem:[%s3416 + $0x58] sm:$0xff]
        %v3429 = vld [vmem:[%s3416 + $0x60] sm:$0xff]
        %v3430 = vld [vmem:[%s3416 + $0x68] sm:$0xff]
        %v3431 = vld [vmem:[%s3416 + $0x70] sm:$0xff]
        %v3432 = vld [vmem:[%s3416 + $0x78] sm:$0xff]
        %3433 = vmatpush.msra.mxu0 %v3432
        %3434 = vmatpush.msra.mxu0 %v3431
        %3435 = vmatpush.msra.mxu0 %v3430
        %3436 = vmatpush.msra.mxu0 %v3429
        %3437 = vmatpush.msra.mxu0 %v3428
        %3438 = vmatpush.msra.mxu0 %v3427
        %3439 = vmatpush.msra.mxu0 %v3426
        %3440 = vmatpush.msra.mxu0 %v3425
        %3441 = vmatpush.msra.mxu0 %v3424
        %3442 = vmatpush.msra.mxu0 %v3423
        %3443 = vmatpush.msra.mxu0 %v3422
        %3444 = vmatpush.msra.mxu0 %v3421
        %3445 = vmatpush.msra.mxu0 %v3420
        %3446 = vmatpush.msra.mxu0 %v3419
        %3447 = vmatpush.msra.mxu0 %v3418
        %3448 = vmatpush.msra.mxu0 %v3417
        %3449 = vmatmul.f32.gmra.mxu0 %v2493
        %v3450 = vpop.f32.mrf.mxu0
        %v3451 = vadd.f32 0.0, %v3450
        %3452 = vmatmul.f32.gmra.mxu0 %v2494
        %v3453 = vpop.f32.mrf.mxu0
        %v3454 = vadd.f32 0.0, %v3453
        %3455 = vmatmul.f32.gmra.mxu0 %v2495
        %v3456 = vpop.f32.mrf.mxu0
        %v3457 = vadd.f32 0.0, %v3456
        %3458 = vmatmul.f32.gmra.mxu0 %v2496
        %v3459 = vpop.f32.mrf.mxu0
        %v3460 = vadd.f32 0.0, %v3459
        %3461 = vmatmul.f32.gmra.mxu0 %v2497
        %v3462 = vpop.f32.mrf.mxu0
        %v3463 = vadd.f32 0.0, %v3462
        %3464 = vmatmul.f32.gmra.mxu0 %v2498
        %v3465 = vpop.f32.mrf.mxu0
        %v3466 = vadd.f32 0.0, %v3465
        %3467 = vmatmul.f32.gmra.mxu0 %v2499
        %v3468 = vpop.f32.mrf.mxu0
        %v3469 = vadd.f32 0.0, %v3468
        %3470 = vmatmul.f32.gmra.mxu0 %v2500
        %v3471 = vpop.f32.mrf.mxu0
        %v3472 = vadd.f32 0.0, %v3471
        %3473 = vdwg.mxu0
        %v3474 = vadd.f32 %v3408, %v3451
        %v3475 = vadd.f32 %v3409, %v3454
        %v3476 = vadd.f32 %v3410, %v3457
        %v3477 = vadd.f32 %v3411, %v3460
        %v3478 = vadd.f32 %v3412, %v3463
        %v3479 = vadd.f32 %v3413, %v3466
        %v3480 = vadd.f32 %v3414, %v3469
        %v3481 = vadd.f32 %v3415, %v3472
        %s3482 = scalar_lea.vmem %s4, 1920
        %v3483 = vld [vmem:[%s3482] sm:$0xff]
        %v3484 = vld [vmem:[%s3482 + $0x8] sm:$0xff]
        %v3485 = vld [vmem:[%s3482 + $0x10] sm:$0xff]
        %v3486 = vld [vmem:[%s3482 + $0x18] sm:$0xff]
        %v3487 = vld [vmem:[%s3482 + $0x20] sm:$0xff]
        %v3488 = vld [vmem:[%s3482 + $0x28] sm:$0xff]
        %v3489 = vld [vmem:[%s3482 + $0x30] sm:$0xff]
        %v3490 = vld [vmem:[%s3482 + $0x38] sm:$0xff]
        %v3491 = vld [vmem:[%s3482 + $0x40] sm:$0xff]
        %v3492 = vld [vmem:[%s3482 + $0x48] sm:$0xff]
        %v3493 = vld [vmem:[%s3482 + $0x50] sm:$0xff]
        %v3494 = vld [vmem:[%s3482 + $0x58] sm:$0xff]
        %v3495 = vld [vmem:[%s3482 + $0x60] sm:$0xff]
        %v3496 = vld [vmem:[%s3482 + $0x68] sm:$0xff]
        %v3497 = vld [vmem:[%s3482 + $0x70] sm:$0xff]
        %v3498 = vld [vmem:[%s3482 + $0x78] sm:$0xff]
        %3499 = vmatpush.msra.mxu0 %v3498
        %3500 = vmatpush.msra.mxu0 %v3497
        %3501 = vmatpush.msra.mxu0 %v3496
        %3502 = vmatpush.msra.mxu0 %v3495
        %3503 = vmatpush.msra.mxu0 %v3494
        %3504 = vmatpush.msra.mxu0 %v3493
        %3505 = vmatpush.msra.mxu0 %v3492
        %3506 = vmatpush.msra.mxu0 %v3491
        %3507 = vmatpush.msra.mxu0 %v3490
        %3508 = vmatpush.msra.mxu0 %v3489
        %3509 = vmatpush.msra.mxu0 %v3488
        %3510 = vmatpush.msra.mxu0 %v3487
        %3511 = vmatpush.msra.mxu0 %v3486
        %3512 = vmatpush.msra.mxu0 %v3485
        %3513 = vmatpush.msra.mxu0 %v3484
        %3514 = vmatpush.msra.mxu0 %v3483
        %3515 = vmatmul.f32.gmra.mxu0 %v2501
        %v3516 = vpop.f32.mrf.mxu0
        %v3517 = vadd.f32 0.0, %v3516
        %3518 = vmatmul.f32.gmra.mxu0 %v2502
        %v3519 = vpop.f32.mrf.mxu0
        %v3520 = vadd.f32 0.0, %v3519
        %3521 = vmatmul.f32.gmra.mxu0 %v2503
        %v3522 = vpop.f32.mrf.mxu0
        %v3523 = vadd.f32 0.0, %v3522
        %3524 = vmatmul.f32.gmra.mxu0 %v2504
        %v3525 = vpop.f32.mrf.mxu0
        %v3526 = vadd.f32 0.0, %v3525
        %3527 = vmatmul.f32.gmra.mxu0 %v2505
        %v3528 = vpop.f32.mrf.mxu0
        %v3529 = vadd.f32 0.0, %v3528
        %3530 = vmatmul.f32.gmra.mxu0 %v2506
        %v3531 = vpop.f32.mrf.mxu0
        %v3532 = vadd.f32 0.0, %v3531
        %3533 = vmatmul.f32.gmra.mxu0 %v2507
        %v3534 = vpop.f32.mrf.mxu0
        %v3535 = vadd.f32 0.0, %v3534
        %3536 = vmatmul.f32.gmra.mxu0 %v2508
        %v3537 = vpop.f32.mrf.mxu0
        %v3538 = vadd.f32 0.0, %v3537
        %3539 = vdwg.mxu0
        %v3540 = vadd.f32 %v3474, %v3517
        %v3541 = vadd.f32 %v3475, %v3520
        %v3542 = vadd.f32 %v3476, %v3523
        %v3543 = vadd.f32 %v3477, %v3526
        %v3544 = vadd.f32 %v3478, %v3529
        %v3545 = vadd.f32 %v3479, %v3532
        %v3546 = vadd.f32 %v3480, %v3535
        %v3547 = vadd.f32 %v3481, %v3538
        %v3548 = vld [vmem:[%s5] sm:$0x1]
        %v3550 = vperm.slane %v3548, 0
        %v3552 = vadd.f32 %v3540, %v3550
        %v3553 = vadd.f32 %v3541, %v3550
        %v3554 = vadd.f32 %v3542, %v3550
        %v3555 = vadd.f32 %v3543, %v3550
        %v3556 = vadd.f32 %v3544, %v3550
        %v3557 = vadd.f32 %v3545, %v3550
        %v3558 = vadd.f32 %v3546, %v3550
        %v3559 = vadd.f32 %v3547, %v3550
        %vm3560 = vcmp.gt.f32.partialorder %v3552, 0.0
        %vm3561 = vcmp.gt.f32.partialorder %v3553, 0.0
        %vm3562 = vcmp.gt.f32.partialorder %v3554, 0.0
        %vm3563 = vcmp.gt.f32.partialorder %v3555, 0.0
        %vm3564 = vcmp.gt.f32.partialorder %v3556, 0.0
        %vm3565 = vcmp.gt.f32.partialorder %v3557, 0.0
        %vm3566 = vcmp.gt.f32.partialorder %v3558, 0.0
        %vm3567 = vcmp.gt.f32.partialorder %v3559, 0.0
        %v3568 = vmul.f32 %v3552, 0.2
        %v3569 = vmul.f32 %v3553, 0.2
        %v3570 = vmul.f32 %v3554, 0.2
        %v3571 = vmul.f32 %v3555, 0.2
        %v3572 = vmul.f32 %v3556, 0.2
        %v3573 = vmul.f32 %v3557, 0.2
        %v3574 = vmul.f32 %v3558, 0.2
        %v3575 = vmul.f32 %v3559, 0.2
        %v3576 = vsel %vm3560, %v3552, %v3568
        %v3577 = vsel %vm3561, %v3553, %v3569
        %v3578 = vsel %vm3562, %v3554, %v3570
        %v3579 = vsel %vm3563, %v3555, %v3571
        %v3580 = vsel %vm3564, %v3556, %v3572
        %v3581 = vsel %vm3565, %v3557, %v3573
        %v3582 = vsel %vm3566, %v3558, %v3574
        %v3583 = vsel %vm3567, %v3559, %v3575
        %v3584 = vld [vmem:[%s6] sm:$0xff]
        %v3585 = vld [vmem:[%s6 + $0x8] sm:$0xff]
        %v3586 = vld [vmem:[%s6 + $0x10] sm:$0xff]
        %v3587 = vld [vmem:[%s6 + $0x18] sm:$0xff]
        %v3588 = vld [vmem:[%s6 + $0x20] sm:$0xff]
        %v3589 = vld [vmem:[%s6 + $0x28] sm:$0xff]
        %v3590 = vld [vmem:[%s6 + $0x30] sm:$0xff]
        %v3591 = vld [vmem:[%s6 + $0x38] sm:$0xff]
        %v3592 = vmul.f32 %v3576, %v3584
        %v3593 = vmul.f32 %v3577, %v3585
        %v3594 = vmul.f32 %v3578, %v3586
        %v3595 = vmul.f32 %v3579, %v3587
        %v3596 = vmul.f32 %v3580, %v3588
        %v3597 = vmul.f32 %v3581, %v3589
        %v3598 = vmul.f32 %v3582, %v3590
        %v3599 = vmul.f32 %v3583, %v3591
        %v3600 = vadd.f32 %v3592, %v3593
        %v3601 = vadd.f32 %v3600, %v3594
        %v3602 = vadd.f32 %v3601, %v3595
        %v3603 = vadd.f32 %v3602, %v3596
        %v3604 = vadd.f32 %v3603, %v3597
        %v3605 = vadd.f32 %v3604, %v3598
        %v3606 = vadd.f32 %v3605, %v3599
        %3607 = vadd.xlane.f32.xlu0 %v3606
        %v3608 = vpop.xlane.xlu0 %3607
        %v3609 = vrot.slane %v3608, 4
        %v3610 = vadd.f32 %v3608, %v3609
        %v3611 = vrot.slane %v3610, 2
        %v3612 = vadd.f32 %v3610, %v3611
        %v3613 = vrot.slane %v3612, 1
        %v3614 = vadd.f32 %v3612, %v3613
        %s3615 = vtos %v3614
        %v3616 = vstv %s3615
        %v3617 = vld [vmem:[#allocation2] sm:$0x1]
        %v3618 = vadd.f32 %v3616, %v3617
        %v3619 = vmul.f32 %v3618, 0.5
        %v3620 = vtanh.pop %v3619
        %v3621 = vadd.f32 %v3620, 1.0
        %v3622 = vmul.f32 %v3621, 0.5
        %3624 = vset.pattern.permute.xlu0 0
        %3625 = vperm.xlu0 %3624, %v3622
        %v3626 = vpop.permute.xlu0 %3625
        %v3628 = vperm.slane %v3626, 0
        %3629 = vst [vmem:[%s299] sm:$0x1] %v3628
        %s3630 = sand.u32 %s205, 1
        %s3631 = scalar_lea.sflag [#allocation4], %s3630
        %s3632 = sand.u32 %s205, 1
        %s3633 = scalar_lea.vmem [#allocation3], %s3632
        // Predicated region
        $region53: #{tpu_custom_call.1} parent=51 // pred_check
          %p3634 = pneg %p215
        $region54: #{tpu_custom_call.1} parent=51 // pred_check_branch
          %3636 = sbr.rel (%p3634) target = $region56
        $region55: #{tpu_custom_call.1} parent=51 // pred_region
          %3638 = vsyncadd %s3631, 0
          %s3639 = scalar_lea.hbm %s8, %s24
          %s3641 = sshll.u32 %s3633, 4
          %s3642 = int_to_ptr.vmem [resolvable:$true] %s3641
          %s3643 = sshll.u32 %s3639, 4
          %s3644 = int_to_ptr.hbm [resolvable:$true] %s3643
          %3646 = dma.vmem_to_hbm [thread:$0]  %s3642, 16, %s3644, %s3631
        $region56: #{tpu_custom_call.1} parent=51 // pred_fallthru
          _
      $region52: #{tpu_custom_call.1} parent=5 // pred_fallthru
        _
      %p3647 = scmp.le.s32.totalorder 2, %s19
      // Predicated region
      $region57: #{tpu_custom_call.1} parent=5 // pred_check
        %p3648 = pneg %p3647
      $region58: #{tpu_custom_call.1} parent=5 // pred_check_branch
        %3650 = sbr.rel (%p3648) target = $region60
      $region59: #{tpu_custom_call.1} parent=5 // pred_region
        %s3651 = ssub.s32 %s19, 2
        // Predicated region
        $region61: #{tpu_custom_call.1} parent=59 // pred_check
          %p3652 = pneg %p221
        $region62: #{tpu_custom_call.1} parent=59 // pred_check_branch
          %3654 = sbr.rel (%p3652) target = $region64
        $region63: #{tpu_custom_call.1} parent=59 // pred_region
          %s3655 = sand.u32 %s206, 1
          %s3656 = scalar_lea.sflag [#allocation4], %s3655
          %s3657 = sand.u32 %s206, 1
          %s3658 = scalar_lea.vmem [#allocation3], %s3657
          %3660 = dma.done %s3656, 16
        $region64: #{tpu_custom_call.1} parent=59 // pred_fallthru
          _
      $region60: #{tpu_custom_call.1} parent=5 // pred_fallthru
        _
    $region6: #{tpu_custom_call.1} parent=1 // loop_footer
      %s23 = sadd.s32 1, %s19
    $region7: #{tpu_custom_call.1} parent=1 // loop_footer_branch
      %18 = sbr.rel target = $region3
    $region8: #{tpu_custom_call.1} parent=1 // loop_exit
      _
    %3661 = vsyncpa [#allocation4], 1
    %s3662 = scalar_lea.sflag [#allocation4], 1
    %3663 = vsyncpa %s3662, 1

</llo_original>
